<compile_context>
chip_gen: v7x
topology: tpu7x:2x2x1
jax: 0.10.0
libtpu: 0.0.40
codegen_flags: <defaults>
</compile_context>

<pallas_src>
import functools
import math

import jax
import jax.numpy as jnp
from jax import lax
from jax.experimental import pallas as pl
from jax.experimental.pallas import tpu as pltpu

_CompilerParams = getattr(pltpu, "CompilerParams",
                          getattr(pltpu, "TPUCompilerParams", None))


def _mosaic_params(**kw):
    if _CompilerParams is None:
        return None
    return _CompilerParams(**kw)


# ----------------------------------------------------------------------------
# In-kernel helpers
# ----------------------------------------------------------------------------

def _ln_rows(x, g, b, eps):
    """LayerNorm over the last axis. x: (M, D) f32, g/b: (1, D)."""
    mu = jnp.mean(x, axis=-1, keepdims=True)
    var = jnp.mean((x - mu) ** 2, axis=-1, keepdims=True)
    return (x - mu) * lax.rsqrt(var + eps) * g + b


def _mm(a, w):
    """bf16 MXU matmul with f32 accumulation."""
    return jnp.dot(a.astype(jnp.bfloat16), w.astype(jnp.bfloat16),
                   preferred_element_type=jnp.float32)


# ----------------------------------------------------------------------------
# Fused transformer encoder kernel (whole layer stack in one pallas_call)
# ----------------------------------------------------------------------------

def _encoder_kernel(x_ref, bias_ref, prew_ref, preb_ref,
                    ln1w_ref, ln1b_ref, qkvw_ref, qkvb_ref,
                    outw_ref, outb_ref, ln2w_ref, ln2b_ref,
                    fcw_ref, fcb_ref, pjw_ref, pjb_ref,
                    o_ref, x_sc,
                    *, n_heads, apply_pre_ln, eps=1e-5):
    layer = pl.program_id(0)
    n_layers = pl.num_programs(0)

    @pl.when(layer == 0)
    def _init():
        x0 = x_ref[...].astype(jnp.float32)
        if apply_pre_ln:  # visual ln_pre folded into the first grid step
            x0 = _ln_rows(x0, prew_ref[...], preb_ref[...], eps)
        x_sc[...] = x0

    x = x_sc[...]                               # (B*S, D) running activation (f32)
    BS, D = x.shape
    Dh = D // n_heads
    scale = 1.0 / math.sqrt(Dh)
    bias = bias_ref[...]                        # (B*S, B*S): block-diag (+causal) mask

    # ---- attention: x += out_proj(MHA(LN1(x))) ----
    h = _ln_rows(x, ln1w_ref[...], ln1b_ref[...], eps)
    qkv = _mm(h, qkvw_ref[...]) + qkvb_ref[...]            # (B*S, 3D)
    head_outs = []
    for hd in range(n_heads):                               # static unroll, lane slices
        q = qkv[:, hd * Dh:(hd + 1) * Dh]
        k = qkv[:, D + hd * Dh:D + (hd + 1) * Dh]
        v = qkv[:, 2 * D + hd * Dh:2 * D + (hd + 1) * Dh]
        s = lax.dot_general(q.astype(jnp.bfloat16), k.astype(jnp.bfloat16),
                            (((1,), (1,)), ((), ())),
                            preferred_element_type=jnp.float32)
        s = s * scale + bias
        s = s - jnp.max(s, axis=-1, keepdims=True)
        p = jnp.exp(s)
        p = p * pl.reciprocal(jnp.sum(p, axis=-1, keepdims=True), approx=True)
        head_outs.append(jnp.dot(p.astype(jnp.bfloat16), v.astype(jnp.bfloat16),
                                 preferred_element_type=jnp.float32))
    attn = jnp.concatenate(head_outs, axis=-1)              # lane-dense (B*S, D)
    x = x + _mm(attn, outw_ref[...]) + outb_ref[...]

    # ---- MLP: x += proj(QuickGELU(fc(LN2(x)))) ----
    h = _ln_rows(x, ln2w_ref[...], ln2b_ref[...], eps)
    h = _mm(h, fcw_ref[...]) + fcb_ref[...]
    h = h * jax.nn.sigmoid(1.702 * h)                       # CLIP QuickGELU
    x = x + _mm(h, pjw_ref[...]) + pjb_ref[...]

    x_sc[...] = x

    @pl.when(layer == n_layers - 1)
    def _finalize():
        o_ref[...] = x.astype(o_ref.dtype)


def pallas_transformer(x2, bias, stack, *, n_heads, pre_ln=None):
    """x2: (B*S, D) activations; stack: per-layer weights stacked on a leading axis."""
    BS, D = x2.shape
    n_layers = stack["qkv_w"].shape[0]
    apply_pre_ln = pre_ln is not None
    if pre_ln is None:
        prew = jnp.ones((1, D), jnp.float32)
        preb = jnp.zeros((1, D), jnp.float32)
    else:
        prew = pre_ln[0].reshape(1, D)
        preb = pre_ln[1].reshape(1, D)

    def wspec(a, b):                       # per-layer weight, indexed by layer id
        return pl.BlockSpec((None, a, b), lambda l: (l, 0, 0))

    def full(r, c):                        # resident for the whole layer loop
        return pl.BlockSpec((r, c), lambda l: (0, 0))

    kernel = functools.partial(_encoder_kernel, n_heads=n_heads,
                               apply_pre_ln=apply_pre_ln)
    return pl.pallas_call(
        kernel,
        out_shape=jax.ShapeDtypeStruct((BS, D), jnp.float32),
        grid=(n_layers,),
        in_specs=[full(BS, D),                        # x (loaded once)
                  full(BS, BS),                       # attention bias
                  full(1, D), full(1, D),             # ln_pre (visual only)
                  wspec(1, D), wspec(1, D),           # ln1
                  wspec(D, 3 * D), wspec(1, 3 * D),   # qkv
                  wspec(D, D), wspec(1, D),           # attn out proj
                  wspec(1, D), wspec(1, D),           # ln2
                  wspec(D, 4 * D), wspec(1, 4 * D),   # mlp fc
                  wspec(4 * D, D), wspec(1, D)],      # mlp proj
        out_specs=full(BS, D),
        scratch_shapes=[pltpu.VMEM((BS, D), jnp.float32)],
        compiler_params=_mosaic_params(dimension_semantics=("arbitrary",)),
    )(x2, bias, prew, preb,
      stack["ln1_w"], stack["ln1_b"], stack["qkv_w"], stack["qkv_b"],
      stack["out_w"], stack["out_b"], stack["ln2_w"], stack["ln2_b"],
      stack["fc_w"], stack["fc_b"], stack["proj_w"], stack["proj_b"])


# ----------------------------------------------------------------------------
# Tiled matmul (patch embedding)
# ----------------------------------------------------------------------------

def _matmul_kernel(a_ref, b_ref, o_ref, acc_ref):
    @pl.when(pl.program_id(2) == 0)
    def _zero():
        acc_ref[...] = jnp.zeros_like(acc_ref)
    acc_ref[...] += jnp.dot(a_ref[...].astype(jnp.bfloat16),
                            b_ref[...].astype(jnp.bfloat16),
                            preferred_element_type=jnp.float32)

    @pl.when(pl.program_id(2) == pl.num_programs(2) - 1)
    def _store():
        o_ref[...] = acc_ref[...].astype(o_ref.dtype)


def pallas_matmul(a, b, tm=128, tn=128, tk=512):
    M, K = a.shape
    K2, N = b.shape
    assert K == K2
    tm = tm if M % tm == 0 else M
    tn = tn if N % tn == 0 else N
    tk = tk if K % tk == 0 else K
    return pl.pallas_call(
        _matmul_kernel,
        out_shape=jax.ShapeDtypeStruct((M, N), jnp.float32),
        grid=(M // tm, N // tn, K // tk),
        in_specs=[pl.BlockSpec((tm, tk), lambda i, j, k: (i, k)),
                  pl.BlockSpec((tk, tn), lambda i, j, k: (k, j))],
        out_specs=pl.BlockSpec((tm, tn), lambda i, j, k: (i, j)),
        scratch_shapes=[pltpu.VMEM((tm, tn), jnp.float32)],
        compiler_params=_mosaic_params(
            dimension_semantics=("parallel", "parallel", "arbitrary")),
    )(a, b)


# ----------------------------------------------------------------------------
# Fused CLIP head: ln_post+visual proj, ln_final@EOT+text proj, L2 norm, logits
# ----------------------------------------------------------------------------

def _clip_head_kernel(vcls_ref, teot_ref, lnpw_ref, lnpb_ref, lnfw_ref, lnfb_ref,
                      vproj_ref, tproj_ref, ls_ref,
                      imgn_ref, txtn_ref, log_ref, *, eps=1e-5):
    iv = _ln_rows(vcls_ref[...].astype(jnp.float32), lnpw_ref[...], lnpb_ref[...], eps)
    iv = _mm(iv, vproj_ref[...])                         # (B, embed)
    tv = _ln_rows(teot_ref[...].astype(jnp.float32), lnfw_ref[...], lnfb_ref[...], eps)
    tv = _mm(tv, tproj_ref[...])                         # (C, embed)
    # L2 normalize (matches PyTorch `x / x.norm(dim=-1)`, no epsilon)
    img_n = iv * lax.rsqrt(jnp.sum(iv * iv, axis=-1, keepdims=True))
    txt_n = tv * lax.rsqrt(jnp.sum(tv * tv, axis=-1, keepdims=True))
    scale = jnp.exp(ls_ref[...])                         # (1, 1)
    logits = lax.dot_general(img_n, txt_n, (((1,), (1,)), ((), ())),
                             preferred_element_type=jnp.float32)
    log_ref[...] = (scale * logits).astype(log_ref.dtype)
    imgn_ref[...] = img_n.astype(imgn_ref.dtype)
    txtn_ref[...] = txt_n.astype(txtn_ref.dtype)


def pallas_clip_head(vis_cls, txt_eot, hp, logit_scale):
    B, hidden = vis_cls.shape
    C, ctx_dim = txt_eot.shape
    embed = hp["visual_proj"].shape[1]

    def f(r, c):
        return pl.BlockSpec((r, c), lambda i: (0, 0))

    return pl.pallas_call(
        _clip_head_kernel,
        out_shape=(jax.ShapeDtypeStruct((B, embed), jnp.float32),
                   jax.ShapeDtypeStruct((C, embed), jnp.float32),
                   jax.ShapeDtypeStruct((B, C), jnp.float32)),
        grid=(1,),
        in_specs=[f(B, hidden), f(C, ctx_dim),
                  f(1, hidden), f(1, hidden),
                  f(1, ctx_dim), f(1, ctx_dim),
                  f(hidden, embed), f(ctx_dim, embed),
                  f(1, 1)],
        out_specs=(f(B, embed), f(C, embed), f(B, C)),
    )(vis_cls, txt_eot,
      hp["ln_post_w"], hp["ln_post_b"], hp["ln_final_w"], hp["ln_final_b"],
      hp["visual_proj"], hp["text_proj"], logit_scale.reshape(1, 1))


# ----------------------------------------------------------------------------
# Model glue (cheap XLA ops only; all compute lives in the kernels above)
# ----------------------------------------------------------------------------

def make_attn_bias(n_batch, seq, causal):
    """Additive bias: block-diagonal over the batch (+ causal inside each block)."""
    r = jnp.arange(n_batch * seq)
    rb, cb = r[:, None] // seq, r[None, :] // seq
    allowed = rb == cb
    if causal:  # CLIP text transformer uses a causal attention mask
        allowed = allowed & ((r[:, None] % seq) >= (r[None, :] % seq))
    return jnp.where(allowed, 0.0, -1e30).astype(jnp.float32)


def prompt_learner_forward(pp):
    """prompts = cat([prefix, ctx, suffix], dim=1); returns (prompts, vctx)."""
    ctx = pp["ctx"]                                           # (n_ctx, ctx_dim)
    n_cls = pp["token_prefix"].shape[0]
    ctx = jnp.broadcast_to(ctx[None], (n_cls,) + ctx.shape)
    prompts = jnp.concatenate([pp["token_prefix"], ctx, pp["token_suffix"]], axis=1)
    return prompts, pp["vctx"]


def text_encoder_trunk(prompts, tokenized_prompts, tp):
    """Text transformer on prompt embeddings; returns pre-ln_final features at EOT."""
    n_cls, seq, D = prompts.shape
    x = prompts + tp["pos_emb"][None]
    bias = make_attn_bias(n_cls, seq, causal=True)
    x2 = pallas_transformer(x.reshape(n_cls * seq, D), bias, tp["stack"],
                            n_heads=tp["n_heads"], pre_ln=None)
    x = x2.reshape(n_cls, seq, D)
    eot = jnp.argmax(tokenized_prompts, axis=-1)              # EOT = max token id
    return x[jnp.arange(n_cls), eot]                          # (n_cls, D)


def image_encoder_trunk(image, vctx, vp):
    """ViT with visual prompt tokens inserted after CLS; returns pre-ln_post CLS row."""
    B, C, H, W = image.shape
    patch, hidden = vp["patch"], vp["hidden"]
    gh, gw = H // patch, W // patch
    # im2col for the stride==kernel patch conv (no bias)
    patches = image.reshape(B, C, gh, patch, gw, patch).transpose(0, 2, 4, 1, 3, 5)
    patches = patches.reshape(B * gh * gw, C * patch * patch)
    x = pallas_matmul(patches, vp["conv1_w"])                 # (B*P, hidden)
    x = x.reshape(B, gh * gw, hidden)
    cls = jnp.broadcast_to(vp["class_emb"][None, None, :], (B, 1, hidden))
    x = jnp.concatenate([cls, x], axis=1) + vp["pos_emb"][None]
    n_vctx = vctx.shape[0]
    vprompt = jnp.broadcast_to(vctx[None], (B, n_vctx, hidden))
    x = jnp.concatenate([x[:, :1], vprompt, x[:, 1:]], axis=1)  # VPT insertion
    S = x.shape[1]
    bias = make_attn_bias(B, S, causal=False)
    x2 = pallas_transformer(x.reshape(B * S, hidden), bias, vp["stack"],
                            n_heads=vp["n_heads"],
                            pre_ln=(vp["ln_pre_w"], vp["ln_pre_b"]))
    return x2.reshape(B, S, hidden)[:, 0, :]                  # CLS row


def custom_clip_teacher_forward(image, params):
    """CustomCLIP_teacher.forward(image) -> (image_features, text_features, logits)."""
    prompts, vctx = prompt_learner_forward(params["prompt_learner"])
    txt_eot = text_encoder_trunk(prompts, params["tokenized_prompts"], params["text"])
    vis_cls = image_encoder_trunk(image, vctx, params["visual"])
    image_features, text_features, logits = pallas_clip_head(
        vis_cls, txt_eot, params["head"], params["logit_scale"])
    return image_features, text_features, logits


# ----------------------------------------------------------------------------
# Deterministic parameter construction (small synthetic CLIP, stacked weights)
# ----------------------------------------------------------------------------

def init_params(key):
    n_cls, n_ctx = 4, 3
    ctx_dim, embed_dim = 32, 32
    seq_len = 8                            # 1 prefix + n_ctx + 4 suffix
    hidden, patch = 64, 8                  # image 16x16 -> 4 patches; S_vis = 1+3+4 = 8
    n_layers, n_heads = 2, 4

    keys = iter(jax.random.split(key, 512))

    def nrm(shape, std=0.02):
        return (std * jax.random.normal(next(keys), shape)).astype(jnp.float32)

    def stack(L, D):
        return dict(
            ln1_w=jnp.ones((L, 1, D), jnp.float32), ln1_b=jnp.zeros((L, 1, D), jnp.float32),
            qkv_w=nrm((L, D, 3 * D)), qkv_b=jnp.zeros((L, 1, 3 * D), jnp.float32),
            out_w=nrm((L, D, D)), out_b=jnp.zeros((L, 1, D), jnp.float32),
            ln2_w=jnp.ones((L, 1, D), jnp.float32), ln2_b=jnp.zeros((L, 1, D), jnp.float32),
            fc_w=nrm((L, D, 4 * D)), fc_b=jnp.zeros((L, 1, 4 * D), jnp.float32),
            proj_w=nrm((L, 4 * D, D)), proj_b=jnp.zeros((L, 1, D), jnp.float32),
        )

    # patch-embed conv weight in PyTorch layout (hidden, C, p, p), flattened for matmul
    conv1 = nrm((hidden, 3, patch, patch))
    conv1_w = conv1.reshape(hidden, -1).T                     # (C*p*p, hidden)

    # synthetic tokenized prompts: EOT (max id) position per class drives argmax gather
    eot_pos = jnp.array([4, 5, 6, 7], dtype=jnp.int32)
    tokenized = (jnp.arange(seq_len)[None, :] < (eot_pos[:, None] + 1)).astype(jnp.int32)
    tokenized = tokenized.at[jnp.arange(n_cls), eot_pos].set(49407)

    # TODO(synk): real CLIP tokenizer / token_embedding lookup replaced with synthetic
    # deterministic prefix/suffix embedding buffers (same shapes as the register_buffers).
    params = dict(
        prompt_learner=dict(
            ctx=nrm((n_ctx, ctx_dim)),                        # nn.Parameter ctx
            vctx=nrm((n_ctx, hidden)),                        # nn.Parameter vctx
            token_prefix=nrm((n_cls, 1, ctx_dim)),            # SOS embedding
            token_suffix=nrm((n_cls, seq_len - 1 - n_ctx, ctx_dim)),
        ),
        tokenized_prompts=tokenized,
        text=dict(
            n_heads=n_heads,
            pos_emb=nrm((seq_len, ctx_dim)),
            stack=stack(n_layers, ctx_dim),
        ),
        visual=dict(
            patch=patch, hidden=hidden, n_heads=n_heads,
            conv1_w=conv1_w,
            class_emb=nrm((hidden,)),
            pos_emb=nrm((1 + (16 // patch) ** 2, hidden)),
            ln_pre_w=jnp.ones((1, hidden), jnp.float32),
            ln_pre_b=jnp.zeros((1, hidden), jnp.float32),
            stack=stack(n_layers, hidden),
        ),
        head=dict(
            ln_post_w=jnp.ones((1, hidden), jnp.float32),
            ln_post_b=jnp.zeros((1, hidden), jnp.float32),
            ln_final_w=jnp.ones((1, ctx_dim), jnp.float32),
            ln_final_b=jnp.zeros((1, ctx_dim), jnp.float32),
            visual_proj=nrm((hidden, embed_dim)),
            text_proj=nrm((ctx_dim, embed_dim)),
        ),
        logit_scale=jnp.array(math.log(1.0 / 0.07), dtype=jnp.float32),
    )
    return params


if __name__ == "__main__":
    key = jax.random.PRNGKey(0)
    pkey, ikey = jax.random.split(key)
    params = init_params(pkey)
    # image in NCHW, like the PyTorch module input
    image = jax.random.normal(ikey, (2, 3, 16, 16), dtype=jnp.float32)

    fwd = jax.jit(lambda img: custom_clip_teacher_forward(img, params))
    img_f, txt_f, logits = fwd(image)
    jax.block_until_ready((img_f, txt_f, logits))

    assert img_f.shape == (2, 32)
    assert txt_f.shape == (4, 32)
    assert logits.shape == (2, 4)
    assert bool(jnp.all(jnp.isfinite(logits)))
    assert bool(jnp.all(jnp.isfinite(img_f))) and bool(jnp.all(jnp.isfinite(txt_f)))
    print("KERNEL_OK")
</pallas_src>

<mosaic_0001>
module attributes {stable_mosaic.version = 11 : i64} {
  func.func @_matmul_kernel(%arg0: i32, %arg1: i32, %arg2: i32, %arg3: memref<8x192xf32, #tpu.memory_space<vmem>>, %arg4: memref<192x64xf32, #tpu.memory_space<vmem>>, %arg5: memref<8x64xf32, #tpu.memory_space<vmem>>, %arg6: memref<8x64xf32, #tpu.memory_space<vmem>>) attributes {dimension_semantics = [#tpu.dimension_semantics<parallel>, #tpu.dimension_semantics<parallel>, #tpu.dimension_semantics<arbitrary>], iteration_bounds = array<i64: 1, 1, 1>, scalar_prefetch = 0 : i64, scratch_operands = 1 : i64, tpu.core_type = #tpu.core_type<tc>, window_params = [{transform_indices = @transform_0, window_bounds = array<i64: 8, 192>}, {transform_indices = @transform_1, window_bounds = array<i64: 192, 64>}, {transform_indices = @transform_2, window_bounds = array<i64: 8, 64>}]} {
    %c0_i32 = arith.constant 0 : i32
    %0 = arith.cmpi eq, %arg2, %c0_i32 : i32
    %1 = arith.extui %0 : i1 to i32
    %c0_i32_0 = arith.constant 0 : i32
    %2 = arith.cmpi ne, %1, %c0_i32_0 : i32
    scf.if %2 {
      %cst_10 = arith.constant 0.000000e+00 : f32
      %14 = vector.broadcast %cst_10 : f32 to vector<8x64xf32>
      %c0_11 = arith.constant 0 : index
      %c0_12 = arith.constant 0 : index
      %15 = vector.load %arg6[%c0_11, %c0_12] : memref<8x64xf32, #tpu.memory_space<vmem>>, vector<8x64xf32>
      tpu.vector_store %arg6[%c0_11, %c0_12], %14 {strides = array<i32>} : memref<8x64xf32, #tpu.memory_space<vmem>>, vector<8x64xf32>,
    } else {
    }
    %c0 = arith.constant 0 : index
    %c0_1 = arith.constant 0 : index
    %3 = vector.load %arg6[%c0, %c0_1] : memref<8x64xf32, #tpu.memory_space<vmem>>, vector<8x64xf32>
    %c0_2 = arith.constant 0 : index
    %c0_3 = arith.constant 0 : index
    %4 = vector.load %arg3[%c0_2, %c0_3] : memref<8x192xf32, #tpu.memory_space<vmem>>, vector<8x192xf32>
    %5 = arith.truncf %4 : vector<8x192xf32> to vector<8x192xbf16>
    %c0_4 = arith.constant 0 : index
    %c0_5 = arith.constant 0 : index
    %6 = vector.load %arg4[%c0_4, %c0_5] : memref<192x64xf32, #tpu.memory_space<vmem>>, vector<192x64xf32>
    %7 = arith.truncf %6 : vector<192x64xf32> to vector<192x64xbf16>
    %cst = arith.constant dense<0.000000e+00> : vector<8x64xf32>
    %8 = tpu.matmul %5, %7, %cst {dimension_numbers = #tpu.dot_dimension_numbers<[1], [0], [0], [1], [0, 0, 1, 1], [], []>} : vector<8x192xbf16>, vector<192x64xbf16>, vector<8x64xf32> -> vector<8x64xf32>
    %9 = arith.addf %3, %8 : vector<8x64xf32>
    %c0_6 = arith.constant 0 : index
    %c0_7 = arith.constant 0 : index
    %10 = vector.load %arg6[%c0_6, %c0_7] : memref<8x64xf32, #tpu.memory_space<vmem>>, vector<8x64xf32>
    tpu.vector_store %arg6[%c0_6, %c0_7], %9 {strides = array<i32>} : memref<8x64xf32, #tpu.memory_space<vmem>>, vector<8x64xf32>,
    %c0_i32_8 = arith.constant 0 : i32
    %11 = arith.cmpi eq, %arg2, %c0_i32_8 : i32
    %12 = arith.extui %11 : i1 to i32
    %c0_i32_9 = arith.constant 0 : i32
    %13 = arith.cmpi ne, %12, %c0_i32_9 : i32
    scf.if %13 {
      %c0_10 = arith.constant 0 : index
      %c0_11 = arith.constant 0 : index
      %14 = vector.load %arg6[%c0_10, %c0_11] : memref<8x64xf32, #tpu.memory_space<vmem>>, vector<8x64xf32>
      %c0_12 = arith.constant 0 : index
      %c0_13 = arith.constant 0 : index
      %15 = vector.load %arg5[%c0_12, %c0_13] : memref<8x64xf32, #tpu.memory_space<vmem>>, vector<8x64xf32>
      tpu.vector_store %arg5[%c0_12, %c0_13], %14 {strides = array<i32>} : memref<8x64xf32, #tpu.memory_space<vmem>>, vector<8x64xf32>,
    } else {
    }
    return
  }
  func.func @transform_0(%arg0: i32, %arg1: i32, %arg2: i32) -> (i32, i32) {
    %c0_i32 = arith.constant 0 : i32
    return %arg0, %arg2 : i32, i32
  }
  func.func @transform_1(%arg0: i32, %arg1: i32, %arg2: i32) -> (i32, i32) {
    %c0_i32 = arith.constant 0 : i32
    return %arg2, %arg1 : i32, i32
  }
  func.func @transform_2(%arg0: i32, %arg1: i32, %arg2: i32) -> (i32, i32) {
    %c0_i32 = arith.constant 0 : i32
    return %arg0, %arg1 : i32, i32
  }
}

module attributes {stable_mosaic.version = 11 : i64} {
  func.func @_encoder_kernel(%arg0: i32, %arg1: memref<16x64xf32, #tpu.memory_space<vmem>>, %arg2: memref<16x16xf32, #tpu.memory_space<vmem>>, %arg3: memref<1x64xf32, #tpu.memory_space<vmem>>, %arg4: memref<1x64xf32, #tpu.memory_space<vmem>>, %arg5: memref<1x1x64xf32, #tpu.memory_space<vmem>>, %arg6: memref<1x1x64xf32, #tpu.memory_space<vmem>>, %arg7: memref<1x64x192xf32, #tpu.memory_space<vmem>>, %arg8: memref<1x1x192xf32, #tpu.memory_space<vmem>>, %arg9: memref<1x64x64xf32, #tpu.memory_space<vmem>>, %arg10: memref<1x1x64xf32, #tpu.memory_space<vmem>>, %arg11: memref<1x1x64xf32, #tpu.memory_space<vmem>>, %arg12: memref<1x1x64xf32, #tpu.memory_space<vmem>>, %arg13: memref<1x64x256xf32, #tpu.memory_space<vmem>>, %arg14: memref<1x1x256xf32, #tpu.memory_space<vmem>>, %arg15: memref<1x256x64xf32, #tpu.memory_space<vmem>>, %arg16: memref<1x1x64xf32, #tpu.memory_space<vmem>>, %arg17: memref<16x64xf32, #tpu.memory_space<vmem>>, %arg18: memref<16x64xf32, #tpu.memory_space<vmem>>) attributes {dimension_semantics = [#tpu.dimension_semantics<arbitrary>], iteration_bounds = array<i64: 2>, scalar_prefetch = 0 : i64, scratch_operands = 1 : i64, tpu.core_type = #tpu.core_type<tc>, window_params = [{pipeline_mode = #tpu.pipeline_mode<synchronous>, transform_indices = @transform_0, window_bounds = array<i64: 16, 64>}, {pipeline_mode = #tpu.pipeline_mode<synchronous>, transform_indices = @transform_1, window_bounds = array<i64: 16, 16>}, {pipeline_mode = #tpu.pipeline_mode<synchronous>, transform_indices = @transform_2, window_bounds = array<i64: 1, 64>}, {pipeline_mode = #tpu.pipeline_mode<synchronous>, transform_indices = @transform_3, window_bounds = array<i64: 1, 64>}, {transform_indices = @transform_4, window_bounds = array<i64: 1, 1, 64>}, {transform_indices = @transform_5, window_bounds = array<i64: 1, 1, 64>}, {transform_indices = @transform_6, window_bounds = array<i64: 1, 64, 192>}, {transform_indices = @transform_7, window_bounds = array<i64: 1, 1, 192>}, {transform_indices = @transform_8, window_bounds = array<i64: 1, 64, 64>}, {transform_indices = @transform_9, window_bounds = array<i64: 1, 1, 64>}, {transform_indices = @transform_10, window_bounds = array<i64: 1, 1, 64>}, {transform_indices = @transform_11, window_bounds = array<i64: 1, 1, 64>}, {transform_indices = @transform_12, window_bounds = array<i64: 1, 64, 256>}, {transform_indices = @transform_13, window_bounds = array<i64: 1, 1, 256>}, {transform_indices = @transform_14, window_bounds = array<i64: 1, 256, 64>}, {transform_indices = @transform_15, window_bounds = array<i64: 1, 1, 64>}, {pipeline_mode = #tpu.pipeline_mode<synchronous>, transform_indices = @transform_16, window_bounds = array<i64: 16, 64>}]} {
    %c0_i32 = arith.constant 0 : i32
    %0 = arith.cmpi eq, %arg0, %c0_i32 : i32
    %1 = arith.extui %0 : i1 to i32
    %c0_i32_0 = arith.constant 0 : i32
    %2 = arith.cmpi ne, %1, %c0_i32_0 : i32
    scf.if %2 {
      %c0_78 = arith.constant 0 : index
      %c0_79 = arith.constant 0 : index
      %196 = vector.load %arg1[%c0_78, %c0_79] : memref<16x64xf32, #tpu.memory_space<vmem>>, vector<16x64xf32>
      %c0_80 = arith.constant 0 : index
      %c0_81 = arith.constant 0 : index
      %197 = vector.load %arg3[%c0_80, %c0_81] : memref<1x64xf32, #tpu.memory_space<vmem>>, vector<1x64xf32>
      %c0_82 = arith.constant 0 : index
      %c0_83 = arith.constant 0 : index
      %198 = vector.load %arg4[%c0_82, %c0_83] : memref<1x64xf32, #tpu.memory_space<vmem>>, vector<1x64xf32>
      %cst_84 = arith.constant dense<0.000000e+00> : vector<16xf32>
      %199 = vector.multi_reduction <add>, %196, %cst_84 [1] : vector<16x64xf32> to vector<16xf32>
      %200 = vector.shape_cast %199 : vector<16xf32> to vector<16x1xf32>
      %cst_85 = arith.constant 6.400000e+01 : f32
      %201 = vector.broadcast %cst_85 : f32 to vector<16x1xf32>
      %202 = arith.divf %200, %201 : vector<16x1xf32>
      %203 = vector.broadcast %202 : vector<16x1xf32> to vector<16x64xf32>
      %204 = arith.subf %196, %203 : vector<16x64xf32>
      %205 = arith.mulf %204, %204 : vector<16x64xf32>
      %cst_86 = arith.constant dense<0.000000e+00> : vector<16xf32>
      %206 = vector.multi_reduction <add>, %205, %cst_86 [1] : vector<16x64xf32> to vector<16xf32>
      %207 = vector.shape_cast %206 : vector<16xf32> to vector<16x1xf32>
      %cst_87 = arith.constant 6.400000e+01 : f32
      %208 = vector.broadcast %cst_87 : f32 to vector<16x1xf32>
      %209 = arith.divf %207, %208 : vector<16x1xf32>
      %210 = vector.broadcast %202 : vector<16x1xf32> to vector<16x64xf32>
      %211 = arith.subf %196, %210 : vector<16x64xf32>
      %cst_88 = arith.constant 9.99999974E-6 : f32
      %212 = vector.broadcast %cst_88 : f32 to vector<16x1xf32>
      %213 = arith.addf %209, %212 : vector<16x1xf32>
      %214 = math.rsqrt %213 : vector<16x1xf32>
      %215 = vector.broadcast %214 : vector<16x1xf32> to vector<16x64xf32>
      %216 = arith.mulf %211, %215 : vector<16x64xf32>
      %217 = vector.broadcast %197 : vector<1x64xf32> to vector<16x64xf32>
      %218 = arith.mulf %216, %217 : vector<16x64xf32>
      %219 = vector.broadcast %198 : vector<1x64xf32> to vector<16x64xf32>
      %220 = arith.addf %218, %219 : vector<16x64xf32>
      %c0_89 = arith.constant 0 : index
      %c0_90 = arith.constant 0 : index
      %221 = vector.load %arg18[%c0_89, %c0_90] : memref<16x64xf32, #tpu.memory_space<vmem>>, vector<16x64xf32>
      tpu.vector_store %arg18[%c0_89, %c0_90], %220 {strides = array<i32>} : memref<16x64xf32, #tpu.memory_space<vmem>>, vector<16x64xf32>,
    } else {
    }
    %c0 = arith.constant 0 : index
    %c0_1 = arith.constant 0 : index
    %3 = vector.load %arg18[%c0, %c0_1] : memref<16x64xf32, #tpu.memory_space<vmem>>, vector<16x64xf32>
    %c0_2 = arith.constant 0 : index
    %c0_3 = arith.constant 0 : index
    %4 = vector.load %arg2[%c0_2, %c0_3] : memref<16x16xf32, #tpu.memory_space<vmem>>, vector<16x16xf32>
    %c0_4 = arith.constant 0 : index
    %c0_5 = arith.constant 0 : index
    %c0_6 = arith.constant 0 : index
    %5 = vector.load %arg5[%c0_4, %c0_5, %c0_6] : memref<1x1x64xf32, #tpu.memory_space<vmem>>, vector<1x1x64xf32>
    %6 = vector.shape_cast %5 : vector<1x1x64xf32> to vector<1x64xf32>
    %c0_7 = arith.constant 0 : index
    %c0_8 = arith.constant 0 : index
    %c0_9 = arith.constant 0 : index
    %7 = vector.load %arg6[%c0_7, %c0_8, %c0_9] : memref<1x1x64xf32, #tpu.memory_space<vmem>>, vector<1x1x64xf32>
    %8 = vector.shape_cast %7 : vector<1x1x64xf32> to vector<1x64xf32>
    %cst = arith.constant dense<0.000000e+00> : vector<16xf32>
    %9 = vector.multi_reduction <add>, %3, %cst [1] : vector<16x64xf32> to vector<16xf32>
    %10 = vector.shape_cast %9 : vector<16xf32> to vector<16x1xf32>
    %cst_10 = arith.constant 6.400000e+01 : f32
    %11 = vector.broadcast %cst_10 : f32 to vector<16x1xf32>
    %12 = arith.divf %10, %11 : vector<16x1xf32>
    %13 = vector.broadcast %12 : vector<16x1xf32> to vector<16x64xf32>
    %14 = arith.subf %3, %13 : vector<16x64xf32>
    %15 = arith.mulf %14, %14 : vector<16x64xf32>
    %cst_11 = arith.constant dense<0.000000e+00> : vector<16xf32>
    %16 = vector.multi_reduction <add>, %15, %cst_11 [1] : vector<16x64xf32> to vector<16xf32>
    %17 = vector.shape_cast %16 : vector<16xf32> to vector<16x1xf32>
    %cst_12 = arith.constant 6.400000e+01 : f32
    %18 = vector.broadcast %cst_12 : f32 to vector<16x1xf32>
    %19 = arith.divf %17, %18 : vector<16x1xf32>
    %20 = vector.broadcast %12 : vector<16x1xf32> to vector<16x64xf32>
    %21 = arith.subf %3, %20 : vector<16x64xf32>
    %cst_13 = arith.constant 9.99999974E-6 : f32
    %22 = vector.broadcast %cst_13 : f32 to vector<16x1xf32>
    %23 = arith.addf %19, %22 : vector<16x1xf32>
    %24 = math.rsqrt %23 : vector<16x1xf32>
    %25 = vector.broadcast %24 : vector<16x1xf32> to vector<16x64xf32>
    %26 = arith.mulf %21, %25 : vector<16x64xf32>
    %27 = vector.broadcast %6 : vector<1x64xf32> to vector<16x64xf32>
    %28 = arith.mulf %26, %27 : vector<16x64xf32>
    %29 = vector.broadcast %8 : vector<1x64xf32> to vector<16x64xf32>
    %30 = arith.addf %28, %29 : vector<16x64xf32>
    %c0_14 = arith.constant 0 : index
    %c0_15 = arith.constant 0 : index
    %c0_16 = arith.constant 0 : index
    %31 = vector.load %arg7[%c0_14, %c0_15, %c0_16] : memref<1x64x192xf32, #tpu.memory_space<vmem>>, vector<1x64x192xf32>
    %32 = vector.shape_cast %31 : vector<1x64x192xf32> to vector<64x192xf32>
    %33 = arith.truncf %30 : vector<16x64xf32> to vector<16x64xbf16>
    %34 = arith.truncf %32 : vector<64x192xf32> to vector<64x192xbf16>
    %cst_17 = arith.constant dense<0.000000e+00> : vector<16x192xf32>
    %35 = tpu.matmul %33, %34, %cst_17 {dimension_numbers = #tpu.dot_dimension_numbers<[1], [0], [0], [1], [0, 0, 1, 1], [], []>} : vector<16x64xbf16>, vector<64x192xbf16>, vector<16x192xf32> -> vector<16x192xf32>
    %c0_18 = arith.constant 0 : index
    %c0_19 = arith.constant 0 : index
    %c0_20 = arith.constant 0 : index
    %36 = vector.load %arg8[%c0_18, %c0_19, %c0_20] : memref<1x1x192xf32, #tpu.memory_space<vmem>>, vector<1x1x192xf32>
    %37 = vector.shape_cast %36 : vector<1x1x192xf32> to vector<1x192xf32>
    %38 = vector.broadcast %37 : vector<1x192xf32> to vector<16x192xf32>
    %39 = arith.addf %35, %38 : vector<16x192xf32>
    %40 = vector.extract_strided_slice %39 {offsets = [0, 0], sizes = [16, 16], strides = [1, 1]} : vector<16x192xf32> to vector<16x16xf32>
    %41 = vector.extract_strided_slice %39 {offsets = [0, 64], sizes = [16, 16], strides = [1, 1]} : vector<16x192xf32> to vector<16x16xf32>
    %42 = vector.extract_strided_slice %39 {offsets = [0, 128], sizes = [16, 16], strides = [1, 1]} : vector<16x192xf32> to vector<16x16xf32>
    %43 = arith.truncf %40 : vector<16x16xf32> to vector<16x16xbf16>
    %44 = arith.truncf %41 : vector<16x16xf32> to vector<16x16xbf16>
    %cst_21 = arith.constant dense<0.000000e+00> : vector<16x16xf32>
    %45 = tpu.matmul %43, %44, %cst_21 {dimension_numbers = #tpu.dot_dimension_numbers<[1], [1], [0], [0], [0, 0, 1, 0], [], []>} : vector<16x16xbf16>, vector<16x16xbf16>, vector<16x16xf32> -> vector<16x16xf32>
    %cst_22 = arith.constant 2.500000e-01 : f32
    %46 = vector.broadcast %cst_22 : f32 to vector<16x16xf32>
    %47 = arith.mulf %45, %46 : vector<16x16xf32>
    %48 = arith.addf %47, %4 : vector<16x16xf32>
    %cst_23 = arith.constant dense<0xFF800000> : vector<16xf32>
    %49 = vector.multi_reduction <maximumf>, %48, %cst_23 [1] : vector<16x16xf32> to vector<16xf32>
    %50 = vector.shape_cast %49 : vector<16xf32> to vector<16x1xf32>
    %51 = vector.broadcast %50 : vector<16x1xf32> to vector<16x16xf32>
    %52 = arith.subf %48, %51 : vector<16x16xf32>
    %53 = math.exp %52 : vector<16x16xf32>
    %cst_24 = arith.constant dense<0.000000e+00> : vector<16xf32>
    %54 = vector.multi_reduction <add>, %53, %cst_24 [1] : vector<16x16xf32> to vector<16xf32>
    %55 = vector.shape_cast %54 : vector<16xf32> to vector<16x1xf32>
    %56 = tpu.reciprocal %55 {approx = true} : vector<16x1xf32> -> vector<16x1xf32>
    %57 = vector.broadcast %56 : vector<16x1xf32> to vector<16x16xf32>
    %58 = arith.mulf %53, %57 : vector<16x16xf32>
    %59 = arith.truncf %58 : vector<16x16xf32> to vector<16x16xbf16>
    %60 = arith.truncf %42 : vector<16x16xf32> to vector<16x16xbf16>
    %cst_25 = arith.constant dense<0.000000e+00> : vector<16x16xf32>
    %61 = tpu.matmul %59, %60, %cst_25 {dimension_numbers = #tpu.dot_dimension_numbers<[1], [0], [0], [1], [0, 0, 1, 1], [], []>} : vector<16x16xbf16>, vector<16x16xbf16>, vector<16x16xf32> -> vector<16x16xf32>
    %62 = vector.extract_strided_slice %39 {offsets = [0, 16], sizes = [16, 16], strides = [1, 1]} : vector<16x192xf32> to vector<16x16xf32>
    %63 = vector.extract_strided_slice %39 {offsets = [0, 80], sizes = [16, 16], strides = [1, 1]} : vector<16x192xf32> to vector<16x16xf32>
    %64 = vector.extract_strided_slice %39 {offsets = [0, 144], sizes = [16, 16], strides = [1, 1]} : vector<16x192xf32> to vector<16x16xf32>
    %65 = arith.truncf %62 : vector<16x16xf32> to vector<16x16xbf16>
    %66 = arith.truncf %63 : vector<16x16xf32> to vector<16x16xbf16>
    %cst_26 = arith.constant dense<0.000000e+00> : vector<16x16xf32>
    %67 = tpu.matmul %65, %66, %cst_26 {dimension_numbers = #tpu.dot_dimension_numbers<[1], [1], [0], [0], [0, 0, 1, 0], [], []>} : vector<16x16xbf16>, vector<16x16xbf16>, vector<16x16xf32> -> vector<16x16xf32>
    %cst_27 = arith.constant 2.500000e-01 : f32
    %68 = vector.broadcast %cst_27 : f32 to vector<16x16xf32>
    %69 = arith.mulf %67, %68 : vector<16x16xf32>
    %70 = arith.addf %69, %4 : vector<16x16xf32>
    %cst_28 = arith.constant dense<0xFF800000> : vector<16xf32>
    %71 = vector.multi_reduction <maximumf>, %70, %cst_28 [1] : vector<16x16xf32> to vector<16xf32>
    %72 = vector.shape_cast %71 : vector<16xf32> to vector<16x1xf32>
    %73 = vector.broadcast %72 : vector<16x1xf32> to vector<16x16xf32>
    %74 = arith.subf %70, %73 : vector<16x16xf32>
    %75 = math.exp %74 : vector<16x16xf32>
    %cst_29 = arith.constant dense<0.000000e+00> : vector<16xf32>
    %76 = vector.multi_reduction <add>, %75, %cst_29 [1] : vector<16x16xf32> to vector<16xf32>
    %77 = vector.shape_cast %76 : vector<16xf32> to vector<16x1xf32>
    %78 = tpu.reciprocal %77 {approx = true} : vector<16x1xf32> -> vector<16x1xf32>
    %79 = vector.broadcast %78 : vector<16x1xf32> to vector<16x16xf32>
    %80 = arith.mulf %75, %79 : vector<16x16xf32>
    %81 = arith.truncf %80 : vector<16x16xf32> to vector<16x16xbf16>
    %82 = arith.truncf %64 : vector<16x16xf32> to vector<16x16xbf16>
    %cst_30 = arith.constant dense<0.000000e+00> : vector<16x16xf32>
    %83 = tpu.matmul %81, %82, %cst_30 {dimension_numbers = #tpu.dot_dimension_numbers<[1], [0], [0], [1], [0, 0, 1, 1], [], []>} : vector<16x16xbf16>, vector<16x16xbf16>, vector<16x16xf32> -> vector<16x16xf32>
    %84 = vector.extract_strided_slice %39 {offsets = [0, 32], sizes = [16, 16], strides = [1, 1]} : vector<16x192xf32> to vector<16x16xf32>
    %85 = vector.extract_strided_slice %39 {offsets = [0, 96], sizes = [16, 16], strides = [1, 1]} : vector<16x192xf32> to vector<16x16xf32>
    %86 = vector.extract_strided_slice %39 {offsets = [0, 160], sizes = [16, 16], strides = [1, 1]} : vector<16x192xf32> to vector<16x16xf32>
    %87 = arith.truncf %84 : vector<16x16xf32> to vector<16x16xbf16>
    %88 = arith.truncf %85 : vector<16x16xf32> to vector<16x16xbf16>
    %cst_31 = arith.constant dense<0.000000e+00> : vector<16x16xf32>
    %89 = tpu.matmul %87, %88, %cst_31 {dimension_numbers = #tpu.dot_dimension_numbers<[1], [1], [0], [0], [0, 0, 1, 0], [], []>} : vector<16x16xbf16>, vector<16x16xbf16>, vector<16x16xf32> -> vector<16x16xf32>
    %cst_32 = arith.constant 2.500000e-01 : f32
    %90 = vector.broadcast %cst_32 : f32 to vector<16x16xf32>
    %91 = arith.mulf %89, %90 : vector<16x16xf32>
    %92 = arith.addf %91, %4 : vector<16x16xf32>
    %cst_33 = arith.constant dense<0xFF800000> : vector<16xf32>
    %93 = vector.multi_reduction <maximumf>, %92, %cst_33 [1] : vector<16x16xf32> to vector<16xf32>
    %94 = vector.shape_cast %93 : vector<16xf32> to vector<16x1xf32>
    %95 = vector.broadcast %94 : vector<16x1xf32> to vector<16x16xf32>
    %96 = arith.subf %92, %95 : vector<16x16xf32>
    %97 = math.exp %96 : vector<16x16xf32>
    %cst_34 = arith.constant dense<0.000000e+00> : vector<16xf32>
    %98 = vector.multi_reduction <add>, %97, %cst_34 [1] : vector<16x16xf32> to vector<16xf32>
    %99 = vector.shape_cast %98 : vector<16xf32> to vector<16x1xf32>
    %100 = tpu.reciprocal %99 {approx = true} : vector<16x1xf32> -> vector<16x1xf32>
    %101 = vector.broadcast %100 : vector<16x1xf32> to vector<16x16xf32>
    %102 = arith.mulf %97, %101 : vector<16x16xf32>
    %103 = arith.truncf %102 : vector<16x16xf32> to vector<16x16xbf16>
    %104 = arith.truncf %86 : vector<16x16xf32> to vector<16x16xbf16>
    %cst_35 = arith.constant dense<0.000000e+00> : vector<16x16xf32>
    %105 = tpu.matmul %103, %104, %cst_35 {dimension_numbers = #tpu.dot_dimension_numbers<[1], [0], [0], [1], [0, 0, 1, 1], [], []>} : vector<16x16xbf16>, vector<16x16xbf16>, vector<16x16xf32> -> vector<16x16xf32>
    %106 = vector.extract_strided_slice %39 {offsets = [0, 48], sizes = [16, 16], strides = [1, 1]} : vector<16x192xf32> to vector<16x16xf32>
    %107 = vector.extract_strided_slice %39 {offsets = [0, 112], sizes = [16, 16], strides = [1, 1]} : vector<16x192xf32> to vector<16x16xf32>
    %108 = vector.extract_strided_slice %39 {offsets = [0, 176], sizes = [16, 16], strides = [1, 1]} : vector<16x192xf32> to vector<16x16xf32>
    %109 = arith.truncf %106 : vector<16x16xf32> to vector<16x16xbf16>
    %110 = arith.truncf %107 : vector<16x16xf32> to vector<16x16xbf16>
    %cst_36 = arith.constant dense<0.000000e+00> : vector<16x16xf32>
    %111 = tpu.matmul %109, %110, %cst_36 {dimension_numbers = #tpu.dot_dimension_numbers<[1], [1], [0], [0], [0, 0, 1, 0], [], []>} : vector<16x16xbf16>, vector<16x16xbf16>, vector<16x16xf32> -> vector<16x16xf32>
    %cst_37 = arith.constant 2.500000e-01 : f32
    %112 = vector.broadcast %cst_37 : f32 to vector<16x16xf32>
    %113 = arith.mulf %111, %112 : vector<16x16xf32>
    %114 = arith.addf %113, %4 : vector<16x16xf32>
    %cst_38 = arith.constant dense<0xFF800000> : vector<16xf32>
    %115 = vector.multi_reduction <maximumf>, %114, %cst_38 [1] : vector<16x16xf32> to vector<16xf32>
    %116 = vector.shape_cast %115 : vector<16xf32> to vector<16x1xf32>
    %117 = vector.broadcast %116 : vector<16x1xf32> to vector<16x16xf32>
    %118 = arith.subf %114, %117 : vector<16x16xf32>
    %119 = math.exp %118 : vector<16x16xf32>
    %cst_39 = arith.constant dense<0.000000e+00> : vector<16xf32>
    %120 = vector.multi_reduction <add>, %119, %cst_39 [1] : vector<16x16xf32> to vector<16xf32>
    %121 = vector.shape_cast %120 : vector<16xf32> to vector<16x1xf32>
    %122 = tpu.reciprocal %121 {approx = true} : vector<16x1xf32> -> vector<16x1xf32>
    %123 = vector.broadcast %122 : vector<16x1xf32> to vector<16x16xf32>
    %124 = arith.mulf %119, %123 : vector<16x16xf32>
    %125 = arith.truncf %124 : vector<16x16xf32> to vector<16x16xbf16>
    %126 = arith.truncf %108 : vector<16x16xf32> to vector<16x16xbf16>
    %cst_40 = arith.constant dense<0.000000e+00> : vector<16x16xf32>
    %127 = tpu.matmul %125, %126, %cst_40 {dimension_numbers = #tpu.dot_dimension_numbers<[1], [0], [0], [1], [0, 0, 1, 1], [], []>} : vector<16x16xbf16>, vector<16x16xbf16>, vector<16x16xf32> -> vector<16x16xf32>
    %128 = tpu.concatenate %61, %83, %105, %127 in 1 : vector<16x16xf32>, vector<16x16xf32>, vector<16x16xf32>, vector<16x16xf32> -> vector<16x64xf32>
    %c0_41 = arith.constant 0 : index
    %c0_42 = arith.constant 0 : index
    %c0_43 = arith.constant 0 : index
    %129 = vector.load %arg9[%c0_41, %c0_42, %c0_43] : memref<1x64x64xf32, #tpu.memory_space<vmem>>, vector<1x64x64xf32>
    %130 = vector.shape_cast %129 : vector<1x64x64xf32> to vector<64x64xf32>
    %131 = arith.truncf %128 : vector<16x64xf32> to vector<16x64xbf16>
    %132 = arith.truncf %130 : vector<64x64xf32> to vector<64x64xbf16>
    %cst_44 = arith.constant dense<0.000000e+00> : vector<16x64xf32>
    %133 = tpu.matmul %131, %132, %cst_44 {dimension_numbers = #tpu.dot_dimension_numbers<[1], [0], [0], [1], [0, 0, 1, 1], [], []>} : vector<16x64xbf16>, vector<64x64xbf16>, vector<16x64xf32> -> vector<16x64xf32>
    %134 = arith.addf %3, %133 : vector<16x64xf32>
    %c0_45 = arith.constant 0 : index
    %c0_46 = arith.constant 0 : index
    %c0_47 = arith.constant 0 : index
    %135 = vector.load %arg10[%c0_45, %c0_46, %c0_47] : memref<1x1x64xf32, #tpu.memory_space<vmem>>, vector<1x1x64xf32>
    %136 = vector.shape_cast %135 : vector<1x1x64xf32> to vector<1x64xf32>
    %137 = vector.broadcast %136 : vector<1x64xf32> to vector<16x64xf32>
    %138 = arith.addf %134, %137 : vector<16x64xf32>
    %c0_48 = arith.constant 0 : index
    %c0_49 = arith.constant 0 : index
    %c0_50 = arith.constant 0 : index
    %139 = vector.load %arg11[%c0_48, %c0_49, %c0_50] : memref<1x1x64xf32, #tpu.memory_space<vmem>>, vector<1x1x64xf32>
    %140 = vector.shape_cast %139 : vector<1x1x64xf32> to vector<1x64xf32>
    %c0_51 = arith.constant 0 : index
    %c0_52 = arith.constant 0 : index
    %c0_53 = arith.constant 0 : index
    %141 = vector.load %arg12[%c0_51, %c0_52, %c0_53] : memref<1x1x64xf32, #tpu.memory_space<vmem>>, vector<1x1x64xf32>
    %142 = vector.shape_cast %141 : vector<1x1x64xf32> to vector<1x64xf32>
    %cst_54 = arith.constant dense<0.000000e+00> : vector<16xf32>
    %143 = vector.multi_reduction <add>, %138, %cst_54 [1] : vector<16x64xf32> to vector<16xf32>
    %144 = vector.shape_cast %143 : vector<16xf32> to vector<16x1xf32>
    %cst_55 = arith.constant 6.400000e+01 : f32
    %145 = vector.broadcast %cst_55 : f32 to vector<16x1xf32>
    %146 = arith.divf %144, %145 : vector<16x1xf32>
    %147 = vector.broadcast %146 : vector<16x1xf32> to vector<16x64xf32>
    %148 = arith.subf %138, %147 : vector<16x64xf32>
    %149 = arith.mulf %148, %148 : vector<16x64xf32>
    %cst_56 = arith.constant dense<0.000000e+00> : vector<16xf32>
    %150 = vector.multi_reduction <add>, %149, %cst_56 [1] : vector<16x64xf32> to vector<16xf32>
    %151 = vector.shape_cast %150 : vector<16xf32> to vector<16x1xf32>
    %cst_57 = arith.constant 6.400000e+01 : f32
    %152 = vector.broadcast %cst_57 : f32 to vector<16x1xf32>
    %153 = arith.divf %151, %152 : vector<16x1xf32>
    %154 = vector.broadcast %146 : vector<16x1xf32> to vector<16x64xf32>
    %155 = arith.subf %138, %154 : vector<16x64xf32>
    %cst_58 = arith.constant 9.99999974E-6 : f32
    %156 = vector.broadcast %cst_58 : f32 to vector<16x1xf32>
    %157 = arith.addf %153, %156 : vector<16x1xf32>
    %158 = math.rsqrt %157 : vector<16x1xf32>
    %159 = vector.broadcast %158 : vector<16x1xf32> to vector<16x64xf32>
    %160 = arith.mulf %155, %159 : vector<16x64xf32>
    %161 = vector.broadcast %140 : vector<1x64xf32> to vector<16x64xf32>
    %162 = arith.mulf %160, %161 : vector<16x64xf32>
    %163 = vector.broadcast %142 : vector<1x64xf32> to vector<16x64xf32>
    %164 = arith.addf %162, %163 : vector<16x64xf32>
    %c0_59 = arith.constant 0 : index
    %c0_60 = arith.constant 0 : index
    %c0_61 = arith.constant 0 : index
    %165 = vector.load %arg13[%c0_59, %c0_60, %c0_61] : memref<1x64x256xf32, #tpu.memory_space<vmem>>, vector<1x64x256xf32>
    %166 = vector.shape_cast %165 : vector<1x64x256xf32> to vector<64x256xf32>
    %167 = arith.truncf %164 : vector<16x64xf32> to vector<16x64xbf16>
    %168 = arith.truncf %166 : vector<64x256xf32> to vector<64x256xbf16>
    %cst_62 = arith.constant dense<0.000000e+00> : vector<16x256xf32>
    %169 = tpu.matmul %167, %168, %cst_62 {dimension_numbers = #tpu.dot_dimension_numbers<[1], [0], [0], [1], [0, 0, 1, 1], [], []>} : vector<16x64xbf16>, vector<64x256xbf16>, vector<16x256xf32> -> vector<16x256xf32>
    %c0_63 = arith.constant 0 : index
    %c0_64 = arith.constant 0 : index
    %c0_65 = arith.constant 0 : index
    %170 = vector.load %arg14[%c0_63, %c0_64, %c0_65] : memref<1x1x256xf32, #tpu.memory_space<vmem>>, vector<1x1x256xf32>
    %171 = vector.shape_cast %170 : vector<1x1x256xf32> to vector<1x256xf32>
    %172 = vector.broadcast %171 : vector<1x256xf32> to vector<16x256xf32>
    %173 = arith.addf %169, %172 : vector<16x256xf32>
    %cst_66 = arith.constant 1.702000e+00 : f32
    %174 = vector.broadcast %cst_66 : f32 to vector<16x256xf32>
    %175 = arith.mulf %174, %173 : vector<16x256xf32>
    %176 = arith.negf %175 : vector<16x256xf32>
    %177 = math.exp %176 : vector<16x256xf32>
    %cst_67 = arith.constant 1.000000e+00 : f32
    %178 = vector.broadcast %cst_67 : f32 to vector<16x256xf32>
    %179 = arith.addf %178, %177 : vector<16x256xf32>
    %180 = arith.divf %178, %179 : vector<16x256xf32>
    %181 = arith.mulf %173, %180 : vector<16x256xf32>
    %c0_68 = arith.constant 0 : index
    %c0_69 = arith.constant 0 : index
    %c0_70 = arith.constant 0 : index
    %182 = vector.load %arg15[%c0_68, %c0_69, %c0_70] : memref<1x256x64xf32, #tpu.memory_space<vmem>>, vector<1x256x64xf32>
    %183 = vector.shape_cast %182 : vector<1x256x64xf32> to vector<256x64xf32>
    %184 = arith.truncf %181 : vector<16x256xf32> to vector<16x256xbf16>
    %185 = arith.truncf %183 : vector<256x64xf32> to vector<256x64xbf16>
    %cst_71 = arith.constant dense<0.000000e+00> : vector<16x64xf32>
    %186 = tpu.matmul %184, %185, %cst_71 {dimension_numbers = #tpu.dot_dimension_numbers<[1], [0], [0], [1], [0, 0, 1, 1], [], []>} : vector<16x256xbf16>, vector<256x64xbf16>, vector<16x64xf32> -> vector<16x64xf32>
    %187 = arith.addf %138, %186 : vector<16x64xf32>
    %c0_72 = arith.constant 0 : index
    %c0_73 = arith.constant 0 : index
    %c0_74 = arith.constant 0 : index
    %188 = vector.load %arg16[%c0_72, %c0_73, %c0_74] : memref<1x1x64xf32, #tpu.memory_space<vmem>>, vector<1x1x64xf32>
    %189 = vector.shape_cast %188 : vector<1x1x64xf32> to vector<1x64xf32>
    %190 = vector.broadcast %189 : vector<1x64xf32> to vector<16x64xf32>
    %191 = arith.addf %187, %190 : vector<16x64xf32>
    %c0_75 = arith.constant 0 : index
    %c0_76 = arith.constant 0 : index
    %192 = vector.load %arg18[%c0_75, %c0_76] : memref<16x64xf32, #tpu.memory_space<vmem>>, vector<16x64xf32>
    tpu.vector_store %arg18[%c0_75, %c0_76], %191 {strides = array<i32>} : memref<16x64xf32, #tpu.memory_space<vmem>>, vector<16x64xf32>,
    %c1_i32 = arith.constant 1 : i32
    %193 = arith.cmpi eq, %arg0, %c1_i32 : i32
    %194 = arith.extui %193 : i1 to i32
    %c0_i32_77 = arith.constant 0 : i32
    %195 = arith.cmpi ne, %194, %c0_i32_77 : i32
    scf.if %195 {
      %c0_78 = arith.constant 0 : index
      %c0_79 = arith.constant 0 : index
      %196 = vector.load %arg17[%c0_78, %c0_79] : memref<16x64xf32, #tpu.memory_space<vmem>>, vector<16x64xf32>
      tpu.vector_store %arg17[%c0_78, %c0_79], %191 {strides = array<i32>} : memref<16x64xf32, #tpu.memory_space<vmem>>, vector<16x64xf32>,
    } else {
    }
    return
  }
  func.func @transform_0(%arg0: i32) -> (i32, i32) {
    %c0_i32 = arith.constant 0 : i32
    %c0_i32_0 = arith.constant 0 : i32
    %c0_i32_1 = arith.constant 0 : i32
    return %c0_i32, %c0_i32_0 : i32, i32
  }
  func.func @transform_1(%arg0: i32) -> (i32, i32) {
    %c0_i32 = arith.constant 0 : i32
    %c0_i32_0 = arith.constant 0 : i32
    %c0_i32_1 = arith.constant 0 : i32
    return %c0_i32, %c0_i32_0 : i32, i32
  }
  func.func @transform_2(%arg0: i32) -> (i32, i32) {
    %c0_i32 = arith.constant 0 : i32
    %c0_i32_0 = arith.constant 0 : i32
    %c0_i32_1 = arith.constant 0 : i32
    return %c0_i32, %c0_i32_0 : i32, i32
  }
  func.func @transform_3(%arg0: i32) -> (i32, i32) {
    %c0_i32 = arith.constant 0 : i32
    %c0_i32_0 = arith.constant 0 : i32
    %c0_i32_1 = arith.constant 0 : i32
    return %c0_i32, %c0_i32_0 : i32, i32
  }
  func.func @transform_4(%arg0: i32) -> (i32, i32, i32) {
    %c0_i32 = arith.constant 0 : i32
    %c0_i32_0 = arith.constant 0 : i32
    %c0_i32_1 = arith.constant 0 : i32
    return %arg0, %c0_i32, %c0_i32_0 : i32, i32, i32
  }
  func.func @transform_5(%arg0: i32) -> (i32, i32, i32) {
    %c0_i32 = arith.constant 0 : i32
    %c0_i32_0 = arith.constant 0 : i32
    %c0_i32_1 = arith.constant 0 : i32
    return %arg0, %c0_i32, %c0_i32_0 : i32, i32, i32
  }
  func.func @transform_6(%arg0: i32) -> (i32, i32, i32) {
    %c0_i32 = arith.constant 0 : i32
    %c0_i32_0 = arith.constant 0 : i32
    %c0_i32_1 = arith.constant 0 : i32
    return %arg0, %c0_i32, %c0_i32_0 : i32, i32, i32
  }
  func.func @transform_7(%arg0: i32) -> (i32, i32, i32) {
    %c0_i32 = arith.constant 0 : i32
    %c0_i32_0 = arith.constant 0 : i32
    %c0_i32_1 = arith.constant 0 : i32
    return %arg0, %c0_i32, %c0_i32_0 : i32, i32, i32
  }
  func.func @transform_8(%arg0: i32) -> (i32, i32, i32) {
    %c0_i32 = arith.constant 0 : i32
    %c0_i32_0 = arith.constant 0 : i32
    %c0_i32_1 = arith.constant 0 : i32
    return %arg0, %c0_i32, %c0_i32_0 : i32, i32, i32
  }
  func.func @transform_9(%arg0: i32) -> (i32, i32, i32) {
    %c0_i32 = arith.constant 0 : i32
    %c0_i32_0 = arith.constant 0 : i32
    %c0_i32_1 = arith.constant 0 : i32
    return %arg0, %c0_i32, %c0_i32_0 : i32, i32, i32
  }
  func.func @transform_10(%arg0: i32) -> (i32, i32, i32) {
    %c0_i32 = arith.constant 0 : i32
    %c0_i32_0 = arith.constant 0 : i32
    %c0_i32_1 = arith.constant 0 : i32
    return %arg0, %c0_i32, %c0_i32_0 : i32, i32, i32
  }
  func.func @transform_11(%arg0: i32) -> (i32, i32, i32) {
    %c0_i32 = arith.constant 0 : i32
    %c0_i32_0 = arith.constant 0 : i32
    %c0_i32_1 = arith.constant 0 : i32
    return %arg0, %c0_i32, %c0_i32_0 : i32, i32, i32
  }
  func.func @transform_12(%arg0: i32) -> (i32, i32, i32) {
    %c0_i32 = arith.constant 0 : i32
    %c0_i32_0 = arith.constant 0 : i32
    %c0_i32_1 = arith.constant 0 : i32
    return %arg0, %c0_i32, %c0_i32_0 : i32, i32, i32
  }
  func.func @transform_13(%arg0: i32) -> (i32, i32, i32) {
    %c0_i32 = arith.constant 0 : i32
    %c0_i32_0 = arith.constant 0 : i32
    %c0_i32_1 = arith.constant 0 : i32
    return %arg0, %c0_i32, %c0_i32_0 : i32, i32, i32
  }
  func.func @transform_14(%arg0: i32) -> (i32, i32, i32) {
    %c0_i32 = arith.constant 0 : i32
    %c0_i32_0 = arith.constant 0 : i32
    %c0_i32_1 = arith.constant 0 : i32
    return %arg0, %c0_i32, %c0_i32_0 : i32, i32, i32
  }
  func.func @transform_15(%arg0: i32) -> (i32, i32, i32) {
    %c0_i32 = arith.constant 0 : i32
    %c0_i32_0 = arith.constant 0 : i32
    %c0_i32_1 = arith.constant 0 : i32
    return %arg0, %c0_i32, %c0_i32_0 : i32, i32, i32
  }
  func.func @transform_16(%arg0: i32) -> (i32, i32) {
    %c0_i32 = arith.constant 0 : i32
    %c0_i32_0 = arith.constant 0 : i32
    %c0_i32_1 = arith.constant 0 : i32
    return %c0_i32, %c0_i32_0 : i32, i32
  }
}

module attributes {stable_mosaic.version = 11 : i64} {
  func.func @_encoder_kernel(%arg0: i32, %arg1: memref<32x32xf32, #tpu.memory_space<vmem>>, %arg2: memref<32x32xf32, #tpu.memory_space<vmem>>, %arg3: memref<1x32xf32, #tpu.memory_space<vmem>>, %arg4: memref<1x32xf32, #tpu.memory_space<vmem>>, %arg5: memref<1x1x32xf32, #tpu.memory_space<vmem>>, %arg6: memref<1x1x32xf32, #tpu.memory_space<vmem>>, %arg7: memref<1x32x96xf32, #tpu.memory_space<vmem>>, %arg8: memref<1x1x96xf32, #tpu.memory_space<vmem>>, %arg9: memref<1x32x32xf32, #tpu.memory_space<vmem>>, %arg10: memref<1x1x32xf32, #tpu.memory_space<vmem>>, %arg11: memref<1x1x32xf32, #tpu.memory_space<vmem>>, %arg12: memref<1x1x32xf32, #tpu.memory_space<vmem>>, %arg13: memref<1x32x128xf32, #tpu.memory_space<vmem>>, %arg14: memref<1x1x128xf32, #tpu.memory_space<vmem>>, %arg15: memref<1x128x32xf32, #tpu.memory_space<vmem>>, %arg16: memref<1x1x32xf32, #tpu.memory_space<vmem>>, %arg17: memref<32x32xf32, #tpu.memory_space<vmem>>, %arg18: memref<32x32xf32, #tpu.memory_space<vmem>>) attributes {dimension_semantics = [#tpu.dimension_semantics<arbitrary>], iteration_bounds = array<i64: 2>, scalar_prefetch = 0 : i64, scratch_operands = 1 : i64, tpu.core_type = #tpu.core_type<tc>, window_params = [{pipeline_mode = #tpu.pipeline_mode<synchronous>, transform_indices = @transform_0, window_bounds = array<i64: 32, 32>}, {pipeline_mode = #tpu.pipeline_mode<synchronous>, transform_indices = @transform_1, window_bounds = array<i64: 32, 32>}, {pipeline_mode = #tpu.pipeline_mode<synchronous>, transform_indices = @transform_2, window_bounds = array<i64: 1, 32>}, {pipeline_mode = #tpu.pipeline_mode<synchronous>, transform_indices = @transform_3, window_bounds = array<i64: 1, 32>}, {transform_indices = @transform_4, window_bounds = array<i64: 1, 1, 32>}, {transform_indices = @transform_5, window_bounds = array<i64: 1, 1, 32>}, {transform_indices = @transform_6, window_bounds = array<i64: 1, 32, 96>}, {transform_indices = @transform_7, window_bounds = array<i64: 1, 1, 96>}, {transform_indices = @transform_8, window_bounds = array<i64: 1, 32, 32>}, {transform_indices = @transform_9, window_bounds = array<i64: 1, 1, 32>}, {transform_indices = @transform_10, window_bounds = array<i64: 1, 1, 32>}, {transform_indices = @transform_11, window_bounds = array<i64: 1, 1, 32>}, {transform_indices = @transform_12, window_bounds = array<i64: 1, 32, 128>}, {transform_indices = @transform_13, window_bounds = array<i64: 1, 1, 128>}, {transform_indices = @transform_14, window_bounds = array<i64: 1, 128, 32>}, {transform_indices = @transform_15, window_bounds = array<i64: 1, 1, 32>}, {pipeline_mode = #tpu.pipeline_mode<synchronous>, transform_indices = @transform_16, window_bounds = array<i64: 32, 32>}]} {
    %c0_i32 = arith.constant 0 : i32
    %0 = arith.cmpi eq, %arg0, %c0_i32 : i32
    %1 = arith.extui %0 : i1 to i32
    %c0_i32_0 = arith.constant 0 : i32
    %2 = arith.cmpi ne, %1, %c0_i32_0 : i32
    scf.if %2 {
      %c0_78 = arith.constant 0 : index
      %c0_79 = arith.constant 0 : index
      %196 = vector.load %arg1[%c0_78, %c0_79] : memref<32x32xf32, #tpu.memory_space<vmem>>, vector<32x32xf32>
      %c0_80 = arith.constant 0 : index
      %c0_81 = arith.constant 0 : index
      %197 = vector.load %arg18[%c0_80, %c0_81] : memref<32x32xf32, #tpu.memory_space<vmem>>, vector<32x32xf32>
      tpu.vector_store %arg18[%c0_80, %c0_81], %196 {strides = array<i32>} : memref<32x32xf32, #tpu.memory_space<vmem>>, vector<32x32xf32>,
    } else {
    }
    %c0 = arith.constant 0 : index
    %c0_1 = arith.constant 0 : index
    %3 = vector.load %arg18[%c0, %c0_1] : memref<32x32xf32, #tpu.memory_space<vmem>>, vector<32x32xf32>
    %c0_2 = arith.constant 0 : index
    %c0_3 = arith.constant 0 : index
    %4 = vector.load %arg2[%c0_2, %c0_3] : memref<32x32xf32, #tpu.memory_space<vmem>>, vector<32x32xf32>
    %c0_4 = arith.constant 0 : index
    %c0_5 = arith.constant 0 : index
    %c0_6 = arith.constant 0 : index
    %5 = vector.load %arg5[%c0_4, %c0_5, %c0_6] : memref<1x1x32xf32, #tpu.memory_space<vmem>>, vector<1x1x32xf32>
    %6 = vector.shape_cast %5 : vector<1x1x32xf32> to vector<1x32xf32>
    %c0_7 = arith.constant 0 : index
    %c0_8 = arith.constant 0 : index
    %c0_9 = arith.constant 0 : index
    %7 = vector.load %arg6[%c0_7, %c0_8, %c0_9] : memref<1x1x32xf32, #tpu.memory_space<vmem>>, vector<1x1x32xf32>
    %8 = vector.shape_cast %7 : vector<1x1x32xf32> to vector<1x32xf32>
    %cst = arith.constant dense<0.000000e+00> : vector<32xf32>
    %9 = vector.multi_reduction <add>, %3, %cst [1] : vector<32x32xf32> to vector<32xf32>
    %10 = vector.shape_cast %9 : vector<32xf32> to vector<32x1xf32>
    %cst_10 = arith.constant 3.200000e+01 : f32
    %11 = vector.broadcast %cst_10 : f32 to vector<32x1xf32>
    %12 = arith.divf %10, %11 : vector<32x1xf32>
    %13 = vector.broadcast %12 : vector<32x1xf32> to vector<32x32xf32>
    %14 = arith.subf %3, %13 : vector<32x32xf32>
    %15 = arith.mulf %14, %14 : vector<32x32xf32>
    %cst_11 = arith.constant dense<0.000000e+00> : vector<32xf32>
    %16 = vector.multi_reduction <add>, %15, %cst_11 [1] : vector<32x32xf32> to vector<32xf32>
    %17 = vector.shape_cast %16 : vector<32xf32> to vector<32x1xf32>
    %cst_12 = arith.constant 3.200000e+01 : f32
    %18 = vector.broadcast %cst_12 : f32 to vector<32x1xf32>
    %19 = arith.divf %17, %18 : vector<32x1xf32>
    %20 = vector.broadcast %12 : vector<32x1xf32> to vector<32x32xf32>
    %21 = arith.subf %3, %20 : vector<32x32xf32>
    %cst_13 = arith.constant 9.99999974E-6 : f32
    %22 = vector.broadcast %cst_13 : f32 to vector<32x1xf32>
    %23 = arith.addf %19, %22 : vector<32x1xf32>
    %24 = math.rsqrt %23 : vector<32x1xf32>
    %25 = vector.broadcast %24 : vector<32x1xf32> to vector<32x32xf32>
    %26 = arith.mulf %21, %25 : vector<32x32xf32>
    %27 = vector.broadcast %6 : vector<1x32xf32> to vector<32x32xf32>
    %28 = arith.mulf %26, %27 : vector<32x32xf32>
    %29 = vector.broadcast %8 : vector<1x32xf32> to vector<32x32xf32>
    %30 = arith.addf %28, %29 : vector<32x32xf32>
    %c0_14 = arith.constant 0 : index
    %c0_15 = arith.constant 0 : index
    %c0_16 = arith.constant 0 : index
    %31 = vector.load %arg7[%c0_14, %c0_15, %c0_16] : memref<1x32x96xf32, #tpu.memory_space<vmem>>, vector<1x32x96xf32>
    %32 = vector.shape_cast %31 : vector<1x32x96xf32> to vector<32x96xf32>
    %33 = arith.truncf %30 : vector<32x32xf32> to vector<32x32xbf16>
    %34 = arith.truncf %32 : vector<32x96xf32> to vector<32x96xbf16>
    %cst_17 = arith.constant dense<0.000000e+00> : vector<32x96xf32>
    %35 = tpu.matmul %33, %34, %cst_17 {dimension_numbers = #tpu.dot_dimension_numbers<[1], [0], [0], [1], [0, 0, 1, 1], [], []>} : vector<32x32xbf16>, vector<32x96xbf16>, vector<32x96xf32> -> vector<32x96xf32>
    %c0_18 = arith.constant 0 : index
    %c0_19 = arith.constant 0 : index
    %c0_20 = arith.constant 0 : index
    %36 = vector.load %arg8[%c0_18, %c0_19, %c0_20] : memref<1x1x96xf32, #tpu.memory_space<vmem>>, vector<1x1x96xf32>
    %37 = vector.shape_cast %36 : vector<1x1x96xf32> to vector<1x96xf32>
    %38 = vector.broadcast %37 : vector<1x96xf32> to vector<32x96xf32>
    %39 = arith.addf %35, %38 : vector<32x96xf32>
    %40 = vector.extract_strided_slice %39 {offsets = [0, 0], sizes = [32, 8], strides = [1, 1]} : vector<32x96xf32> to vector<32x8xf32>
    %41 = vector.extract_strided_slice %39 {offsets = [0, 32], sizes = [32, 8], strides = [1, 1]} : vector<32x96xf32> to vector<32x8xf32>
    %42 = vector.extract_strided_slice %39 {offsets = [0, 64], sizes = [32, 8], strides = [1, 1]} : vector<32x96xf32> to vector<32x8xf32>
    %43 = arith.truncf %40 : vector<32x8xf32> to vector<32x8xbf16>
    %44 = arith.truncf %41 : vector<32x8xf32> to vector<32x8xbf16>
    %cst_21 = arith.constant dense<0.000000e+00> : vector<32x32xf32>
    %45 = tpu.matmul %43, %44, %cst_21 {dimension_numbers = #tpu.dot_dimension_numbers<[1], [1], [0], [0], [0, 0, 1, 0], [], []>} : vector<32x8xbf16>, vector<32x8xbf16>, vector<32x32xf32> -> vector<32x32xf32>
    %cst_22 = arith.constant 0.353553385 : f32
    %46 = vector.broadcast %cst_22 : f32 to vector<32x32xf32>
    %47 = arith.mulf %45, %46 : vector<32x32xf32>
    %48 = arith.addf %47, %4 : vector<32x32xf32>
    %cst_23 = arith.constant dense<0xFF800000> : vector<32xf32>
    %49 = vector.multi_reduction <maximumf>, %48, %cst_23 [1] : vector<32x32xf32> to vector<32xf32>
    %50 = vector.shape_cast %49 : vector<32xf32> to vector<32x1xf32>
    %51 = vector.broadcast %50 : vector<32x1xf32> to vector<32x32xf32>
    %52 = arith.subf %48, %51 : vector<32x32xf32>
    %53 = math.exp %52 : vector<32x32xf32>
    %cst_24 = arith.constant dense<0.000000e+00> : vector<32xf32>
    %54 = vector.multi_reduction <add>, %53, %cst_24 [1] : vector<32x32xf32> to vector<32xf32>
    %55 = vector.shape_cast %54 : vector<32xf32> to vector<32x1xf32>
    %56 = tpu.reciprocal %55 {approx = true} : vector<32x1xf32> -> vector<32x1xf32>
    %57 = vector.broadcast %56 : vector<32x1xf32> to vector<32x32xf32>
    %58 = arith.mulf %53, %57 : vector<32x32xf32>
    %59 = arith.truncf %58 : vector<32x32xf32> to vector<32x32xbf16>
    %60 = arith.truncf %42 : vector<32x8xf32> to vector<32x8xbf16>
    %cst_25 = arith.constant dense<0.000000e+00> : vector<32x8xf32>
    %61 = tpu.matmul %59, %60, %cst_25 {dimension_numbers = #tpu.dot_dimension_numbers<[1], [0], [0], [1], [0, 0, 1, 1], [], []>} : vector<32x32xbf16>, vector<32x8xbf16>, vector<32x8xf32> -> vector<32x8xf32>
    %62 = vector.extract_strided_slice %39 {offsets = [0, 8], sizes = [32, 8], strides = [1, 1]} : vector<32x96xf32> to vector<32x8xf32>
    %63 = vector.extract_strided_slice %39 {offsets = [0, 40], sizes = [32, 8], strides = [1, 1]} : vector<32x96xf32> to vector<32x8xf32>
    %64 = vector.extract_strided_slice %39 {offsets = [0, 72], sizes = [32, 8], strides = [1, 1]} : vector<32x96xf32> to vector<32x8xf32>
    %65 = arith.truncf %62 : vector<32x8xf32> to vector<32x8xbf16>
    %66 = arith.truncf %63 : vector<32x8xf32> to vector<32x8xbf16>
    %cst_26 = arith.constant dense<0.000000e+00> : vector<32x32xf32>
    %67 = tpu.matmul %65, %66, %cst_26 {dimension_numbers = #tpu.dot_dimension_numbers<[1], [1], [0], [0], [0, 0, 1, 0], [], []>} : vector<32x8xbf16>, vector<32x8xbf16>, vector<32x32xf32> -> vector<32x32xf32>
    %cst_27 = arith.constant 0.353553385 : f32
    %68 = vector.broadcast %cst_27 : f32 to vector<32x32xf32>
    %69 = arith.mulf %67, %68 : vector<32x32xf32>
    %70 = arith.addf %69, %4 : vector<32x32xf32>
    %cst_28 = arith.constant dense<0xFF800000> : vector<32xf32>
    %71 = vector.multi_reduction <maximumf>, %70, %cst_28 [1] : vector<32x32xf32> to vector<32xf32>
    %72 = vector.shape_cast %71 : vector<32xf32> to vector<32x1xf32>
    %73 = vector.broadcast %72 : vector<32x1xf32> to vector<32x32xf32>
    %74 = arith.subf %70, %73 : vector<32x32xf32>
    %75 = math.exp %74 : vector<32x32xf32>
    %cst_29 = arith.constant dense<0.000000e+00> : vector<32xf32>
    %76 = vector.multi_reduction <add>, %75, %cst_29 [1] : vector<32x32xf32> to vector<32xf32>
    %77 = vector.shape_cast %76 : vector<32xf32> to vector<32x1xf32>
    %78 = tpu.reciprocal %77 {approx = true} : vector<32x1xf32> -> vector<32x1xf32>
    %79 = vector.broadcast %78 : vector<32x1xf32> to vector<32x32xf32>
    %80 = arith.mulf %75, %79 : vector<32x32xf32>
    %81 = arith.truncf %80 : vector<32x32xf32> to vector<32x32xbf16>
    %82 = arith.truncf %64 : vector<32x8xf32> to vector<32x8xbf16>
    %cst_30 = arith.constant dense<0.000000e+00> : vector<32x8xf32>
    %83 = tpu.matmul %81, %82, %cst_30 {dimension_numbers = #tpu.dot_dimension_numbers<[1], [0], [0], [1], [0, 0, 1, 1], [], []>} : vector<32x32xbf16>, vector<32x8xbf16>, vector<32x8xf32> -> vector<32x8xf32>
    %84 = vector.extract_strided_slice %39 {offsets = [0, 16], sizes = [32, 8], strides = [1, 1]} : vector<32x96xf32> to vector<32x8xf32>
    %85 = vector.extract_strided_slice %39 {offsets = [0, 48], sizes = [32, 8], strides = [1, 1]} : vector<32x96xf32> to vector<32x8xf32>
    %86 = vector.extract_strided_slice %39 {offsets = [0, 80], sizes = [32, 8], strides = [1, 1]} : vector<32x96xf32> to vector<32x8xf32>
    %87 = arith.truncf %84 : vector<32x8xf32> to vector<32x8xbf16>
    %88 = arith.truncf %85 : vector<32x8xf32> to vector<32x8xbf16>
    %cst_31 = arith.constant dense<0.000000e+00> : vector<32x32xf32>
    %89 = tpu.matmul %87, %88, %cst_31 {dimension_numbers = #tpu.dot_dimension_numbers<[1], [1], [0], [0], [0, 0, 1, 0], [], []>} : vector<32x8xbf16>, vector<32x8xbf16>, vector<32x32xf32> -> vector<32x32xf32>
    %cst_32 = arith.constant 0.353553385 : f32
    %90 = vector.broadcast %cst_32 : f32 to vector<32x32xf32>
    %91 = arith.mulf %89, %90 : vector<32x32xf32>
    %92 = arith.addf %91, %4 : vector<32x32xf32>
    %cst_33 = arith.constant dense<0xFF800000> : vector<32xf32>
    %93 = vector.multi_reduction <maximumf>, %92, %cst_33 [1] : vector<32x32xf32> to vector<32xf32>
    %94 = vector.shape_cast %93 : vector<32xf32> to vector<32x1xf32>
    %95 = vector.broadcast %94 : vector<32x1xf32> to vector<32x32xf32>
    %96 = arith.subf %92, %95 : vector<32x32xf32>
    %97 = math.exp %96 : vector<32x32xf32>
    %cst_34 = arith.constant dense<0.000000e+00> : vector<32xf32>
    %98 = vector.multi_reduction <add>, %97, %cst_34 [1] : vector<32x32xf32> to vector<32xf32>
    %99 = vector.shape_cast %98 : vector<32xf32> to vector<32x1xf32>
    %100 = tpu.reciprocal %99 {approx = true} : vector<32x1xf32> -> vector<32x1xf32>
    %101 = vector.broadcast %100 : vector<32x1xf32> to vector<32x32xf32>
    %102 = arith.mulf %97, %101 : vector<32x32xf32>
    %103 = arith.truncf %102 : vector<32x32xf32> to vector<32x32xbf16>
    %104 = arith.truncf %86 : vector<32x8xf32> to vector<32x8xbf16>
    %cst_35 = arith.constant dense<0.000000e+00> : vector<32x8xf32>
    %105 = tpu.matmul %103, %104, %cst_35 {dimension_numbers = #tpu.dot_dimension_numbers<[1], [0], [0], [1], [0, 0, 1, 1], [], []>} : vector<32x32xbf16>, vector<32x8xbf16>, vector<32x8xf32> -> vector<32x8xf32>
    %106 = vector.extract_strided_slice %39 {offsets = [0, 24], sizes = [32, 8], strides = [1, 1]} : vector<32x96xf32> to vector<32x8xf32>
    %107 = vector.extract_strided_slice %39 {offsets = [0, 56], sizes = [32, 8], strides = [1, 1]} : vector<32x96xf32> to vector<32x8xf32>
    %108 = vector.extract_strided_slice %39 {offsets = [0, 88], sizes = [32, 8], strides = [1, 1]} : vector<32x96xf32> to vector<32x8xf32>
    %109 = arith.truncf %106 : vector<32x8xf32> to vector<32x8xbf16>
    %110 = arith.truncf %107 : vector<32x8xf32> to vector<32x8xbf16>
    %cst_36 = arith.constant dense<0.000000e+00> : vector<32x32xf32>
    %111 = tpu.matmul %109, %110, %cst_36 {dimension_numbers = #tpu.dot_dimension_numbers<[1], [1], [0], [0], [0, 0, 1, 0], [], []>} : vector<32x8xbf16>, vector<32x8xbf16>, vector<32x32xf32> -> vector<32x32xf32>
    %cst_37 = arith.constant 0.353553385 : f32
    %112 = vector.broadcast %cst_37 : f32 to vector<32x32xf32>
    %113 = arith.mulf %111, %112 : vector<32x32xf32>
    %114 = arith.addf %113, %4 : vector<32x32xf32>
    %cst_38 = arith.constant dense<0xFF800000> : vector<32xf32>
    %115 = vector.multi_reduction <maximumf>, %114, %cst_38 [1] : vector<32x32xf32> to vector<32xf32>
    %116 = vector.shape_cast %115 : vector<32xf32> to vector<32x1xf32>
    %117 = vector.broadcast %116 : vector<32x1xf32> to vector<32x32xf32>
    %118 = arith.subf %114, %117 : vector<32x32xf32>
    %119 = math.exp %118 : vector<32x32xf32>
    %cst_39 = arith.constant dense<0.000000e+00> : vector<32xf32>
    %120 = vector.multi_reduction <add>, %119, %cst_39 [1] : vector<32x32xf32> to vector<32xf32>
    %121 = vector.shape_cast %120 : vector<32xf32> to vector<32x1xf32>
    %122 = tpu.reciprocal %121 {approx = true} : vector<32x1xf32> -> vector<32x1xf32>
    %123 = vector.broadcast %122 : vector<32x1xf32> to vector<32x32xf32>
    %124 = arith.mulf %119, %123 : vector<32x32xf32>
    %125 = arith.truncf %124 : vector<32x32xf32> to vector<32x32xbf16>
    %126 = arith.truncf %108 : vector<32x8xf32> to vector<32x8xbf16>
    %cst_40 = arith.constant dense<0.000000e+00> : vector<32x8xf32>
    %127 = tpu.matmul %125, %126, %cst_40 {dimension_numbers = #tpu.dot_dimension_numbers<[1], [0], [0], [1], [0, 0, 1, 1], [], []>} : vector<32x32xbf16>, vector<32x8xbf16>, vector<32x8xf32> -> vector<32x8xf32>
    %128 = tpu.concatenate %61, %83, %105, %127 in 1 : vector<32x8xf32>, vector<32x8xf32>, vector<32x8xf32>, vector<32x8xf32> -> vector<32x32xf32>
    %c0_41 = arith.constant 0 : index
    %c0_42 = arith.constant 0 : index
    %c0_43 = arith.constant 0 : index
    %129 = vector.load %arg9[%c0_41, %c0_42, %c0_43] : memref<1x32x32xf32, #tpu.memory_space<vmem>>, vector<1x32x32xf32>
    %130 = vector.shape_cast %129 : vector<1x32x32xf32> to vector<32x32xf32>
    %131 = arith.truncf %128 : vector<32x32xf32> to vector<32x32xbf16>
    %132 = arith.truncf %130 : vector<32x32xf32> to vector<32x32xbf16>
    %cst_44 = arith.constant dense<0.000000e+00> : vector<32x32xf32>
    %133 = tpu.matmul %131, %132, %cst_44 {dimension_numbers = #tpu.dot_dimension_numbers<[1], [0], [0], [1], [0, 0, 1, 1], [], []>} : vector<32x32xbf16>, vector<32x32xbf16>, vector<32x32xf32> -> vector<32x32xf32>
    %134 = arith.addf %3, %133 : vector<32x32xf32>
    %c0_45 = arith.constant 0 : index
    %c0_46 = arith.constant 0 : index
    %c0_47 = arith.constant 0 : index
    %135 = vector.load %arg10[%c0_45, %c0_46, %c0_47] : memref<1x1x32xf32, #tpu.memory_space<vmem>>, vector<1x1x32xf32>
    %136 = vector.shape_cast %135 : vector<1x1x32xf32> to vector<1x32xf32>
    %137 = vector.broadcast %136 : vector<1x32xf32> to vector<32x32xf32>
    %138 = arith.addf %134, %137 : vector<32x32xf32>
    %c0_48 = arith.constant 0 : index
    %c0_49 = arith.constant 0 : index
    %c0_50 = arith.constant 0 : index
    %139 = vector.load %arg11[%c0_48, %c0_49, %c0_50] : memref<1x1x32xf32, #tpu.memory_space<vmem>>, vector<1x1x32xf32>
    %140 = vector.shape_cast %139 : vector<1x1x32xf32> to vector<1x32xf32>
    %c0_51 = arith.constant 0 : index
    %c0_52 = arith.constant 0 : index
    %c0_53 = arith.constant 0 : index
    %141 = vector.load %arg12[%c0_51, %c0_52, %c0_53] : memref<1x1x32xf32, #tpu.memory_space<vmem>>, vector<1x1x32xf32>
    %142 = vector.shape_cast %141 : vector<1x1x32xf32> to vector<1x32xf32>
    %cst_54 = arith.constant dense<0.000000e+00> : vector<32xf32>
    %143 = vector.multi_reduction <add>, %138, %cst_54 [1] : vector<32x32xf32> to vector<32xf32>
    %144 = vector.shape_cast %143 : vector<32xf32> to vector<32x1xf32>
    %cst_55 = arith.constant 3.200000e+01 : f32
    %145 = vector.broadcast %cst_55 : f32 to vector<32x1xf32>
    %146 = arith.divf %144, %145 : vector<32x1xf32>
    %147 = vector.broadcast %146 : vector<32x1xf32> to vector<32x32xf32>
    %148 = arith.subf %138, %147 : vector<32x32xf32>
    %149 = arith.mulf %148, %148 : vector<32x32xf32>
    %cst_56 = arith.constant dense<0.000000e+00> : vector<32xf32>
    %150 = vector.multi_reduction <add>, %149, %cst_56 [1] : vector<32x32xf32> to vector<32xf32>
    %151 = vector.shape_cast %150 : vector<32xf32> to vector<32x1xf32>
    %cst_57 = arith.constant 3.200000e+01 : f32
    %152 = vector.broadcast %cst_57 : f32 to vector<32x1xf32>
    %153 = arith.divf %151, %152 : vector<32x1xf32>
    %154 = vector.broadcast %146 : vector<32x1xf32> to vector<32x32xf32>
    %155 = arith.subf %138, %154 : vector<32x32xf32>
    %cst_58 = arith.constant 9.99999974E-6 : f32
    %156 = vector.broadcast %cst_58 : f32 to vector<32x1xf32>
    %157 = arith.addf %153, %156 : vector<32x1xf32>
    %158 = math.rsqrt %157 : vector<32x1xf32>
    %159 = vector.broadcast %158 : vector<32x1xf32> to vector<32x32xf32>
    %160 = arith.mulf %155, %159 : vector<32x32xf32>
    %161 = vector.broadcast %140 : vector<1x32xf32> to vector<32x32xf32>
    %162 = arith.mulf %160, %161 : vector<32x32xf32>
    %163 = vector.broadcast %142 : vector<1x32xf32> to vector<32x32xf32>
    %164 = arith.addf %162, %163 : vector<32x32xf32>
    %c0_59 = arith.constant 0 : index
    %c0_60 = arith.constant 0 : index
    %c0_61 = arith.constant 0 : index
    %165 = vector.load %arg13[%c0_59, %c0_60, %c0_61] : memref<1x32x128xf32, #tpu.memory_space<vmem>>, vector<1x32x128xf32>
    %166 = vector.shape_cast %165 : vector<1x32x128xf32> to vector<32x128xf32>
    %167 = arith.truncf %164 : vector<32x32xf32> to vector<32x32xbf16>
    %168 = arith.truncf %166 : vector<32x128xf32> to vector<32x128xbf16>
    %cst_62 = arith.constant dense<0.000000e+00> : vector<32x128xf32>
    %169 = tpu.matmul %167, %168, %cst_62 {dimension_numbers = #tpu.dot_dimension_numbers<[1], [0], [0], [1], [0, 0, 1, 1], [], []>} : vector<32x32xbf16>, vector<32x128xbf16>, vector<32x128xf32> -> vector<32x128xf32>
    %c0_63 = arith.constant 0 : index
    %c0_64 = arith.constant 0 : index
    %c0_65 = arith.constant 0 : index
    %170 = vector.load %arg14[%c0_63, %c0_64, %c0_65] : memref<1x1x128xf32, #tpu.memory_space<vmem>>, vector<1x1x128xf32>
    %171 = vector.shape_cast %170 : vector<1x1x128xf32> to vector<1x128xf32>
    %172 = vector.broadcast %171 : vector<1x128xf32> to vector<32x128xf32>
    %173 = arith.addf %169, %172 : vector<32x128xf32>
    %cst_66 = arith.constant 1.702000e+00 : f32
    %174 = vector.broadcast %cst_66 : f32 to vector<32x128xf32>
    %175 = arith.mulf %174, %173 : vector<32x128xf32>
    %176 = arith.negf %175 : vector<32x128xf32>
    %177 = math.exp %176 : vector<32x128xf32>
    %cst_67 = arith.constant 1.000000e+00 : f32
    %178 = vector.broadcast %cst_67 : f32 to vector<32x128xf32>
    %179 = arith.addf %178, %177 : vector<32x128xf32>
    %180 = arith.divf %178, %179 : vector<32x128xf32>
    %181 = arith.mulf %173, %180 : vector<32x128xf32>
    %c0_68 = arith.constant 0 : index
    %c0_69 = arith.constant 0 : index
    %c0_70 = arith.constant 0 : index
    %182 = vector.load %arg15[%c0_68, %c0_69, %c0_70] : memref<1x128x32xf32, #tpu.memory_space<vmem>>, vector<1x128x32xf32>
    %183 = vector.shape_cast %182 : vector<1x128x32xf32> to vector<128x32xf32>
    %184 = arith.truncf %181 : vector<32x128xf32> to vector<32x128xbf16>
    %185 = arith.truncf %183 : vector<128x32xf32> to vector<128x32xbf16>
    %cst_71 = arith.constant dense<0.000000e+00> : vector<32x32xf32>
    %186 = tpu.matmul %184, %185, %cst_71 {dimension_numbers = #tpu.dot_dimension_numbers<[1], [0], [0], [1], [0, 0, 1, 1], [], []>} : vector<32x128xbf16>, vector<128x32xbf16>, vector<32x32xf32> -> vector<32x32xf32>
    %187 = arith.addf %138, %186 : vector<32x32xf32>
    %c0_72 = arith.constant 0 : index
    %c0_73 = arith.constant 0 : index
    %c0_74 = arith.constant 0 : index
    %188 = vector.load %arg16[%c0_72, %c0_73, %c0_74] : memref<1x1x32xf32, #tpu.memory_space<vmem>>, vector<1x1x32xf32>
    %189 = vector.shape_cast %188 : vector<1x1x32xf32> to vector<1x32xf32>
    %190 = vector.broadcast %189 : vector<1x32xf32> to vector<32x32xf32>
    %191 = arith.addf %187, %190 : vector<32x32xf32>
    %c0_75 = arith.constant 0 : index
    %c0_76 = arith.constant 0 : index
    %192 = vector.load %arg18[%c0_75, %c0_76] : memref<32x32xf32, #tpu.memory_space<vmem>>, vector<32x32xf32>
    tpu.vector_store %arg18[%c0_75, %c0_76], %191 {strides = array<i32>} : memref<32x32xf32, #tpu.memory_space<vmem>>, vector<32x32xf32>,
    %c1_i32 = arith.constant 1 : i32
    %193 = arith.cmpi eq, %arg0, %c1_i32 : i32
    %194 = arith.extui %193 : i1 to i32
    %c0_i32_77 = arith.constant 0 : i32
    %195 = arith.cmpi ne, %194, %c0_i32_77 : i32
    scf.if %195 {
      %c0_78 = arith.constant 0 : index
      %c0_79 = arith.constant 0 : index
      %196 = vector.load %arg17[%c0_78, %c0_79] : memref<32x32xf32, #tpu.memory_space<vmem>>, vector<32x32xf32>
      tpu.vector_store %arg17[%c0_78, %c0_79], %191 {strides = array<i32>} : memref<32x32xf32, #tpu.memory_space<vmem>>, vector<32x32xf32>,
    } else {
    }
    return
  }
  func.func @transform_0(%arg0: i32) -> (i32, i32) {
    %c0_i32 = arith.constant 0 : i32
    %c0_i32_0 = arith.constant 0 : i32
    %c0_i32_1 = arith.constant 0 : i32
    return %c0_i32, %c0_i32_0 : i32, i32
  }
  func.func @transform_1(%arg0: i32) -> (i32, i32) {
    %c0_i32 = arith.constant 0 : i32
    %c0_i32_0 = arith.constant 0 : i32
    %c0_i32_1 = arith.constant 0 : i32
    return %c0_i32, %c0_i32_0 : i32, i32
  }
  func.func @transform_2(%arg0: i32) -> (i32, i32) {
    %c0_i32 = arith.constant 0 : i32
    %c0_i32_0 = arith.constant 0 : i32
    %c0_i32_1 = arith.constant 0 : i32
    return %c0_i32, %c0_i32_0 : i32, i32
  }
  func.func @transform_3(%arg0: i32) -> (i32, i32) {
    %c0_i32 = arith.constant 0 : i32
    %c0_i32_0 = arith.constant 0 : i32
    %c0_i32_1 = arith.constant 0 : i32
    return %c0_i32, %c0_i32_0 : i32, i32
  }
  func.func @transform_4(%arg0: i32) -> (i32, i32, i32) {
    %c0_i32 = arith.constant 0 : i32
    %c0_i32_0 = arith.constant 0 : i32
    %c0_i32_1 = arith.constant 0 : i32
    return %arg0, %c0_i32, %c0_i32_0 : i32, i32, i32
  }
  func.func @transform_5(%arg0: i32) -> (i32, i32, i32) {
    %c0_i32 = arith.constant 0 : i32
    %c0_i32_0 = arith.constant 0 : i32
    %c0_i32_1 = arith.constant 0 : i32
    return %arg0, %c0_i32, %c0_i32_0 : i32, i32, i32
  }
  func.func @transform_6(%arg0: i32) -> (i32, i32, i32) {
    %c0_i32 = arith.constant 0 : i32
    %c0_i32_0 = arith.constant 0 : i32
    %c0_i32_1 = arith.constant 0 : i32
    return %arg0, %c0_i32, %c0_i32_0 : i32, i32, i32
  }
  func.func @transform_7(%arg0: i32) -> (i32, i32, i32) {
    %c0_i32 = arith.constant 0 : i32
    %c0_i32_0 = arith.constant 0 : i32
    %c0_i32_1 = arith.constant 0 : i32
    return %arg0, %c0_i32, %c0_i32_0 : i32, i32, i32
  }
  func.func @transform_8(%arg0: i32) -> (i32, i32, i32) {
    %c0_i32 = arith.constant 0 : i32
    %c0_i32_0 = arith.constant 0 : i32
    %c0_i32_1 = arith.constant 0 : i32
    return %arg0, %c0_i32, %c0_i32_0 : i32, i32, i32
  }
  func.func @transform_9(%arg0: i32) -> (i32, i32, i32) {
    %c0_i32 = arith.constant 0 : i32
    %c0_i32_0 = arith.constant 0 : i32
    %c0_i32_1 = arith.constant 0 : i32
    return %arg0, %c0_i32, %c0_i32_0 : i32, i32, i32
  }
  func.func @transform_10(%arg0: i32) -> (i32, i32, i32) {
    %c0_i32 = arith.constant 0 : i32
    %c0_i32_0 = arith.constant 0 : i32
    %c0_i32_1 = arith.constant 0 : i32
    return %arg0, %c0_i32, %c0_i32_0 : i32, i32, i32
  }
  func.func @transform_11(%arg0: i32) -> (i32, i32, i32) {
    %c0_i32 = arith.constant 0 : i32
    %c0_i32_0 = arith.constant 0 : i32
    %c0_i32_1 = arith.constant 0 : i32
    return %arg0, %c0_i32, %c0_i32_0 : i32, i32, i32
  }
  func.func @transform_12(%arg0: i32) -> (i32, i32, i32) {
    %c0_i32 = arith.constant 0 : i32
    %c0_i32_0 = arith.constant 0 : i32
    %c0_i32_1 = arith.constant 0 : i32
    return %arg0, %c0_i32, %c0_i32_0 : i32, i32, i32
  }
  func.func @transform_13(%arg0: i32) -> (i32, i32, i32) {
    %c0_i32 = arith.constant 0 : i32
    %c0_i32_0 = arith.constant 0 : i32
    %c0_i32_1 = arith.constant 0 : i32
    return %arg0, %c0_i32, %c0_i32_0 : i32, i32, i32
  }
  func.func @transform_14(%arg0: i32) -> (i32, i32, i32) {
    %c0_i32 = arith.constant 0 : i32
    %c0_i32_0 = arith.constant 0 : i32
    %c0_i32_1 = arith.constant 0 : i32
    return %arg0, %c0_i32, %c0_i32_0 : i32, i32, i32
  }
  func.func @transform_15(%arg0: i32) -> (i32, i32, i32) {
    %c0_i32 = arith.constant 0 : i32
    %c0_i32_0 = arith.constant 0 : i32
    %c0_i32_1 = arith.constant 0 : i32
    return %arg0, %c0_i32, %c0_i32_0 : i32, i32, i32
  }
  func.func @transform_16(%arg0: i32) -> (i32, i32) {
    %c0_i32 = arith.constant 0 : i32
    %c0_i32_0 = arith.constant 0 : i32
    %c0_i32_1 = arith.constant 0 : i32
    return %c0_i32, %c0_i32_0 : i32, i32
  }
}

module attributes {stable_mosaic.version = 11 : i64} {
  func.func @_clip_head_kernel(%arg0: i32, %arg1: memref<2x64xf32, #tpu.memory_space<vmem>>, %arg2: memref<4x32xf32, #tpu.memory_space<vmem>>, %arg3: memref<1x64xf32, #tpu.memory_space<vmem>>, %arg4: memref<1x64xf32, #tpu.memory_space<vmem>>, %arg5: memref<1x32xf32, #tpu.memory_space<vmem>>, %arg6: memref<1x32xf32, #tpu.memory_space<vmem>>, %arg7: memref<64x32xf32, #tpu.memory_space<vmem>>, %arg8: memref<32x32xf32, #tpu.memory_space<vmem>>, %arg9: memref<1x1xf32, #tpu.memory_space<vmem>>, %arg10: memref<2x32xf32, #tpu.memory_space<vmem>>, %arg11: memref<4x32xf32, #tpu.memory_space<vmem>>, %arg12: memref<2x4xf32, #tpu.memory_space<vmem>>) attributes {dimension_semantics = [#tpu.dimension_semantics<arbitrary>], iteration_bounds = array<i64: 1>, scalar_prefetch = 0 : i64, scratch_operands = 0 : i64, tpu.core_type = #tpu.core_type<tc>, window_params = [{pipeline_mode = #tpu.pipeline_mode<synchronous>, transform_indices = @transform_0, window_bounds = array<i64: 2, 64>}, {pipeline_mode = #tpu.pipeline_mode<synchronous>, transform_indices = @transform_1, window_bounds = array<i64: 4, 32>}, {pipeline_mode = #tpu.pipeline_mode<synchronous>, transform_indices = @transform_2, window_bounds = array<i64: 1, 64>}, {pipeline_mode = #tpu.pipeline_mode<synchronous>, transform_indices = @transform_3, window_bounds = array<i64: 1, 64>}, {pipeline_mode = #tpu.pipeline_mode<synchronous>, transform_indices = @transform_4, window_bounds = array<i64: 1, 32>}, {pipeline_mode = #tpu.pipeline_mode<synchronous>, transform_indices = @transform_5, window_bounds = array<i64: 1, 32>}, {pipeline_mode = #tpu.pipeline_mode<synchronous>, transform_indices = @transform_6, window_bounds = array<i64: 64, 32>}, {pipeline_mode = #tpu.pipeline_mode<synchronous>, transform_indices = @transform_7, window_bounds = array<i64: 32, 32>}, {pipeline_mode = #tpu.pipeline_mode<synchronous>, transform_indices = @transform_8, window_bounds = array<i64: 1, 1>}, {pipeline_mode = #tpu.pipeline_mode<synchronous>, transform_indices = @transform_9, window_bounds = array<i64: 2, 32>}, {pipeline_mode = #tpu.pipeline_mode<synchronous>, transform_indices = @transform_10, window_bounds = array<i64: 4, 32>}, {pipeline_mode = #tpu.pipeline_mode<synchronous>, transform_indices = @transform_11, window_bounds = array<i64: 2, 4>}]} {
    %c0 = arith.constant 0 : index
    %c0_0 = arith.constant 0 : index
    %0 = vector.load %arg1[%c0, %c0_0] : memref<2x64xf32, #tpu.memory_space<vmem>>, vector<2x64xf32>
    %c0_1 = arith.constant 0 : index
    %c0_2 = arith.constant 0 : index
    %1 = vector.load %arg3[%c0_1, %c0_2] : memref<1x64xf32, #tpu.memory_space<vmem>>, vector<1x64xf32>
    %c0_3 = arith.constant 0 : index
    %c0_4 = arith.constant 0 : index
    %2 = vector.load %arg4[%c0_3, %c0_4] : memref<1x64xf32, #tpu.memory_space<vmem>>, vector<1x64xf32>
    %cst = arith.constant dense<0.000000e+00> : vector<2xf32>
    %3 = vector.multi_reduction <add>, %0, %cst [1] : vector<2x64xf32> to vector<2xf32>
    %4 = vector.shape_cast %3 : vector<2xf32> to vector<2x1xf32>
    %cst_5 = arith.constant 6.400000e+01 : f32
    %5 = vector.broadcast %cst_5 : f32 to vector<2x1xf32>
    %6 = arith.divf %4, %5 : vector<2x1xf32>
    %7 = vector.broadcast %6 : vector<2x1xf32> to vector<2x64xf32>
    %8 = arith.subf %0, %7 : vector<2x64xf32>
    %9 = arith.mulf %8, %8 : vector<2x64xf32>
    %cst_6 = arith.constant dense<0.000000e+00> : vector<2xf32>
    %10 = vector.multi_reduction <add>, %9, %cst_6 [1] : vector<2x64xf32> to vector<2xf32>
    %11 = vector.shape_cast %10 : vector<2xf32> to vector<2x1xf32>
    %cst_7 = arith.constant 6.400000e+01 : f32
    %12 = vector.broadcast %cst_7 : f32 to vector<2x1xf32>
    %13 = arith.divf %11, %12 : vector<2x1xf32>
    %14 = vector.broadcast %6 : vector<2x1xf32> to vector<2x64xf32>
    %15 = arith.subf %0, %14 : vector<2x64xf32>
    %cst_8 = arith.constant 9.99999974E-6 : f32
    %16 = vector.broadcast %cst_8 : f32 to vector<2x1xf32>
    %17 = arith.addf %13, %16 : vector<2x1xf32>
    %18 = math.rsqrt %17 : vector<2x1xf32>
    %19 = vector.broadcast %18 : vector<2x1xf32> to vector<2x64xf32>
    %20 = arith.mulf %15, %19 : vector<2x64xf32>
    %21 = vector.broadcast %1 : vector<1x64xf32> to vector<2x64xf32>
    %22 = arith.mulf %20, %21 : vector<2x64xf32>
    %23 = vector.broadcast %2 : vector<1x64xf32> to vector<2x64xf32>
    %24 = arith.addf %22, %23 : vector<2x64xf32>
    %c0_9 = arith.constant 0 : index
    %c0_10 = arith.constant 0 : index
    %25 = vector.load %arg7[%c0_9, %c0_10] : memref<64x32xf32, #tpu.memory_space<vmem>>, vector<64x32xf32>
    %26 = arith.truncf %24 : vector<2x64xf32> to vector<2x64xbf16>
    %27 = arith.truncf %25 : vector<64x32xf32> to vector<64x32xbf16>
    %cst_11 = arith.constant dense<0.000000e+00> : vector<2x32xf32>
    %28 = tpu.matmul %26, %27, %cst_11 {dimension_numbers = #tpu.dot_dimension_numbers<[1], [0], [0], [1], [0, 0, 1, 1], [], []>} : vector<2x64xbf16>, vector<64x32xbf16>, vector<2x32xf32> -> vector<2x32xf32>
    %c0_12 = arith.constant 0 : index
    %c0_13 = arith.constant 0 : index
    %29 = vector.load %arg2[%c0_12, %c0_13] : memref<4x32xf32, #tpu.memory_space<vmem>>, vector<4x32xf32>
    %c0_14 = arith.constant 0 : index
    %c0_15 = arith.constant 0 : index
    %30 = vector.load %arg5[%c0_14, %c0_15] : memref<1x32xf32, #tpu.memory_space<vmem>>, vector<1x32xf32>
    %c0_16 = arith.constant 0 : index
    %c0_17 = arith.constant 0 : index
    %31 = vector.load %arg6[%c0_16, %c0_17] : memref<1x32xf32, #tpu.memory_space<vmem>>, vector<1x32xf32>
    %cst_18 = arith.constant dense<0.000000e+00> : vector<4xf32>
    %32 = vector.multi_reduction <add>, %29, %cst_18 [1] : vector<4x32xf32> to vector<4xf32>
    %33 = vector.shape_cast %32 : vector<4xf32> to vector<4x1xf32>
    %cst_19 = arith.constant 3.200000e+01 : f32
    %34 = vector.broadcast %cst_19 : f32 to vector<4x1xf32>
    %35 = arith.divf %33, %34 : vector<4x1xf32>
    %36 = vector.broadcast %35 : vector<4x1xf32> to vector<4x32xf32>
    %37 = arith.subf %29, %36 : vector<4x32xf32>
    %38 = arith.mulf %37, %37 : vector<4x32xf32>
    %cst_20 = arith.constant dense<0.000000e+00> : vector<4xf32>
    %39 = vector.multi_reduction <add>, %38, %cst_20 [1] : vector<4x32xf32> to vector<4xf32>
    %40 = vector.shape_cast %39 : vector<4xf32> to vector<4x1xf32>
    %cst_21 = arith.constant 3.200000e+01 : f32
    %41 = vector.broadcast %cst_21 : f32 to vector<4x1xf32>
    %42 = arith.divf %40, %41 : vector<4x1xf32>
    %43 = vector.broadcast %35 : vector<4x1xf32> to vector<4x32xf32>
    %44 = arith.subf %29, %43 : vector<4x32xf32>
    %cst_22 = arith.constant 9.99999974E-6 : f32
    %45 = vector.broadcast %cst_22 : f32 to vector<4x1xf32>
    %46 = arith.addf %42, %45 : vector<4x1xf32>
    %47 = math.rsqrt %46 : vector<4x1xf32>
    %48 = vector.broadcast %47 : vector<4x1xf32> to vector<4x32xf32>
    %49 = arith.mulf %44, %48 : vector<4x32xf32>
    %50 = vector.broadcast %30 : vector<1x32xf32> to vector<4x32xf32>
    %51 = arith.mulf %49, %50 : vector<4x32xf32>
    %52 = vector.broadcast %31 : vector<1x32xf32> to vector<4x32xf32>
    %53 = arith.addf %51, %52 : vector<4x32xf32>
    %c0_23 = arith.constant 0 : index
    %c0_24 = arith.constant 0 : index
    %54 = vector.load %arg8[%c0_23, %c0_24] : memref<32x32xf32, #tpu.memory_space<vmem>>, vector<32x32xf32>
    %55 = arith.truncf %53 : vector<4x32xf32> to vector<4x32xbf16>
    %56 = arith.truncf %54 : vector<32x32xf32> to vector<32x32xbf16>
    %cst_25 = arith.constant dense<0.000000e+00> : vector<4x32xf32>
    %57 = tpu.matmul %55, %56, %cst_25 {dimension_numbers = #tpu.dot_dimension_numbers<[1], [0], [0], [1], [0, 0, 1, 1], [], []>} : vector<4x32xbf16>, vector<32x32xbf16>, vector<4x32xf32> -> vector<4x32xf32>
    %58 = arith.mulf %28, %28 : vector<2x32xf32>
    %cst_26 = arith.constant dense<0.000000e+00> : vector<2xf32>
    %59 = vector.multi_reduction <add>, %58, %cst_26 [1] : vector<2x32xf32> to vector<2xf32>
    %60 = vector.shape_cast %59 : vector<2xf32> to vector<2x1xf32>
    %61 = math.rsqrt %60 : vector<2x1xf32>
    %62 = vector.broadcast %61 : vector<2x1xf32> to vector<2x32xf32>
    %63 = arith.mulf %28, %62 : vector<2x32xf32>
    %64 = arith.mulf %57, %57 : vector<4x32xf32>
    %cst_27 = arith.constant dense<0.000000e+00> : vector<4xf32>
    %65 = vector.multi_reduction <add>, %64, %cst_27 [1] : vector<4x32xf32> to vector<4xf32>
    %66 = vector.shape_cast %65 : vector<4xf32> to vector<4x1xf32>
    %67 = math.rsqrt %66 : vector<4x1xf32>
    %68 = vector.broadcast %67 : vector<4x1xf32> to vector<4x32xf32>
    %69 = arith.mulf %57, %68 : vector<4x32xf32>
    %c0_28 = arith.constant 0 : index
    %c0_29 = arith.constant 0 : index
    %70 = vector.load %arg9[%c0_28, %c0_29] : memref<1x1xf32, #tpu.memory_space<vmem>>, vector<1x1xf32>
    %71 = math.exp %70 : vector<1x1xf32>
    %cst_30 = arith.constant dense<0.000000e+00> : vector<2x4xf32>
    %72 = tpu.matmul %63, %69, %cst_30 {dimension_numbers = #tpu.dot_dimension_numbers<[1], [1], [0], [0], [0, 0, 1, 0], [], []>} : vector<2x32xf32>, vector<4x32xf32>, vector<2x4xf32> -> vector<2x4xf32>
    %73 = vector.broadcast %71 : vector<1x1xf32> to vector<2x4xf32>
    %74 = arith.mulf %73, %72 : vector<2x4xf32>
    %c0_31 = arith.constant 0 : index
    %c0_32 = arith.constant 0 : index
    %75 = vector.load %arg12[%c0_31, %c0_32] : memref<2x4xf32, #tpu.memory_space<vmem>>, vector<2x4xf32>
    tpu.vector_store %arg12[%c0_31, %c0_32], %74 {strides = array<i32>} : memref<2x4xf32, #tpu.memory_space<vmem>>, vector<2x4xf32>,
    %c0_33 = arith.constant 0 : index
    %c0_34 = arith.constant 0 : index
    %76 = vector.load %arg10[%c0_33, %c0_34] : memref<2x32xf32, #tpu.memory_space<vmem>>, vector<2x32xf32>
    tpu.vector_store %arg10[%c0_33, %c0_34], %63 {strides = array<i32>} : memref<2x32xf32, #tpu.memory_space<vmem>>, vector<2x32xf32>,
    %c0_35 = arith.constant 0 : index
    %c0_36 = arith.constant 0 : index
    %77 = vector.load %arg11[%c0_35, %c0_36] : memref<4x32xf32, #tpu.memory_space<vmem>>, vector<4x32xf32>
    tpu.vector_store %arg11[%c0_35, %c0_36], %69 {strides = array<i32>} : memref<4x32xf32, #tpu.memory_space<vmem>>, vector<4x32xf32>,
    return
  }
  func.func @transform_0(%arg0: i32) -> (i32, i32) {
    %c0_i32 = arith.constant 0 : i32
    %c0_i32_0 = arith.constant 0 : i32
    %c0_i32_1 = arith.constant 0 : i32
    return %c0_i32, %c0_i32_0 : i32, i32
  }
  func.func @transform_1(%arg0: i32) -> (i32, i32) {
    %c0_i32 = arith.constant 0 : i32
    %c0_i32_0 = arith.constant 0 : i32
    %c0_i32_1 = arith.constant 0 : i32
    return %c0_i32, %c0_i32_0 : i32, i32
  }
  func.func @transform_2(%arg0: i32) -> (i32, i32) {
    %c0_i32 = arith.constant 0 : i32
    %c0_i32_0 = arith.constant 0 : i32
    %c0_i32_1 = arith.constant 0 : i32
    return %c0_i32, %c0_i32_0 : i32, i32
  }
  func.func @transform_3(%arg0: i32) -> (i32, i32) {
    %c0_i32 = arith.constant 0 : i32
    %c0_i32_0 = arith.constant 0 : i32
    %c0_i32_1 = arith.constant 0 : i32
    return %c0_i32, %c0_i32_0 : i32, i32
  }
  func.func @transform_4(%arg0: i32) -> (i32, i32) {
    %c0_i32 = arith.constant 0 : i32
    %c0_i32_0 = arith.constant 0 : i32
    %c0_i32_1 = arith.constant 0 : i32
    return %c0_i32, %c0_i32_0 : i32, i32
  }
  func.func @transform_5(%arg0: i32) -> (i32, i32) {
    %c0_i32 = arith.constant 0 : i32
    %c0_i32_0 = arith.constant 0 : i32
    %c0_i32_1 = arith.constant 0 : i32
    return %c0_i32, %c0_i32_0 : i32, i32
  }
  func.func @transform_6(%arg0: i32) -> (i32, i32) {
    %c0_i32 = arith.constant 0 : i32
    %c0_i32_0 = arith.constant 0 : i32
    %c0_i32_1 = arith.constant 0 : i32
    return %c0_i32, %c0_i32_0 : i32, i32
  }
  func.func @transform_7(%arg0: i32) -> (i32, i32) {
    %c0_i32 = arith.constant 0 : i32
    %c0_i32_0 = arith.constant 0 : i32
    %c0_i32_1 = arith.constant 0 : i32
    return %c0_i32, %c0_i32_0 : i32, i32
  }
  func.func @transform_8(%arg0: i32) -> (i32, i32) {
    %c0_i32 = arith.constant 0 : i32
    %c0_i32_0 = arith.constant 0 : i32
    %c0_i32_1 = arith.constant 0 : i32
    return %c0_i32, %c0_i32_0 : i32, i32
  }
  func.func @transform_9(%arg0: i32) -> (i32, i32) {
    %c0_i32 = arith.constant 0 : i32
    %c0_i32_0 = arith.constant 0 : i32
    %c0_i32_1 = arith.constant 0 : i32
    return %c0_i32, %c0_i32_0 : i32, i32
  }
  func.func @transform_10(%arg0: i32) -> (i32, i32) {
    %c0_i32 = arith.constant 0 : i32
    %c0_i32_0 = arith.constant 0 : i32
    %c0_i32_1 = arith.constant 0 : i32
    return %c0_i32, %c0_i32_0 : i32, i32
  }
  func.func @transform_11(%arg0: i32) -> (i32, i32) {
    %c0_i32 = arith.constant 0 : i32
    %c0_i32_0 = arith.constant 0 : i32
    %c0_i32_1 = arith.constant 0 : i32
    return %c0_i32, %c0_i32_0 : i32, i32
  }
}

</mosaic_0001>

<llo_original>
// kernel: _lambda_.5
$region0: #{_lambda_.5}
  #allocation0 [shape = 'u32[]', space=smem, size = 0x4, offset = 0x4, fixed_abs, tag = 'smem constant byte address 0x4 - core index']
  #allocation1 [shape = 'u32[144,128]{1,0:T(1,128)}', space=vmem, size = 0x12000, scoped, tag = 'internal scratch']
  #allocation2 [shape = 'f32[8,64]{1,0:T(8,128)}', space=vmem, size = 0x1000, scoped, tag = 'scratch operand']
  %s0 = inlined_call_operand.vmem [shape: f32[8,192], index: 0, kind: input, shape index: {}]
  %s1 = inlined_call_operand.vmem [shape: f32[192,64], index: 1, kind: input, shape index: {}]
  %s2 = inlined_call_operand.vmem [shape: f32[8,64], index: 2, kind: output, shape index: {}]
  %s3 = sld [smem:[#allocation0]]
  $region26: #{_lambda_.5} parent=0
    _
  %s5 = ssub.s32 1, %s3
  %s6 = scalar_select 0, %s5, %s3
  // Predicated region
  $region2: #{_lambda_.5} parent=0 // pred_check
    _
  $region3: #{_lambda_.5} parent=0 // pred_check_branch
    %8 = sbr.rel (0) target = $region5
  $region4: #{_lambda_.5} parent=0 // pred_region
    _
  $region5: #{_lambda_.5} parent=0 // pred_fallthru
    _
  // Predicated region
  $region6: #{_lambda_.5} parent=0 // pred_check
    _
  $region7: #{_lambda_.5} parent=0 // pred_check_branch
    %10 = sbr.rel (0) target = $region9
  $region8: #{_lambda_.5} parent=0 // pred_region
    _
  $region9: #{_lambda_.5} parent=0 // pred_fallthru
    _
  %p12 = scmp.eq.s32.totalorder 0, 0
  // Predicated region
  $region10: #{_lambda_.5} parent=0 // pred_check
    %p13 = pneg %p12
  $region11: #{_lambda_.5} parent=0 // pred_check_branch
    %15 = sbr.rel (%p13) target = $region13
  $region12: #{_lambda_.5} parent=0 // pred_region
    %vm16 = vcmask 523264
    %17 = vst.msk [vmem:[#allocation2] sm:$0xff] %vm16, 0.0
  $region13: #{_lambda_.5} parent=0 // pred_fallthru
    _
  %v18 = vld [vmem:[#allocation2] sm:$0xff]
  %v19 = vld [vmem:[%s0] sm:$0xff]
  %v20 = vld [vmem:[%s0 + $0x8] sm:$0xff]
  %v21 = vpack.c.bf16 %v19, %v19
  %v22 = vpack.c.bf16 %v20, %v20
  %v23 = vld [vmem:[%s1] sm:$0xff]
  %v24 = vld [vmem:[%s1 + $0x8] sm:$0xff]
  %v25 = vld [vmem:[%s1 + $0x10] sm:$0xff]
  %v26 = vld [vmem:[%s1 + $0x18] sm:$0xff]
  %v27 = vld [vmem:[%s1 + $0x20] sm:$0xff]
  %v28 = vld [vmem:[%s1 + $0x28] sm:$0xff]
  %v29 = vld [vmem:[%s1 + $0x30] sm:$0xff]
  %v30 = vld [vmem:[%s1 + $0x38] sm:$0xff]
  %v31 = vld [vmem:[%s1 + $0x40] sm:$0xff]
  %v32 = vld [vmem:[%s1 + $0x48] sm:$0xff]
  %v33 = vld [vmem:[%s1 + $0x50] sm:$0xff]
  %v34 = vld [vmem:[%s1 + $0x58] sm:$0xff]
  %v35 = vld [vmem:[%s1 + $0x60] sm:$0xff]
  %v36 = vld [vmem:[%s1 + $0x68] sm:$0xff]
  %v37 = vld [vmem:[%s1 + $0x70] sm:$0xff]
  %v38 = vld [vmem:[%s1 + $0x78] sm:$0xff]
  %v39 = vld [vmem:[%s1 + $0x80] sm:$0xff]
  %v40 = vld [vmem:[%s1 + $0x88] sm:$0xff]
  %v41 = vld [vmem:[%s1 + $0x90] sm:$0xff]
  %v42 = vld [vmem:[%s1 + $0x98] sm:$0xff]
  %v43 = vld [vmem:[%s1 + $0xa0] sm:$0xff]
  %v44 = vld [vmem:[%s1 + $0xa8] sm:$0xff]
  %v45 = vld [vmem:[%s1 + $0xb0] sm:$0xff]
  %v46 = vld [vmem:[%s1 + $0xb8] sm:$0xff]
  %v47 = vpack.c.bf16 %v24, %v23
  %v48 = vpack.c.bf16 %v26, %v25
  %v49 = vpack.c.bf16 %v28, %v27
  %v50 = vpack.c.bf16 %v30, %v29
  %v51 = vpack.c.bf16 %v32, %v31
  %v52 = vpack.c.bf16 %v34, %v33
  %v53 = vpack.c.bf16 %v36, %v35
  %v54 = vpack.c.bf16 %v38, %v37
  %v55 = vpack.c.bf16 %v40, %v39
  %v56 = vpack.c.bf16 %v42, %v41
  %v57 = vpack.c.bf16 %v44, %v43
  %v58 = vpack.c.bf16 %v46, %v45
  %vm59 = vcmask 523264
  %v61 = vsel %vm59, %v22, 0
  %63 = vmatprep.subr.bf16.mxu0 0
  %64 = vmatpush1.bf16.msra.mxu0 %v47
  %65 = vmatprep.subr.bf16.mxu0 0
  %66 = vmatpush1.bf16.msra.mxu0 %v48
  %67 = vmatprep.subr.bf16.mxu0 0
  %68 = vmatpush1.bf16.msra.mxu0 %v49
  %69 = vmatprep.subr.bf16.mxu0 0
  %70 = vmatpush1.bf16.msra.mxu0 %v50
  %71 = vmatprep.subr.bf16.mxu0 0
  %72 = vmatpush1.bf16.msra.mxu0 %v51
  %73 = vmatprep.subr.bf16.mxu0 0
  %74 = vmatpush1.bf16.msra.mxu0 %v52
  %75 = vmatprep.subr.bf16.mxu0 0
  %76 = vmatpush1.bf16.msra.mxu0 %v53
  %77 = vmatprep.subr.bf16.mxu0 0
  %78 = vmatpush1.bf16.msra.mxu0 %v54
  %79 = vmatprep.subr.bf16.mxu0 0
  %80 = vmatpush1.bf16.msra.mxu0 %v55
  %81 = vmatprep.subr.bf16.mxu0 0
  %82 = vmatpush1.bf16.msra.mxu0 %v56
  %83 = vmatprep.subr.bf16.mxu0 0
  %84 = vmatpush1.bf16.msra.mxu0 %v57
  %85 = vmatprep.subr.bf16.mxu0 0
  %86 = vmatpush1.bf16.msra.mxu0 %v58
  %87 = vmatprep.subr.bf16.mxu0 0
  %88 = vmatpush1.bf16.msra.mxu0 0
  %89 = vmatprep.subr.bf16.mxu0 0
  %90 = vmatpush1.bf16.msra.mxu0 0
  %91 = vmatprep.subr.bf16.mxu0 0
  %92 = vmatpush1.bf16.msra.mxu0 0
  %93 = vmatprep.subr.bf16.mxu0 0
  %94 = vmatpush1.bf16.msra.mxu0 0
  %95 = vmatprep.mubr.bf16.mxu0 %v61
  %96 = vmatmul.mubr.bf16.gmra.mrb[0].mxu0 %v21
  %v97 = vpop.f32.mrb[0].mxu0
  %v98 = vadd.f32 0.0, %v97
  %v99 = vpop.f32.mrb[0].mxu0
  %v100 = vpop.f32.mrb[0].mxu0
  %v101 = vpop.f32.mrb[0].mxu0
  %102 = vdwg.mxu0
  %v103 = vadd.f32 %v18, %v98
  %104 = vst.msk [vmem:[#allocation2] sm:$0xff] %vm59, %v103
  // Predicated region
  $region14: #{_lambda_.5} parent=0 // pred_check
    %p105 = pneg %p12
  $region15: #{_lambda_.5} parent=0 // pred_check_branch
    %107 = sbr.rel (%p105) target = $region17
  $region16: #{_lambda_.5} parent=0 // pred_region
    %v108 = vld [vmem:[#allocation2] sm:$0xff]
    %109 = vst.msk [vmem:[%s2] sm:$0xff] %vm59, %v108
  $region17: #{_lambda_.5} parent=0 // pred_fallthru
    _
  // Predicated region
  $region18: #{_lambda_.5} parent=0 // pred_check
    _
  $region19: #{_lambda_.5} parent=0 // pred_check_branch
    %111 = sbr.rel (0) target = $region21
  $region20: #{_lambda_.5} parent=0 // pred_region
    _
  $region21: #{_lambda_.5} parent=0 // pred_fallthru
    _
  // Predicated region
  $region22: #{_lambda_.5} parent=0 // pred_check
    _
  $region23: #{_lambda_.5} parent=0 // pred_check_branch
    %113 = sbr.rel (0) target = $region25
  $region24: #{_lambda_.5} parent=0 // pred_region
    _
  $region25: #{_lambda_.5} parent=0 // pred_fallthru
    _

// kernel: _lambda_.6
$region0: #{_lambda_.6}
  #allocation0 [shape = 'u32[]', space=smem, size = 0x4, offset = 0x4, fixed_abs, tag = 'smem constant byte address 0x4 - core index']
  #allocation1 [shape = 'u32[144,128]{1,0:T(1,128)}', space=vmem, size = 0x12000, scoped, tag = 'internal scratch']
  #allocation2 [shape = 'f32[16,64]{1,0:T(8,128)}', space=vmem, size = 0x2000, scoped, tag = 'scratch operand']
  %s0 = inlined_call_operand.vmem [shape: f32[16,64], index: 0, kind: input, shape index: {}]
  %s1 = inlined_call_operand.vmem [shape: f32[16,16], index: 1, kind: input, shape index: {}]
  %s2 = inlined_call_operand.vmem [shape: f32[1,64], index: 2, kind: input, shape index: {}]
  %s3 = inlined_call_operand.vmem [shape: f32[1,64], index: 3, kind: input, shape index: {}]
  %s4 = inlined_call_operand.vmem [shape: f32[2,1,64], index: 4, kind: input, shape index: {}, may-alias: {4,10}]
  %s5 = inlined_call_operand.vmem [shape: f32[2,1,64], index: 5, kind: input, shape index: {}, may-alias: {5,9,11,15}]
  %s6 = inlined_call_operand.vmem [shape: f32[2,64,192], index: 6, kind: input, shape index: {}]
  %s7 = inlined_call_operand.vmem [shape: f32[2,1,192], index: 7, kind: input, shape index: {}]
  %s8 = inlined_call_operand.hbm [shape: f32[2,64,64], index: 8, kind: input, shape index: {}]
  %s9 = inlined_call_operand.vmem [shape: f32[2,1,64], index: 9, kind: input, shape index: {}, may-alias: {5,9,11,15}]
  %s10 = inlined_call_operand.vmem [shape: f32[2,1,64], index: 10, kind: input, shape index: {}, may-alias: {4,10}]
  %s11 = inlined_call_operand.vmem [shape: f32[2,1,64], index: 11, kind: input, shape index: {}, may-alias: {5,9,11,15}]
  %s12 = inlined_call_operand.vmem [shape: f32[2,64,256], index: 12, kind: input, shape index: {}]
  %s13 = inlined_call_operand.vmem [shape: f32[2,1,256], index: 13, kind: input, shape index: {}]
  %s14 = inlined_call_operand.vmem [shape: f32[2,256,64], index: 14, kind: input, shape index: {}]
  %s15 = inlined_call_operand.vmem [shape: f32[2,1,64], index: 15, kind: input, shape index: {}, may-alias: {5,9,11,15}]
  %s16 = inlined_call_operand.vmem [shape: f32[16,64], index: 16, kind: output, shape index: {}]
  %s17 = sld [smem:[#allocation0]]
  $region109: #{_lambda_.6} parent=0
    _
  %s19 = ssub.s32 1, %s17
  %s20 = scalar_select 0, %s19, %s17
  $region1: #{_lambda_.6} parent=0
    #allocation3 [shape = 'u8[65536]{0}', space=vmem, size = 0x10000, scoped, tag = 'input window, operand 8']
    #allocation4 [shape = 's32[2]{0}', space=sflag, size = 0x8, scoped, tag = 'scoped memory for _lambda_.6']
    %21 = vsyncpa [#allocation4], 0
    %s22 = scalar_lea.sflag [#allocation4], 1
    %23 = vsyncpa %s22, 0
    loop: start=0, step=1, limit=4
    $region2: #{_lambda_.6} parent=1 // loop_pre_header
      _
    $region3: #{_lambda_.6} parent=1 // loop_header
      %s25 = sphi 0, %s29
      %p26 = scmp.ge.s32.totalorder %s25, 4
      %s33 = sphi 0, %s33
      %s35 = sphi 0, %s33
      %s36 = sphi 0, %s35
      %s50 = sphi 0, %s36
      %s54 = sphi 0, %s54
      %s56 = sphi 0, %s54
      %s57 = sphi 0, %s56
      %s71 = sphi 0, %s57
      %s75 = sphi 0, %s75
      %s77 = sphi 0, %s75
      %s78 = sphi 0, %s77
      %s92 = sphi 0, %s78
      %s96 = sphi 0, %s96
      %s98 = sphi 0, %s96
      %s99 = sphi 0, %s98
      %s113 = sphi 0, %s99
      %s119 = sphi 0, %s121
      %s122 = sphi 0, %s119
      %s123 = sphi 0, %s122
      %s139 = sphi 0, %s123
      %s145 = sphi 0, %s147
      %s148 = sphi 0, %s145
      %s149 = sphi 0, %s148
      %s165 = sphi 0, %s149
      %s171 = sphi 0, %s173
      %s174 = sphi 0, %s171
      %s175 = sphi 0, %s174
      %s191 = sphi 0, %s175
      %s197 = sphi 0, %s199
      %s200 = sphi 0, %s197
      %s201 = sphi 0, %s200
      %s217 = sphi 0, %s201
      %s223 = sphi 0, %s225
      %s226 = sphi 0, %s223
      %s227 = sphi 0, %s226
      %s243 = sphi 0, %s227
      %s249 = sphi 0, %s251
      %s252 = sphi 0, %s249
      %s253 = sphi 0, %s252
      %s269 = sphi 0, %s253
      %s275 = sphi 0, %s277
      %s278 = sphi 0, %s275
      %s279 = sphi 0, %s278
      %s295 = sphi 0, %s279
      %s301 = sphi 0, %s303
      %s304 = sphi 0, %s301
      %s305 = sphi 0, %s304
      %s321 = sphi 0, %s305
      %s327 = sphi 0, %s329
      %s330 = sphi 0, %s327
      %s331 = sphi 0, %s330
      %s347 = sphi 0, %s331
      %s353 = sphi 0, %s355
      %s356 = sphi 0, %s353
      %s357 = sphi 0, %s356
      %s373 = sphi 0, %s357
      %s379 = sphi 0, %s381
      %s382 = sphi 0, %s379
      %s383 = sphi 0, %s382
      %s399 = sphi 0, %s383
      %s405 = sphi 0, %s407
      %s408 = sphi 0, %s405
      %s409 = sphi 0, %s408
      %s425 = sphi 0, %s409
      %s429 = sphi 0, %s429
      %s431 = sphi 0, %s429
      %s432 = sphi 0, %s431
      %s446 = sphi 0, %s432
    $region4: #{_lambda_.6} parent=1 // loop_header_branch
      %28 = sbr.rel (%p26) target = $region8
    $region5: #{_lambda_.6} parent=1 // loop_body
      %s30 = ssub.s32 %s25, 1
      %s31 = ssub.s32 %s25, 2
      %s32 = sadd.s32 %s25, 1
      %s34 = sadd.s32 %s33, 1
      %p37 = scmp.eq.s32.totalorder %s25, 1
      %p38 = scmp.ne.s32.totalorder %s33, %s35
      %p39 = scmp.eq.s32.totalorder %s25, 0
      %p40 = por %p38, %p39
      %p41 = scmp.ne.s32.totalorder %s33, %s35
      %p42 = scmp.eq.s32.totalorder %s30, 1
      %p43 = por %p41, %p42
      %p44 = scmp.ne.s32.totalorder %s35, %s36
      %p45 = scmp.eq.s32.totalorder %s30, 0
      %p46 = por %p44, %p45
      %p47 = scmp.ne.s32.totalorder %s35, %s36
      %p48 = scmp.eq.s32.totalorder %s31, 1
      %p49 = por %p47, %p48
      %p51 = scmp.ne.s32.totalorder %s36, %s50
      %p52 = scmp.eq.s32.totalorder %s31, 0
      %p53 = por %p51, %p52
      %s55 = sadd.s32 %s54, 1
      %p58 = scmp.eq.s32.totalorder %s25, 1
      %p59 = scmp.ne.s32.totalorder %s54, %s56
      %p60 = scmp.eq.s32.totalorder %s25, 0
      %p61 = por %p59, %p60
      %p62 = scmp.ne.s32.totalorder %s54, %s56
      %p63 = scmp.eq.s32.totalorder %s30, 1
      %p64 = por %p62, %p63
      %p65 = scmp.ne.s32.totalorder %s56, %s57
      %p66 = scmp.eq.s32.totalorder %s30, 0
      %p67 = por %p65, %p66
      %p68 = scmp.ne.s32.totalorder %s56, %s57
      %p69 = scmp.eq.s32.totalorder %s31, 1
      %p70 = por %p68, %p69
      %p72 = scmp.ne.s32.totalorder %s57, %s71
      %p73 = scmp.eq.s32.totalorder %s31, 0
      %p74 = por %p72, %p73
      %s76 = sadd.s32 %s75, 1
      %p79 = scmp.eq.s32.totalorder %s25, 1
      %p80 = scmp.ne.s32.totalorder %s75, %s77
      %p81 = scmp.eq.s32.totalorder %s25, 0
      %p82 = por %p80, %p81
      %p83 = scmp.ne.s32.totalorder %s75, %s77
      %p84 = scmp.eq.s32.totalorder %s30, 1
      %p85 = por %p83, %p84
      %p86 = scmp.ne.s32.totalorder %s77, %s78
      %p87 = scmp.eq.s32.totalorder %s30, 0
      %p88 = por %p86, %p87
      %p89 = scmp.ne.s32.totalorder %s77, %s78
      %p90 = scmp.eq.s32.totalorder %s31, 1
      %p91 = por %p89, %p90
      %p93 = scmp.ne.s32.totalorder %s78, %s92
      %p94 = scmp.eq.s32.totalorder %s31, 0
      %p95 = por %p93, %p94
      %s97 = sadd.s32 %s96, 1
      %p100 = scmp.eq.s32.totalorder %s25, 1
      %p101 = scmp.ne.s32.totalorder %s96, %s98
      %p102 = scmp.eq.s32.totalorder %s25, 0
      %p103 = por %p101, %p102
      %p104 = scmp.ne.s32.totalorder %s96, %s98
      %p105 = scmp.eq.s32.totalorder %s30, 1
      %p106 = por %p104, %p105
      %p107 = scmp.ne.s32.totalorder %s98, %s99
      %p108 = scmp.eq.s32.totalorder %s30, 0
      %p109 = por %p107, %p108
      %p110 = scmp.ne.s32.totalorder %s98, %s99
      %p111 = scmp.eq.s32.totalorder %s31, 1
      %p112 = por %p110, %p111
      %p114 = scmp.ne.s32.totalorder %s99, %s113
      %p115 = scmp.eq.s32.totalorder %s31, 0
      %p116 = por %p114, %p115
      %s117 = ssub.s32 %s25, %s32
      %p118 = scmp.eq.s32.totalorder %s117, 0
      %s120 = sadd.s32 %s119, 1
      %s121 = scalar_select %p118, %s119, %s120
      %p124 = pneg %p118
      %p125 = scmp.eq.s32.totalorder %s25, 1
      %p126 = por %p124, %p125
      %p127 = scmp.ne.s32.totalorder %s119, %s122
      %p128 = scmp.eq.s32.totalorder %s25, 0
      %p129 = por %p127, %p128
      %p130 = scmp.ne.s32.totalorder %s119, %s122
      %p131 = scmp.eq.s32.totalorder %s30, 1
      %p132 = por %p130, %p131
      %p133 = scmp.ne.s32.totalorder %s122, %s123
      %p134 = scmp.eq.s32.totalorder %s30, 0
      %p135 = por %p133, %p134
      %p136 = scmp.ne.s32.totalorder %s122, %s123
      %p137 = scmp.eq.s32.totalorder %s31, 1
      %p138 = por %p136, %p137
      %p140 = scmp.ne.s32.totalorder %s123, %s139
      %p141 = scmp.eq.s32.totalorder %s31, 0
      %p142 = por %p140, %p141
      %s143 = ssub.s32 %s25, %s32
      %p144 = scmp.eq.s32.totalorder %s143, 0
      %s146 = sadd.s32 %s145, 1
      %s147 = scalar_select %p144, %s145, %s146
      %p150 = pneg %p144
      %p151 = scmp.eq.s32.totalorder %s25, 1
      %p152 = por %p150, %p151
      %p153 = scmp.ne.s32.totalorder %s145, %s148
      %p154 = scmp.eq.s32.totalorder %s25, 0
      %p155 = por %p153, %p154
      %p156 = scmp.ne.s32.totalorder %s145, %s148
      %p157 = scmp.eq.s32.totalorder %s30, 1
      %p158 = por %p156, %p157
      %p159 = scmp.ne.s32.totalorder %s148, %s149
      %p160 = scmp.eq.s32.totalorder %s30, 0
      %p161 = por %p159, %p160
      %p162 = scmp.ne.s32.totalorder %s148, %s149
      %p163 = scmp.eq.s32.totalorder %s31, 1
      %p164 = por %p162, %p163
      %p166 = scmp.ne.s32.totalorder %s149, %s165
      %p167 = scmp.eq.s32.totalorder %s31, 0
      %p168 = por %p166, %p167
      %s169 = ssub.s32 %s25, %s32
      %p170 = scmp.eq.s32.totalorder %s169, 0
      %s172 = sadd.s32 %s171, 1
      %s173 = scalar_select %p170, %s171, %s172
      %p176 = pneg %p170
      %p177 = scmp.eq.s32.totalorder %s25, 1
      %p178 = por %p176, %p177
      %p179 = scmp.ne.s32.totalorder %s171, %s174
      %p180 = scmp.eq.s32.totalorder %s25, 0
      %p181 = por %p179, %p180
      %p182 = scmp.ne.s32.totalorder %s171, %s174
      %p183 = scmp.eq.s32.totalorder %s30, 1
      %p184 = por %p182, %p183
      %p185 = scmp.ne.s32.totalorder %s174, %s175
      %p186 = scmp.eq.s32.totalorder %s30, 0
      %p187 = por %p185, %p186
      %p188 = scmp.ne.s32.totalorder %s174, %s175
      %p189 = scmp.eq.s32.totalorder %s31, 1
      %p190 = por %p188, %p189
      %p192 = scmp.ne.s32.totalorder %s175, %s191
      %p193 = scmp.eq.s32.totalorder %s31, 0
      %p194 = por %p192, %p193
      %s195 = ssub.s32 %s25, %s32
      %p196 = scmp.eq.s32.totalorder %s195, 0
      %s198 = sadd.s32 %s197, 1
      %s199 = scalar_select %p196, %s197, %s198
      %p202 = pneg %p196
      %p203 = scmp.eq.s32.totalorder %s25, 1
      %p204 = por %p202, %p203
      %p205 = scmp.ne.s32.totalorder %s197, %s200
      %p206 = scmp.eq.s32.totalorder %s25, 0
      %p207 = por %p205, %p206
      %p208 = scmp.ne.s32.totalorder %s197, %s200
      %p209 = scmp.eq.s32.totalorder %s30, 1
      %p210 = por %p208, %p209
      %p211 = scmp.ne.s32.totalorder %s200, %s201
      %p212 = scmp.eq.s32.totalorder %s30, 0
      %p213 = por %p211, %p212
      %p214 = scmp.ne.s32.totalorder %s200, %s201
      %p215 = scmp.eq.s32.totalorder %s31, 1
      %p216 = por %p214, %p215
      %p218 = scmp.ne.s32.totalorder %s201, %s217
      %p219 = scmp.eq.s32.totalorder %s31, 0
      %p220 = por %p218, %p219
      %s221 = ssub.s32 %s25, %s32
      %p222 = scmp.eq.s32.totalorder %s221, 0
      %s224 = sadd.s32 %s223, 1
      %s225 = scalar_select %p222, %s223, %s224
      %p228 = pneg %p222
      %p229 = scmp.eq.s32.totalorder %s25, 1
      %p230 = por %p228, %p229
      %p231 = scmp.ne.s32.totalorder %s223, %s226
      %p232 = scmp.eq.s32.totalorder %s25, 0
      %p233 = por %p231, %p232
      %p234 = scmp.ne.s32.totalorder %s223, %s226
      %p235 = scmp.eq.s32.totalorder %s30, 1
      %p236 = por %p234, %p235
      %p237 = scmp.ne.s32.totalorder %s226, %s227
      %p238 = scmp.eq.s32.totalorder %s30, 0
      %p239 = por %p237, %p238
      %p240 = scmp.ne.s32.totalorder %s226, %s227
      %p241 = scmp.eq.s32.totalorder %s31, 1
      %p242 = por %p240, %p241
      %p244 = scmp.ne.s32.totalorder %s227, %s243
      %p245 = scmp.eq.s32.totalorder %s31, 0
      %p246 = por %p244, %p245
      %s247 = ssub.s32 %s25, %s32
      %p248 = scmp.eq.s32.totalorder %s247, 0
      %s250 = sadd.s32 %s249, 1
      %s251 = scalar_select %p248, %s249, %s250
      %p254 = pneg %p248
      %p255 = scmp.eq.s32.totalorder %s25, 1
      %p256 = por %p254, %p255
      %p257 = scmp.ne.s32.totalorder %s249, %s252
      %p258 = scmp.eq.s32.totalorder %s25, 0
      %p259 = por %p257, %p258
      %p260 = scmp.ne.s32.totalorder %s249, %s252
      %p261 = scmp.eq.s32.totalorder %s30, 1
      %p262 = por %p260, %p261
      %p263 = scmp.ne.s32.totalorder %s252, %s253
      %p264 = scmp.eq.s32.totalorder %s30, 0
      %p265 = por %p263, %p264
      %p266 = scmp.ne.s32.totalorder %s252, %s253
      %p267 = scmp.eq.s32.totalorder %s31, 1
      %p268 = por %p266, %p267
      %p270 = scmp.ne.s32.totalorder %s253, %s269
      %p271 = scmp.eq.s32.totalorder %s31, 0
      %p272 = por %p270, %p271
      %s273 = ssub.s32 %s25, %s32
      %p274 = scmp.eq.s32.totalorder %s273, 0
      %s276 = sadd.s32 %s275, 1
      %s277 = scalar_select %p274, %s275, %s276
      %p280 = pneg %p274
      %p281 = scmp.eq.s32.totalorder %s25, 1
      %p282 = por %p280, %p281
      %p283 = scmp.ne.s32.totalorder %s275, %s278
      %p284 = scmp.eq.s32.totalorder %s25, 0
      %p285 = por %p283, %p284
      %p286 = scmp.ne.s32.totalorder %s275, %s278
      %p287 = scmp.eq.s32.totalorder %s30, 1
      %p288 = por %p286, %p287
      %p289 = scmp.ne.s32.totalorder %s278, %s279
      %p290 = scmp.eq.s32.totalorder %s30, 0
      %p291 = por %p289, %p290
      %p292 = scmp.ne.s32.totalorder %s278, %s279
      %p293 = scmp.eq.s32.totalorder %s31, 1
      %p294 = por %p292, %p293
      %p296 = scmp.ne.s32.totalorder %s279, %s295
      %p297 = scmp.eq.s32.totalorder %s31, 0
      %p298 = por %p296, %p297
      %s299 = ssub.s32 %s25, %s32
      %p300 = scmp.eq.s32.totalorder %s299, 0
      %s302 = sadd.s32 %s301, 1
      %s303 = scalar_select %p300, %s301, %s302
      %p306 = pneg %p300
      %p307 = scmp.eq.s32.totalorder %s25, 1
      %p308 = por %p306, %p307
      %p309 = scmp.ne.s32.totalorder %s301, %s304
      %p310 = scmp.eq.s32.totalorder %s25, 0
      %p311 = por %p309, %p310
      %p312 = scmp.ne.s32.totalorder %s301, %s304
      %p313 = scmp.eq.s32.totalorder %s30, 1
      %p314 = por %p312, %p313
      %p315 = scmp.ne.s32.totalorder %s304, %s305
      %p316 = scmp.eq.s32.totalorder %s30, 0
      %p317 = por %p315, %p316
      %p318 = scmp.ne.s32.totalorder %s304, %s305
      %p319 = scmp.eq.s32.totalorder %s31, 1
      %p320 = por %p318, %p319
      %p322 = scmp.ne.s32.totalorder %s305, %s321
      %p323 = scmp.eq.s32.totalorder %s31, 0
      %p324 = por %p322, %p323
      %s325 = ssub.s32 %s25, %s32
      %p326 = scmp.eq.s32.totalorder %s325, 0
      %s328 = sadd.s32 %s327, 1
      %s329 = scalar_select %p326, %s327, %s328
      %p332 = pneg %p326
      %p333 = scmp.eq.s32.totalorder %s25, 1
      %p334 = por %p332, %p333
      %p335 = scmp.ne.s32.totalorder %s327, %s330
      %p336 = scmp.eq.s32.totalorder %s25, 0
      %p337 = por %p335, %p336
      %p338 = scmp.ne.s32.totalorder %s327, %s330
      %p339 = scmp.eq.s32.totalorder %s30, 1
      %p340 = por %p338, %p339
      %p341 = scmp.ne.s32.totalorder %s330, %s331
      %p342 = scmp.eq.s32.totalorder %s30, 0
      %p343 = por %p341, %p342
      %p344 = scmp.ne.s32.totalorder %s330, %s331
      %p345 = scmp.eq.s32.totalorder %s31, 1
      %p346 = por %p344, %p345
      %p348 = scmp.ne.s32.totalorder %s331, %s347
      %p349 = scmp.eq.s32.totalorder %s31, 0
      %p350 = por %p348, %p349
      %s351 = ssub.s32 %s25, %s32
      %p352 = scmp.eq.s32.totalorder %s351, 0
      %s354 = sadd.s32 %s353, 1
      %s355 = scalar_select %p352, %s353, %s354
      %p358 = pneg %p352
      %p359 = scmp.eq.s32.totalorder %s25, 1
      %p360 = por %p358, %p359
      %p361 = scmp.ne.s32.totalorder %s353, %s356
      %p362 = scmp.eq.s32.totalorder %s25, 0
      %p363 = por %p361, %p362
      %p364 = scmp.ne.s32.totalorder %s353, %s356
      %p365 = scmp.eq.s32.totalorder %s30, 1
      %p366 = por %p364, %p365
      %p367 = scmp.ne.s32.totalorder %s356, %s357
      %p368 = scmp.eq.s32.totalorder %s30, 0
      %p369 = por %p367, %p368
      %p370 = scmp.ne.s32.totalorder %s356, %s357
      %p371 = scmp.eq.s32.totalorder %s31, 1
      %p372 = por %p370, %p371
      %p374 = scmp.ne.s32.totalorder %s357, %s373
      %p375 = scmp.eq.s32.totalorder %s31, 0
      %p376 = por %p374, %p375
      %s377 = ssub.s32 %s25, %s32
      %p378 = scmp.eq.s32.totalorder %s377, 0
      %s380 = sadd.s32 %s379, 1
      %s381 = scalar_select %p378, %s379, %s380
      %p384 = pneg %p378
      %p385 = scmp.eq.s32.totalorder %s25, 1
      %p386 = por %p384, %p385
      %p387 = scmp.ne.s32.totalorder %s379, %s382
      %p388 = scmp.eq.s32.totalorder %s25, 0
      %p389 = por %p387, %p388
      %p390 = scmp.ne.s32.totalorder %s379, %s382
      %p391 = scmp.eq.s32.totalorder %s30, 1
      %p392 = por %p390, %p391
      %p393 = scmp.ne.s32.totalorder %s382, %s383
      %p394 = scmp.eq.s32.totalorder %s30, 0
      %p395 = por %p393, %p394
      %p396 = scmp.ne.s32.totalorder %s382, %s383
      %p397 = scmp.eq.s32.totalorder %s31, 1
      %p398 = por %p396, %p397
      %p400 = scmp.ne.s32.totalorder %s383, %s399
      %p401 = scmp.eq.s32.totalorder %s31, 0
      %p402 = por %p400, %p401
      %s403 = ssub.s32 %s25, %s32
      %p404 = scmp.eq.s32.totalorder %s403, 0
      %s406 = sadd.s32 %s405, 1
      %s407 = scalar_select %p404, %s405, %s406
      %p410 = pneg %p404
      %p411 = scmp.eq.s32.totalorder %s25, 1
      %p412 = por %p410, %p411
      %p413 = scmp.ne.s32.totalorder %s405, %s408
      %p414 = scmp.eq.s32.totalorder %s25, 0
      %p415 = por %p413, %p414
      %p416 = scmp.ne.s32.totalorder %s405, %s408
      %p417 = scmp.eq.s32.totalorder %s30, 1
      %p418 = por %p416, %p417
      %p419 = scmp.ne.s32.totalorder %s408, %s409
      %p420 = scmp.eq.s32.totalorder %s30, 0
      %p421 = por %p419, %p420
      %p422 = scmp.ne.s32.totalorder %s408, %s409
      %p423 = scmp.eq.s32.totalorder %s31, 1
      %p424 = por %p422, %p423
      %p426 = scmp.ne.s32.totalorder %s409, %s425
      %p427 = scmp.eq.s32.totalorder %s31, 0
      %p428 = por %p426, %p427
      %s430 = sadd.s32 %s429, 1
      %p433 = scmp.eq.s32.totalorder %s25, 1
      %p434 = scmp.ne.s32.totalorder %s429, %s431
      %p435 = scmp.eq.s32.totalorder %s25, 0
      %p436 = por %p434, %p435
      %p437 = scmp.ne.s32.totalorder %s429, %s431
      %p438 = scmp.eq.s32.totalorder %s30, 1
      %p439 = por %p437, %p438
      %p440 = scmp.ne.s32.totalorder %s431, %s432
      %p441 = scmp.eq.s32.totalorder %s30, 0
      %p442 = por %p440, %p441
      %p443 = scmp.ne.s32.totalorder %s431, %s432
      %p444 = scmp.eq.s32.totalorder %s31, 1
      %p445 = por %p443, %p444
      %p447 = scmp.ne.s32.totalorder %s432, %s446
      %p448 = scmp.eq.s32.totalorder %s31, 0
      %p449 = por %p447, %p448
      %p450 = scmp.le.s32.totalorder 1, %s25
      %p451 = scmp.lt.s32.totalorder %s25, 3
      %p452 = pnand %p450, %p451
      %p453 = pneg %p452
      // Predicated region
      $region9: #{_lambda_.6} parent=5 // pred_check
        _
      $region10: #{_lambda_.6} parent=5 // pred_check_branch
        %455 = sbr.rel (%p452) target = $region12
      $region11: #{_lambda_.6} parent=5 // pred_region
        %s456 = ssub.s32 %s25, 1
        // Predicated region
        $region13: #{_lambda_.6} parent=11 // pred_check
          %p457 = pneg %p46
        $region14: #{_lambda_.6} parent=11 // pred_check_branch
          %459 = sbr.rel (%p457) target = $region16
        $region15: #{_lambda_.6} parent=11 // pred_region
          _
        $region16: #{_lambda_.6} parent=11 // pred_fallthru
          _
        // Predicated region
        $region17: #{_lambda_.6} parent=11 // pred_check
          %p460 = pneg %p67
        $region18: #{_lambda_.6} parent=11 // pred_check_branch
          %462 = sbr.rel (%p460) target = $region20
        $region19: #{_lambda_.6} parent=11 // pred_region
          _
        $region20: #{_lambda_.6} parent=11 // pred_fallthru
          _
        // Predicated region
        $region21: #{_lambda_.6} parent=11 // pred_check
          %p463 = pneg %p88
        $region22: #{_lambda_.6} parent=11 // pred_check_branch
          %465 = sbr.rel (%p463) target = $region24
        $region23: #{_lambda_.6} parent=11 // pred_region
          _
        $region24: #{_lambda_.6} parent=11 // pred_fallthru
          _
        // Predicated region
        $region25: #{_lambda_.6} parent=11 // pred_check
          %p466 = pneg %p109
        $region26: #{_lambda_.6} parent=11 // pred_check_branch
          %468 = sbr.rel (%p466) target = $region28
        $region27: #{_lambda_.6} parent=11 // pred_region
          _
        $region28: #{_lambda_.6} parent=11 // pred_fallthru
          _
      $region12: #{_lambda_.6} parent=5 // pred_fallthru
        _
      %p469 = scmp.lt.s32.totalorder %s25, 2
      // Predicated region
      $region29: #{_lambda_.6} parent=5 // pred_check
        %p470 = pneg %p469
      $region30: #{_lambda_.6} parent=5 // pred_check_branch
        %472 = sbr.rel (%p470) target = $region32
      $region31: #{_lambda_.6} parent=5 // pred_region
        // Predicated region
        $region33: #{_lambda_.6} parent=31 // pred_check
          %p473 = pneg %p129
        $region34: #{_lambda_.6} parent=31 // pred_check_branch
          %475 = sbr.rel (%p473) target = $region36
        $region35: #{_lambda_.6} parent=31 // pred_region
          %p476 = scmp.lt.s32.totalorder %s25, 1
          %s477 = scalar_select %p476, %s25, 1
          %s478 = scalar_lea.vmem %s4, %s477
        $region36: #{_lambda_.6} parent=31 // pred_fallthru
          _
        // Predicated region
        $region37: #{_lambda_.6} parent=31 // pred_check
          %p479 = pneg %p155
        $region38: #{_lambda_.6} parent=31 // pred_check_branch
          %481 = sbr.rel (%p479) target = $region40
        $region39: #{_lambda_.6} parent=31 // pred_region
          %p482 = scmp.lt.s32.totalorder %s25, 1
          %s483 = scalar_select %p482, %s25, 1
          %s484 = scalar_lea.vmem %s5, %s483
        $region40: #{_lambda_.6} parent=31 // pred_fallthru
          _
        // Predicated region
        $region41: #{_lambda_.6} parent=31 // pred_check
          %p485 = pneg %p181
        $region42: #{_lambda_.6} parent=31 // pred_check_branch
          %487 = sbr.rel (%p485) target = $region44
        $region43: #{_lambda_.6} parent=31 // pred_region
          %p488 = scmp.lt.s32.totalorder %s25, 1
          %s489 = scalar_select %p488, %s25, 1
          %s490 = smul.addr %s489, 16
          %s491 = smul.addr %s490, 8
          %s492 = scalar_lea.vmem %s6, %s491
        $region44: #{_lambda_.6} parent=31 // pred_fallthru
          _
        // Predicated region
        $region45: #{_lambda_.6} parent=31 // pred_check
          %p493 = pneg %p207
        $region46: #{_lambda_.6} parent=31 // pred_check_branch
          %495 = sbr.rel (%p493) target = $region48
        $region47: #{_lambda_.6} parent=31 // pred_region
          %p496 = scmp.lt.s32.totalorder %s25, 1
          %s497 = scalar_select %p496, %s25, 1
          %s498 = smul.addr %s497, 2
          %s499 = scalar_lea.vmem %s7, %s498
        $region48: #{_lambda_.6} parent=31 // pred_fallthru
          _
        // Predicated region
        $region49: #{_lambda_.6} parent=31 // pred_check
          %p500 = pneg %p233
        $region50: #{_lambda_.6} parent=31 // pred_check_branch
          %502 = sbr.rel (%p500) target = $region52
        $region51: #{_lambda_.6} parent=31 // pred_region
          %s503 = sand.u32 %s223, 1
          %s504 = scalar_lea.sflag [#allocation4], %s503
          %s505 = sand.u32 %s223, 1
          %s506 = smul.addr %s505, 64
          %s507 = scalar_lea.vmem [#allocation3], %s506
          %s509 = ssub.s32 1024, 1024
          %510 = vsyncadd %s504, %s509
          %s511 = smul.addr %s25, 8
          %s512 = smul.addr %s511, 128
          %s513 = scalar_lea.hbm %s8, %s512
          %s514 = sshll.u32 %s507, 4
          %s515 = int_to_ptr.vmem [resolvable:$true] %s514
          %520 = dma.hbm_to_vmem [thread:$0]  %s513, 1024, %s515, %s504, 128, 128, 8
        $region52: #{_lambda_.6} parent=31 // pred_fallthru
          _
        // Predicated region
        $region53: #{_lambda_.6} parent=31 // pred_check
          %p521 = pneg %p259
        $region54: #{_lambda_.6} parent=31 // pred_check_branch
          %523 = sbr.rel (%p521) target = $region56
        $region55: #{_lambda_.6} parent=31 // pred_region
          %p524 = scmp.lt.s32.totalorder %s25, 1
          %s525 = scalar_select %p524, %s25, 1
          %s526 = scalar_lea.vmem %s9, %s525
        $region56: #{_lambda_.6} parent=31 // pred_fallthru
          _
        // Predicated region
        $region57: #{_lambda_.6} parent=31 // pred_check
          %p527 = pneg %p285
        $region58: #{_lambda_.6} parent=31 // pred_check_branch
          %529 = sbr.rel (%p527) target = $region60
        $region59: #{_lambda_.6} parent=31 // pred_region
          %p530 = scmp.lt.s32.totalorder %s25, 1
          %s531 = scalar_select %p530, %s25, 1
          %s532 = scalar_lea.vmem %s10, %s531
        $region60: #{_lambda_.6} parent=31 // pred_fallthru
          _
        // Predicated region
        $region61: #{_lambda_.6} parent=31 // pred_check
          %p533 = pneg %p311
        $region62: #{_lambda_.6} parent=31 // pred_check_branch
          %535 = sbr.rel (%p533) target = $region64
        $region63: #{_lambda_.6} parent=31 // pred_region
          %p536 = scmp.lt.s32.totalorder %s25, 1
          %s537 = scalar_select %p536, %s25, 1
          %s538 = scalar_lea.vmem %s11, %s537
        $region64: #{_lambda_.6} parent=31 // pred_fallthru
          _
        // Predicated region
        $region65: #{_lambda_.6} parent=31 // pred_check
          %p539 = pneg %p337
        $region66: #{_lambda_.6} parent=31 // pred_check_branch
          %541 = sbr.rel (%p539) target = $region68
        $region67: #{_lambda_.6} parent=31 // pred_region
          %p542 = scmp.lt.s32.totalorder %s25, 1
          %s543 = scalar_select %p542, %s25, 1
          %s544 = smul.addr %s543, 16
          %s545 = smul.addr %s544, 8
          %s546 = scalar_lea.vmem %s12, %s545
        $region68: #{_lambda_.6} parent=31 // pred_fallthru
          _
        // Predicated region
        $region69: #{_lambda_.6} parent=31 // pred_check
          %p547 = pneg %p363
        $region70: #{_lambda_.6} parent=31 // pred_check_branch
          %549 = sbr.rel (%p547) target = $region72
        $region71: #{_lambda_.6} parent=31 // pred_region
          %p550 = scmp.lt.s32.totalorder %s25, 1
          %s551 = scalar_select %p550, %s25, 1
          %s552 = smul.addr %s551, 2
          %s553 = scalar_lea.vmem %s13, %s552
        $region72: #{_lambda_.6} parent=31 // pred_fallthru
          _
        // Predicated region
        $region73: #{_lambda_.6} parent=31 // pred_check
          %p554 = pneg %p389
        $region74: #{_lambda_.6} parent=31 // pred_check_branch
          %556 = sbr.rel (%p554) target = $region76
        $region75: #{_lambda_.6} parent=31 // pred_region
          %p557 = scmp.lt.s32.totalorder %s25, 1
          %s558 = scalar_select %p557, %s25, 1
          %s559 = smul.addr %s558, 32
          %s560 = smul.addr %s559, 8
          %s561 = scalar_lea.vmem %s14, %s560
        $region76: #{_lambda_.6} parent=31 // pred_fallthru
          _
        // Predicated region
        $region77: #{_lambda_.6} parent=31 // pred_check
          %p562 = pneg %p415
        $region78: #{_lambda_.6} parent=31 // pred_check_branch
          %564 = sbr.rel (%p562) target = $region80
        $region79: #{_lambda_.6} parent=31 // pred_region
          %p565 = scmp.lt.s32.totalorder %s25, 1
          %s566 = scalar_select %p565, %s25, 1
          %s567 = scalar_lea.vmem %s15, %s566
        $region80: #{_lambda_.6} parent=31 // pred_fallthru
          _
      $region32: #{_lambda_.6} parent=5 // pred_fallthru
        _
      %p568 = scmp.le.s32.totalorder 1, %s25
      %p569 = scmp.lt.s32.totalorder %s25, 3
      %p570 = pnand %p568, %p569
      %p571 = pneg %p570
      // Predicated region
      $region81: #{_lambda_.6} parent=5 // pred_check
        _
      $region82: #{_lambda_.6} parent=5 // pred_check_branch
        %573 = sbr.rel (%p570) target = $region84
      $region83: #{_lambda_.6} parent=5 // pred_region
        %s574 = ssub.s32 %s25, 1
        %s575 = sand.u32 %s226, 1
        %s576 = scalar_lea.sflag [#allocation4], %s575
        %s577 = sand.u32 %s226, 1
        %s578 = smul.addr %s577, 64
        %s579 = scalar_lea.vmem [#allocation3], %s578
        // Predicated region
        $region85: #{_lambda_.6} parent=83 // pred_check
          %p580 = pneg %p239
        $region86: #{_lambda_.6} parent=83 // pred_check_branch
          %582 = sbr.rel (%p580) target = $region88
        $region87: #{_lambda_.6} parent=83 // pred_region
          %583 = dma.done %s576, 1024
        $region88: #{_lambda_.6} parent=83 // pred_fallthru
          _
        %p584 = pneg %p46
        %p585 = pneg %p43
        %p586 = pneg %p67
        %p587 = pneg %p64
        %p588 = pneg %p88
        %p589 = pneg %p85
        %p590 = pneg %p109
        %p591 = pneg %p106
        %p592 = scmp.lt.s32.totalorder %s30, 1
        %s593 = scalar_select %p592, %s30, 1
        %s594 = scalar_lea.vmem %s4, %s593
        %p595 = pneg %p135
        %p596 = pneg %p132
        %p597 = scmp.lt.s32.totalorder %s30, 1
        %s598 = scalar_select %p597, %s30, 1
        %s599 = scalar_lea.vmem %s5, %s598
        %p600 = pneg %p161
        %p601 = pneg %p158
        %p602 = scmp.lt.s32.totalorder %s30, 1
        %s603 = scalar_select %p602, %s30, 1
        %s604 = smul.addr %s603, 16
        %s605 = smul.addr %s604, 8
        %s606 = scalar_lea.vmem %s6, %s605
        %p607 = pneg %p187
        %p608 = pneg %p184
        %p609 = scmp.lt.s32.totalorder %s30, 1
        %s610 = scalar_select %p609, %s30, 1
        %s611 = smul.addr %s610, 2
        %s612 = scalar_lea.vmem %s7, %s611
        %p613 = pneg %p213
        %p614 = pneg %p210
        %s615 = sand.u32 %s226, 1
        %s616 = scalar_lea.sflag [#allocation4], %s615
        %s617 = sand.u32 %s226, 1
        %s618 = smul.addr %s617, 64
        %s619 = scalar_lea.vmem [#allocation3], %s618
        %p620 = pneg %p239
        %p621 = pneg %p236
        %p622 = scmp.lt.s32.totalorder %s30, 1
        %s623 = scalar_select %p622, %s30, 1
        %s624 = scalar_lea.vmem %s9, %s623
        %p625 = pneg %p265
        %p626 = pneg %p262
        %p627 = scmp.lt.s32.totalorder %s30, 1
        %s628 = scalar_select %p627, %s30, 1
        %s629 = scalar_lea.vmem %s10, %s628
        %p630 = pneg %p291
        %p631 = pneg %p288
        %p632 = scmp.lt.s32.totalorder %s30, 1
        %s633 = scalar_select %p632, %s30, 1
        %s634 = scalar_lea.vmem %s11, %s633
        %p635 = pneg %p317
        %p636 = pneg %p314
        %p637 = scmp.lt.s32.totalorder %s30, 1
        %s638 = scalar_select %p637, %s30, 1
        %s639 = smul.addr %s638, 16
        %s640 = smul.addr %s639, 8
        %s641 = scalar_lea.vmem %s12, %s640
        %p642 = pneg %p343
        %p643 = pneg %p340
        %p644 = scmp.lt.s32.totalorder %s30, 1
        %s645 = scalar_select %p644, %s30, 1
        %s646 = smul.addr %s645, 2
        %s647 = scalar_lea.vmem %s13, %s646
        %p648 = pneg %p369
        %p649 = pneg %p366
        %p650 = scmp.lt.s32.totalorder %s30, 1
        %s651 = scalar_select %p650, %s30, 1
        %s652 = smul.addr %s651, 32
        %s653 = smul.addr %s652, 8
        %s654 = scalar_lea.vmem %s14, %s653
        %p655 = pneg %p395
        %p656 = pneg %p392
        %p657 = scmp.lt.s32.totalorder %s30, 1
        %s658 = scalar_select %p657, %s30, 1
        %s659 = scalar_lea.vmem %s15, %s658
        %p660 = pneg %p421
        %p661 = pneg %p418
        %p662 = pneg %p442
        %p663 = pneg %p439
        %p664 = scmp.lt.s32.totalorder %s30, 1
        %s665 = scalar_select %p664, %s30, 1
        %s666 = scalar_lea.vmem %s4, %s665
        %p667 = scmp.lt.s32.totalorder %s30, 1
        %s668 = scalar_select %p667, %s30, 1
        %s669 = scalar_lea.vmem %s5, %s668
        %p670 = scmp.lt.s32.totalorder %s30, 1
        %s671 = scalar_select %p670, %s30, 1
        %s672 = smul.addr %s671, 16
        %s673 = smul.addr %s672, 8
        %s674 = scalar_lea.vmem %s6, %s673
        %p675 = scmp.lt.s32.totalorder %s30, 1
        %s676 = scalar_select %p675, %s30, 1
        %s677 = smul.addr %s676, 2
        %s678 = scalar_lea.vmem %s7, %s677
        %p679 = scmp.lt.s32.totalorder %s30, 1
        %s680 = scalar_select %p679, %s30, 1
        %s681 = scalar_lea.vmem %s9, %s680
        %p682 = scmp.lt.s32.totalorder %s30, 1
        %s683 = scalar_select %p682, %s30, 1
        %s684 = scalar_lea.vmem %s10, %s683
        %p685 = scmp.lt.s32.totalorder %s30, 1
        %s686 = scalar_select %p685, %s30, 1
        %s687 = scalar_lea.vmem %s11, %s686
        %p688 = scmp.lt.s32.totalorder %s30, 1
        %s689 = scalar_select %p688, %s30, 1
        %s690 = smul.addr %s689, 16
        %s691 = smul.addr %s690, 8
        %s692 = scalar_lea.vmem %s12, %s691
        %p693 = scmp.lt.s32.totalorder %s30, 1
        %s694 = scalar_select %p693, %s30, 1
        %s695 = smul.addr %s694, 2
        %s696 = scalar_lea.vmem %s13, %s695
        %p697 = scmp.lt.s32.totalorder %s30, 1
        %s698 = scalar_select %p697, %s30, 1
        %s699 = smul.addr %s698, 32
        %s700 = smul.addr %s699, 8
        %s701 = scalar_lea.vmem %s14, %s700
        %p702 = scmp.lt.s32.totalorder %s30, 1
        %s703 = scalar_select %p702, %s30, 1
        %s704 = scalar_lea.vmem %s15, %s703
        %p706 = scmp.eq.s32.totalorder %s30, 0
        // Predicated region
        $region89: #{_lambda_.6} parent=83 // pred_check
          %p707 = pneg %p706
        $region90: #{_lambda_.6} parent=83 // pred_check_branch
          %709 = sbr.rel (%p707) target = $region92
        $region91: #{_lambda_.6} parent=83 // pred_region
          %v710 = vld [vmem:[%s0] sm:$0xff]
          %v711 = vld [vmem:[%s0 + $0x8] sm:$0xff]
          %v712 = vld [vmem:[%s2] sm:$0x1]
          %v713 = vld [vmem:[%s3] sm:$0x1]
          %vm714 = vcmask 523264
          %v715 = vsel %vm714, %v710, 0.0
          %716 = vadd.xlane.f32.xlu0 %v715
          %v717 = vpop.xlane.xlu0 %716
          %v718 = vsel %vm714, %v711, 0.0
          %719 = vadd.xlane.f32.xlu0 %v718
          %v720 = vpop.xlane.xlu0 %719
          %v721 = vrcp.pop 64.0
          %v722 = vmul.f32 %v717, %v721
          %v723 = vmul.f32 %v720, %v721
          %v724 = vsub.f32 %v710, %v722
          %v725 = vsub.f32 %v711, %v723
          %v726 = vmul.f32 %v724, %v724
          %v727 = vmul.f32 %v725, %v725
          %v728 = vsel %vm714, %v726, 0.0
          %729 = vadd.xlane.f32.xlu0 %v728
          %v730 = vpop.xlane.xlu0 %729
          %v731 = vsel %vm714, %v727, 0.0
          %732 = vadd.xlane.f32.xlu0 %v731
          %v733 = vpop.xlane.xlu0 %732
          %v734 = vmul.f32 %v730, %v721
          %v735 = vmul.f32 %v733, %v721
          %v736 = vadd.f32 %v734, 1e-05
          %v737 = vadd.f32 %v735, 1e-05
          %v738 = vrsqrt.pop %v736
          %v739 = vrsqrt.pop %v737
          %v740 = vmul.f32 %v724, %v738
          %v741 = vmul.f32 %v725, %v739
          %v743 = vlaneseq
          %v744 = vshrl.u32 %v743, 7
          %v745 = vsub.s32 0, %v744
          %v746 = vrot.slane %v712, %v745
          %v748 = vmul.f32 %v740, %v746
          %v749 = vmul.f32 %v741, %v746
          %v751 = vlaneseq
          %v752 = vshrl.u32 %v751, 7
          %v753 = vsub.s32 0, %v752
          %v754 = vrot.slane %v713, %v753
          %v756 = vadd.f32 %v748, %v754
          %v757 = vadd.f32 %v749, %v754
          %758 = vst.msk [vmem:[#allocation2] sm:$0xff] %vm714, %v756
          %759 = vst.msk [vmem:[#allocation2 + $0x8] sm:$0xff] %vm714, %v757
        $region92: #{_lambda_.6} parent=83 // pred_fallthru
          _
        %v760 = vld [vmem:[#allocation2] sm:$0xff]
        %v761 = vld [vmem:[#allocation2 + $0x8] sm:$0xff]
        %v762 = vld [vmem:[%s1] sm:$0xff]
        %v763 = vld [vmem:[%s1 + $0x8] sm:$0xff]
        %v764 = vld [vmem:[%s666] sm:$0x1]
        %v765 = vld [vmem:[%s669] sm:$0x1]
        %vm766 = vcmask 523264
        %v767 = vsel %vm766, %v760, 0.0
        %768 = vadd.xlane.f32.xlu0 %v767
        %v769 = vpop.xlane.xlu0 %768
        %v770 = vsel %vm766, %v761, 0.0
        %771 = vadd.xlane.f32.xlu0 %v770
        %v772 = vpop.xlane.xlu0 %771
        %v773 = vrcp.pop 64.0
        %v774 = vmul.f32 %v769, %v773
        %v775 = vmul.f32 %v772, %v773
        %v776 = vsub.f32 %v760, %v774
        %v777 = vsub.f32 %v761, %v775
        %v778 = vmul.f32 %v776, %v776
        %v779 = vmul.f32 %v777, %v777
        %v780 = vsel %vm766, %v778, 0.0
        %781 = vadd.xlane.f32.xlu0 %v780
        %v782 = vpop.xlane.xlu0 %781
        %v783 = vsel %vm766, %v779, 0.0
        %784 = vadd.xlane.f32.xlu0 %v783
        %v785 = vpop.xlane.xlu0 %784
        %v786 = vmul.f32 %v782, %v773
        %v787 = vmul.f32 %v785, %v773
        %v788 = vadd.f32 %v786, 1e-05
        %v789 = vadd.f32 %v787, 1e-05
        %v790 = vrsqrt.pop %v788
        %v791 = vrsqrt.pop %v789
        %v792 = vmul.f32 %v776, %v790
        %v793 = vmul.f32 %v777, %v791
        %v795 = vlaneseq
        %v796 = vshrl.u32 %v795, 7
        %v797 = vsub.s32 0, %v796
        %v798 = vrot.slane %v764, %v797
        %v800 = vmul.f32 %v792, %v798
        %v801 = vmul.f32 %v793, %v798
        %v803 = vlaneseq
        %v804 = vshrl.u32 %v803, 7
        %v805 = vsub.s32 0, %v804
        %v806 = vrot.slane %v765, %v805
        %v808 = vadd.f32 %v800, %v806
        %v809 = vadd.f32 %v801, %v806
        %v810 = vld [vmem:[%s674] sm:$0xff]
        %v811 = vld [vmem:[%s674 + $0x8] sm:$0xff]
        %v812 = vld [vmem:[%s674 + $0x10] sm:$0xff]
        %v813 = vld [vmem:[%s674 + $0x18] sm:$0xff]
        %v814 = vld [vmem:[%s674 + $0x20] sm:$0xff]
        %v815 = vld [vmem:[%s674 + $0x28] sm:$0xff]
        %v816 = vld [vmem:[%s674 + $0x30] sm:$0xff]
        %v817 = vld [vmem:[%s674 + $0x38] sm:$0xff]
        %v818 = vld [vmem:[%s674 + $0x40] sm:$0xff]
        %v819 = vld [vmem:[%s674 + $0x48] sm:$0xff]
        %v820 = vld [vmem:[%s674 + $0x50] sm:$0xff]
        %v821 = vld [vmem:[%s674 + $0x58] sm:$0xff]
        %v822 = vld [vmem:[%s674 + $0x60] sm:$0xff]
        %v823 = vld [vmem:[%s674 + $0x68] sm:$0xff]
        %v824 = vld [vmem:[%s674 + $0x70] sm:$0xff]
        %v825 = vld [vmem:[%s674 + $0x78] sm:$0xff]
        %v826 = vpack.c.bf16 %v809, %v808
        %v827 = vpack.c.bf16 %v812, %v810
        %v828 = vpack.c.bf16 %v813, %v811
        %v829 = vpack.c.bf16 %v816, %v814
        %v830 = vpack.c.bf16 %v817, %v815
        %v831 = vpack.c.bf16 %v820, %v818
        %v832 = vpack.c.bf16 %v821, %v819
        %v833 = vpack.c.bf16 %v824, %v822
        %v834 = vpack.c.bf16 %v825, %v823
        %v835 = vld [vmem:[%s678] sm:$0x3]
        %v837 = vlaneseq
        %v838 = vshrl.u32 %v837, 7
        %v839 = vsub.s32 0, %v838
        %v840 = vrot.slane %v835, %v839
        %v841 = vlaneseq
        %v842 = vshrl.u32 %v841, 7
        %v843 = vsub.s32 1, %v842
        %v844 = vrot.slane %v835, %v843
        %v848 = vsel %vm766, %v826, 0
        %850 = vmatprep.subr.bf16.mxu0 %v828
        %851 = vmatpush1.bf16.msra.mxu0 %v827
        %852 = vmatprep.subr.bf16.mxu0 %v830
        %853 = vmatpush1.bf16.msra.mxu0 %v829
        %854 = vmatprep.subr.bf16.mxu0 %v832
        %855 = vmatpush1.bf16.msra.mxu0 %v831
        %856 = vmatprep.subr.bf16.mxu0 %v834
        %857 = vmatpush1.bf16.msra.mxu0 %v833
        %858 = vmatprep.subr.bf16.mxu0 0
        %859 = vmatpush1.bf16.msra.mxu0 0
        %860 = vmatprep.subr.bf16.mxu0 0
        %861 = vmatpush1.bf16.msra.mxu0 0
        %862 = vmatprep.subr.bf16.mxu0 0
        %863 = vmatpush1.bf16.msra.mxu0 0
        %864 = vmatprep.subr.bf16.mxu0 0
        %865 = vmatpush1.bf16.msra.mxu0 0
        %866 = vmatprep.subr.bf16.mxu0 0
        %867 = vmatpush1.bf16.msra.mxu0 0
        %868 = vmatprep.subr.bf16.mxu0 0
        %869 = vmatpush1.bf16.msra.mxu0 0
        %870 = vmatprep.subr.bf16.mxu0 0
        %871 = vmatpush1.bf16.msra.mxu0 0
        %872 = vmatprep.subr.bf16.mxu0 0
        %873 = vmatpush1.bf16.msra.mxu0 0
        %874 = vmatprep.subr.bf16.mxu0 0
        %875 = vmatpush1.bf16.msra.mxu0 0
        %876 = vmatprep.subr.bf16.mxu0 0
        %877 = vmatpush1.bf16.msra.mxu0 0
        %878 = vmatprep.subr.bf16.mxu0 0
        %879 = vmatpush1.bf16.msra.mxu0 0
        %880 = vmatprep.subr.bf16.mxu0 0
        %881 = vmatpush1.bf16.msra.mxu0 0
        %882 = vmatprep.mubr.bf16.mxu0 0
        %883 = vmatmul.mubr.bf16.gmra.mrb[0].mxu0 %v848
        %v884 = vpop.f32.mrb[0].mxu0
        %v885 = vadd.f32 %v840, %v884
        %v886 = vpop.f32.mrb[0].mxu0
        %v887 = vadd.f32 %v844, %v886
        %v888 = vpop.f32.mrb[0].mxu0
        %v889 = vadd.f32 %v840, %v888
        %v890 = vpop.f32.mrb[0].mxu0
        %v891 = vadd.f32 %v844, %v890
        %892 = vdwg.mxu0
        %v893 = vpack.c.bf16 %v889, %v885
        %895 = vrot.lane.b32.xlu0 %v893, 64
        %v896 = vpop.permute.xlu0 %895
        %vm897 = vcmask 130048
        %v899 = vsel %vm897, %v893, 0
        %v902 = vsel %vm897, %v896, 0
        %904 = vmatprep.subr.bf16.mxu0 0
        %905 = vmatpush1.bf16.xpose.msra.mxu0 %v902
        %906 = vmatprep.subr.bf16.mxu0 0
        %907 = vmatpush1.bf16.xpose.msra.mxu0 0
        %908 = vmatprep.subr.bf16.mxu0 0
        %909 = vmatpush1.bf16.xpose.msra.mxu0 0
        %910 = vmatprep.subr.bf16.mxu0 0
        %911 = vmatpush1.bf16.xpose.msra.mxu0 0
        %912 = vmatprep.subr.bf16.mxu0 0
        %913 = vmatpush1.bf16.xpose.msra.mxu0 0
        %914 = vmatprep.subr.bf16.mxu0 0
        %915 = vmatpush1.bf16.xpose.msra.mxu0 0
        %916 = vmatprep.subr.bf16.mxu0 0
        %917 = vmatpush1.bf16.xpose.msra.mxu0 0
        %918 = vmatprep.subr.bf16.mxu0 0
        %919 = vmatpush1.bf16.xpose.msra.mxu0 0
        %920 = vmatprep.subr.bf16.mxu0 0
        %921 = vmatpush1.bf16.xpose.msra.mxu0 0
        %922 = vmatprep.subr.bf16.mxu0 0
        %923 = vmatpush1.bf16.xpose.msra.mxu0 0
        %924 = vmatprep.subr.bf16.mxu0 0
        %925 = vmatpush1.bf16.xpose.msra.mxu0 0
        %926 = vmatprep.subr.bf16.mxu0 0
        %927 = vmatpush1.bf16.xpose.msra.mxu0 0
        %928 = vmatprep.subr.bf16.mxu0 0
        %929 = vmatpush1.bf16.xpose.msra.mxu0 0
        %930 = vmatprep.subr.bf16.mxu0 0
        %931 = vmatpush1.bf16.xpose.msra.mxu0 0
        %932 = vmatprep.subr.bf16.mxu0 0
        %933 = vmatpush1.bf16.xpose.msra.mxu0 0
        %934 = vmatprep.subr.bf16.mxu0 0
        %935 = vmatpush1.bf16.xpose.msra.mxu0 0
        %936 = vmatprep.mubr.bf16.mxu0 0
        %937 = vmatmul.mubr.bf16.gmra.mrb[0].mxu0 %v899
        %v938 = vpop.f32.mrb[0].mxu0
        %v939 = vadd.f32 0.0, %v938
        %v940 = vpop.f32.mrb[0].mxu0
        %v941 = vpop.f32.mrb[0].mxu0
        %v942 = vadd.f32 0.0, %v941
        %v943 = vpop.f32.mrb[0].mxu0
        %944 = vdwg.mxu0
        %v945 = vmul.f32 %v939, 0.25
        %v946 = vmul.f32 %v942, 0.25
        %v947 = vadd.f32 %v945, %v762
        %v948 = vadd.f32 %v946, %v763
        %v949 = vsel %vm897, %v947, -inf
        %950 = vmax.xlane.f32.xlu0 %v949
        %v951 = vpop.xlane.xlu0 %950
        %v952 = vsel %vm897, %v948, -inf
        %953 = vmax.xlane.f32.xlu0 %v952
        %v954 = vpop.xlane.xlu0 %953
        %v955 = vsub.f32 %v947, %v951
        %v956 = vsub.f32 %v948, %v954
        %v957 = vmul.f32 %v955, 1.442695
        %v958 = vpow.pop %v957
        %v959 = vmul.f32 %v956, 1.442695
        %v960 = vpow.pop %v959
        %v961 = vsel %vm897, %v958, 0.0
        %962 = vadd.xlane.f32.xlu0 %v961
        %v963 = vpop.xlane.xlu0 %962
        %v964 = vsel %vm897, %v960, 0.0
        %965 = vadd.xlane.f32.xlu0 %v964
        %v966 = vpop.xlane.xlu0 %965
        %v967 = vrcp.pop %v963
        %v968 = vrcp.pop %v966
        %v969 = vmul.f32 %v958, %v967
        %v970 = vmul.f32 %v960, %v968
        %v971 = vpack.c.bf16 %v970, %v969
        %v972 = vpack.c.bf16 %v891, %v887
        %v974 = vsel %vm897, %v971, 0
        %976 = vmatprep.subr.bf16.mxu0 0
        %977 = vmatpush1.bf16.msra.mxu0 %v972
        %978 = vmatprep.subr.bf16.mxu0 0
        %979 = vmatpush1.bf16.msra.mxu0 0
        %980 = vmatprep.subr.bf16.mxu0 0
        %981 = vmatpush1.bf16.msra.mxu0 0
        %982 = vmatprep.subr.bf16.mxu0 0
        %983 = vmatpush1.bf16.msra.mxu0 0
        %984 = vmatprep.subr.bf16.mxu0 0
        %985 = vmatpush1.bf16.msra.mxu0 0
        %986 = vmatprep.subr.bf16.mxu0 0
        %987 = vmatpush1.bf16.msra.mxu0 0
        %988 = vmatprep.subr.bf16.mxu0 0
        %989 = vmatpush1.bf16.msra.mxu0 0
        %990 = vmatprep.subr.bf16.mxu0 0
        %991 = vmatpush1.bf16.msra.mxu0 0
        %992 = vmatprep.subr.bf16.mxu0 0
        %993 = vmatpush1.bf16.msra.mxu0 0
        %994 = vmatprep.subr.bf16.mxu0 0
        %995 = vmatpush1.bf16.msra.mxu0 0
        %996 = vmatprep.subr.bf16.mxu0 0
        %997 = vmatpush1.bf16.msra.mxu0 0
        %998 = vmatprep.subr.bf16.mxu0 0
        %999 = vmatpush1.bf16.msra.mxu0 0
        %1000 = vmatprep.subr.bf16.mxu0 0
        %1001 = vmatpush1.bf16.msra.mxu0 0
        %1002 = vmatprep.subr.bf16.mxu0 0
        %1003 = vmatpush1.bf16.msra.mxu0 0
        %1004 = vmatprep.subr.bf16.mxu0 0
        %1005 = vmatpush1.bf16.msra.mxu0 0
        %1006 = vmatprep.subr.bf16.mxu0 0
        %1007 = vmatpush1.bf16.msra.mxu0 0
        %1008 = vmatprep.mubr.bf16.mxu0 0
        %1009 = vmatmul.mubr.bf16.gmra.mrb[0].mxu0 %v974
        %v1010 = vpop.f32.mrb[0].mxu0
        %v1011 = vadd.f32 0.0, %v1010
        %v1012 = vpop.f32.mrb[0].mxu0
        %v1013 = vpop.f32.mrb[0].mxu0
        %v1014 = vadd.f32 0.0, %v1013
        %v1015 = vpop.f32.mrb[0].mxu0
        %1016 = vdwg.mxu0
        %1017 = vrot.lane.b32.xlu0 %v893, 112
        %v1018 = vpop.permute.xlu0 %1017
        %1019 = vrot.lane.b32.xlu0 %v893, 48
        %v1020 = vpop.permute.xlu0 %1019
        %v1022 = vsel %vm897, %v1018, 0
        %v1025 = vsel %vm897, %v1020, 0
        %1027 = vmatprep.subr.bf16.mxu0 0
        %1028 = vmatpush1.bf16.xpose.msra.mxu0 %v1025
        %1029 = vmatprep.subr.bf16.mxu0 0
        %1030 = vmatpush1.bf16.xpose.msra.mxu0 0
        %1031 = vmatprep.subr.bf16.mxu0 0
        %1032 = vmatpush1.bf16.xpose.msra.mxu0 0
        %1033 = vmatprep.subr.bf16.mxu0 0
        %1034 = vmatpush1.bf16.xpose.msra.mxu0 0
        %1035 = vmatprep.subr.bf16.mxu0 0
        %1036 = vmatpush1.bf16.xpose.msra.mxu0 0
        %1037 = vmatprep.subr.bf16.mxu0 0
        %1038 = vmatpush1.bf16.xpose.msra.mxu0 0
        %1039 = vmatprep.subr.bf16.mxu0 0
        %1040 = vmatpush1.bf16.xpose.msra.mxu0 0
        %1041 = vmatprep.subr.bf16.mxu0 0
        %1042 = vmatpush1.bf16.xpose.msra.mxu0 0
        %1043 = vmatprep.subr.bf16.mxu0 0
        %1044 = vmatpush1.bf16.xpose.msra.mxu0 0
        %1045 = vmatprep.subr.bf16.mxu0 0
        %1046 = vmatpush1.bf16.xpose.msra.mxu0 0
        %1047 = vmatprep.subr.bf16.mxu0 0
        %1048 = vmatpush1.bf16.xpose.msra.mxu0 0
        %1049 = vmatprep.subr.bf16.mxu0 0
        %1050 = vmatpush1.bf16.xpose.msra.mxu0 0
        %1051 = vmatprep.subr.bf16.mxu0 0
        %1052 = vmatpush1.bf16.xpose.msra.mxu0 0
        %1053 = vmatprep.subr.bf16.mxu0 0
        %1054 = vmatpush1.bf16.xpose.msra.mxu0 0
        %1055 = vmatprep.subr.bf16.mxu0 0
        %1056 = vmatpush1.bf16.xpose.msra.mxu0 0
        %1057 = vmatprep.subr.bf16.mxu0 0
        %1058 = vmatpush1.bf16.xpose.msra.mxu0 0
        %1059 = vmatprep.mubr.bf16.mxu0 0
        %1060 = vmatmul.mubr.bf16.gmra.mrb[0].mxu0 %v1022
        %v1061 = vpop.f32.mrb[0].mxu0
        %v1062 = vadd.f32 0.0, %v1061
        %v1063 = vpop.f32.mrb[0].mxu0
        %v1064 = vpop.f32.mrb[0].mxu0
        %v1065 = vadd.f32 0.0, %v1064
        %v1066 = vpop.f32.mrb[0].mxu0
        %1067 = vdwg.mxu0
        %v1068 = vmul.f32 %v1062, 0.25
        %v1069 = vmul.f32 %v1065, 0.25
        %v1070 = vadd.f32 %v1068, %v762
        %v1071 = vadd.f32 %v1069, %v763
        %v1072 = vsel %vm897, %v1070, -inf
        %1073 = vmax.xlane.f32.xlu0 %v1072
        %v1074 = vpop.xlane.xlu0 %1073
        %v1075 = vsel %vm897, %v1071, -inf
        %1076 = vmax.xlane.f32.xlu0 %v1075
        %v1077 = vpop.xlane.xlu0 %1076
        %v1078 = vsub.f32 %v1070, %v1074
        %v1079 = vsub.f32 %v1071, %v1077
        %v1080 = vmul.f32 %v1078, 1.442695
        %v1081 = vpow.pop %v1080
        %v1082 = vmul.f32 %v1079, 1.442695
        %v1083 = vpow.pop %v1082
        %v1084 = vsel %vm897, %v1081, 0.0
        %1085 = vadd.xlane.f32.xlu0 %v1084
        %v1086 = vpop.xlane.xlu0 %1085
        %v1087 = vsel %vm897, %v1083, 0.0
        %1088 = vadd.xlane.f32.xlu0 %v1087
        %v1089 = vpop.xlane.xlu0 %1088
        %v1090 = vrcp.pop %v1086
        %v1091 = vrcp.pop %v1089
        %v1092 = vmul.f32 %v1081, %v1090
        %v1093 = vmul.f32 %v1083, %v1091
        %v1094 = vpack.c.bf16 %v1093, %v1092
        %1096 = vrot.lane.b32.xlu0 %v972, 112
        %v1097 = vpop.permute.xlu0 %1096
        %v1100 = vsel %vm897, %v1094, 0
        %1102 = vmatprep.subr.bf16.mxu0 0
        %1103 = vmatpush1.bf16.msra.mxu0 %v1097
        %1104 = vmatprep.subr.bf16.mxu0 0
        %1105 = vmatpush1.bf16.msra.mxu0 0
        %1106 = vmatprep.subr.bf16.mxu0 0
        %1107 = vmatpush1.bf16.msra.mxu0 0
        %1108 = vmatprep.subr.bf16.mxu0 0
        %1109 = vmatpush1.bf16.msra.mxu0 0
        %1110 = vmatprep.subr.bf16.mxu0 0
        %1111 = vmatpush1.bf16.msra.mxu0 0
        %1112 = vmatprep.subr.bf16.mxu0 0
        %1113 = vmatpush1.bf16.msra.mxu0 0
        %1114 = vmatprep.subr.bf16.mxu0 0
        %1115 = vmatpush1.bf16.msra.mxu0 0
        %1116 = vmatprep.subr.bf16.mxu0 0
        %1117 = vmatpush1.bf16.msra.mxu0 0
        %1118 = vmatprep.subr.bf16.mxu0 0
        %1119 = vmatpush1.bf16.msra.mxu0 0
        %1120 = vmatprep.subr.bf16.mxu0 0
        %1121 = vmatpush1.bf16.msra.mxu0 0
        %1122 = vmatprep.subr.bf16.mxu0 0
        %1123 = vmatpush1.bf16.msra.mxu0 0
        %1124 = vmatprep.subr.bf16.mxu0 0
        %1125 = vmatpush1.bf16.msra.mxu0 0
        %1126 = vmatprep.subr.bf16.mxu0 0
        %1127 = vmatpush1.bf16.msra.mxu0 0
        %1128 = vmatprep.subr.bf16.mxu0 0
        %1129 = vmatpush1.bf16.msra.mxu0 0
        %1130 = vmatprep.subr.bf16.mxu0 0
        %1131 = vmatpush1.bf16.msra.mxu0 0
        %1132 = vmatprep.subr.bf16.mxu0 0
        %1133 = vmatpush1.bf16.msra.mxu0 0
        %1134 = vmatprep.mubr.bf16.mxu0 0
        %1135 = vmatmul.mubr.bf16.gmra.mrb[0].mxu0 %v1100
        %v1136 = vpop.f32.mrb[0].mxu0
        %v1137 = vadd.f32 0.0, %v1136
        %v1138 = vpop.f32.mrb[0].mxu0
        %v1139 = vpop.f32.mrb[0].mxu0
        %v1140 = vadd.f32 0.0, %v1139
        %v1141 = vpop.f32.mrb[0].mxu0
        %1142 = vdwg.mxu0
        %1143 = vrot.lane.b32.xlu0 %v893, 96
        %v1144 = vpop.permute.xlu0 %1143
        %1145 = vrot.lane.b32.xlu0 %v893, 32
        %v1146 = vpop.permute.xlu0 %1145
        %v1148 = vsel %vm897, %v1144, 0
        %v1151 = vsel %vm897, %v1146, 0
        %1153 = vmatprep.subr.bf16.mxu0 0
        %1154 = vmatpush1.bf16.xpose.msra.mxu0 %v1151
        %1155 = vmatprep.subr.bf16.mxu0 0
        %1156 = vmatpush1.bf16.xpose.msra.mxu0 0
        %1157 = vmatprep.subr.bf16.mxu0 0
        %1158 = vmatpush1.bf16.xpose.msra.mxu0 0
        %1159 = vmatprep.subr.bf16.mxu0 0
        %1160 = vmatpush1.bf16.xpose.msra.mxu0 0
        %1161 = vmatprep.subr.bf16.mxu0 0
        %1162 = vmatpush1.bf16.xpose.msra.mxu0 0
        %1163 = vmatprep.subr.bf16.mxu0 0
        %1164 = vmatpush1.bf16.xpose.msra.mxu0 0
        %1165 = vmatprep.subr.bf16.mxu0 0
        %1166 = vmatpush1.bf16.xpose.msra.mxu0 0
        %1167 = vmatprep.subr.bf16.mxu0 0
        %1168 = vmatpush1.bf16.xpose.msra.mxu0 0
        %1169 = vmatprep.subr.bf16.mxu0 0
        %1170 = vmatpush1.bf16.xpose.msra.mxu0 0
        %1171 = vmatprep.subr.bf16.mxu0 0
        %1172 = vmatpush1.bf16.xpose.msra.mxu0 0
        %1173 = vmatprep.subr.bf16.mxu0 0
        %1174 = vmatpush1.bf16.xpose.msra.mxu0 0
        %1175 = vmatprep.subr.bf16.mxu0 0
        %1176 = vmatpush1.bf16.xpose.msra.mxu0 0
        %1177 = vmatprep.subr.bf16.mxu0 0
        %1178 = vmatpush1.bf16.xpose.msra.mxu0 0
        %1179 = vmatprep.subr.bf16.mxu0 0
        %1180 = vmatpush1.bf16.xpose.msra.mxu0 0
        %1181 = vmatprep.subr.bf16.mxu0 0
        %1182 = vmatpush1.bf16.xpose.msra.mxu0 0
        %1183 = vmatprep.subr.bf16.mxu0 0
        %1184 = vmatpush1.bf16.xpose.msra.mxu0 0
        %1185 = vmatprep.mubr.bf16.mxu0 0
        %1186 = vmatmul.mubr.bf16.gmra.mrb[0].mxu0 %v1148
        %v1187 = vpop.f32.mrb[0].mxu0
        %v1188 = vadd.f32 0.0, %v1187
        %v1189 = vpop.f32.mrb[0].mxu0
        %v1190 = vpop.f32.mrb[0].mxu0
        %v1191 = vadd.f32 0.0, %v1190
        %v1192 = vpop.f32.mrb[0].mxu0
        %1193 = vdwg.mxu0
        %v1194 = vmul.f32 %v1188, 0.25
        %v1195 = vmul.f32 %v1191, 0.25
        %v1196 = vadd.f32 %v1194, %v762
        %v1197 = vadd.f32 %v1195, %v763
        %v1198 = vsel %vm897, %v1196, -inf
        %1199 = vmax.xlane.f32.xlu0 %v1198
        %v1200 = vpop.xlane.xlu0 %1199
        %v1201 = vsel %vm897, %v1197, -inf
        %1202 = vmax.xlane.f32.xlu0 %v1201
        %v1203 = vpop.xlane.xlu0 %1202
        %v1204 = vsub.f32 %v1196, %v1200
        %v1205 = vsub.f32 %v1197, %v1203
        %v1206 = vmul.f32 %v1204, 1.442695
        %v1207 = vpow.pop %v1206
        %v1208 = vmul.f32 %v1205, 1.442695
        %v1209 = vpow.pop %v1208
        %v1210 = vsel %vm897, %v1207, 0.0
        %1211 = vadd.xlane.f32.xlu0 %v1210
        %v1212 = vpop.xlane.xlu0 %1211
        %v1213 = vsel %vm897, %v1209, 0.0
        %1214 = vadd.xlane.f32.xlu0 %v1213
        %v1215 = vpop.xlane.xlu0 %1214
        %v1216 = vrcp.pop %v1212
        %v1217 = vrcp.pop %v1215
        %v1218 = vmul.f32 %v1207, %v1216
        %v1219 = vmul.f32 %v1209, %v1217
        %v1220 = vpack.c.bf16 %v1219, %v1218
        %1221 = vrot.lane.b32.xlu0 %v972, 96
        %v1222 = vpop.permute.xlu0 %1221
        %v1225 = vsel %vm897, %v1220, 0
        %1227 = vmatprep.subr.bf16.mxu0 0
        %1228 = vmatpush1.bf16.msra.mxu0 %v1222
        %1229 = vmatprep.subr.bf16.mxu0 0
        %1230 = vmatpush1.bf16.msra.mxu0 0
        %1231 = vmatprep.subr.bf16.mxu0 0
        %1232 = vmatpush1.bf16.msra.mxu0 0
        %1233 = vmatprep.subr.bf16.mxu0 0
        %1234 = vmatpush1.bf16.msra.mxu0 0
        %1235 = vmatprep.subr.bf16.mxu0 0
        %1236 = vmatpush1.bf16.msra.mxu0 0
        %1237 = vmatprep.subr.bf16.mxu0 0
        %1238 = vmatpush1.bf16.msra.mxu0 0
        %1239 = vmatprep.subr.bf16.mxu0 0
        %1240 = vmatpush1.bf16.msra.mxu0 0
        %1241 = vmatprep.subr.bf16.mxu0 0
        %1242 = vmatpush1.bf16.msra.mxu0 0
        %1243 = vmatprep.subr.bf16.mxu0 0
        %1244 = vmatpush1.bf16.msra.mxu0 0
        %1245 = vmatprep.subr.bf16.mxu0 0
        %1246 = vmatpush1.bf16.msra.mxu0 0
        %1247 = vmatprep.subr.bf16.mxu0 0
        %1248 = vmatpush1.bf16.msra.mxu0 0
        %1249 = vmatprep.subr.bf16.mxu0 0
        %1250 = vmatpush1.bf16.msra.mxu0 0
        %1251 = vmatprep.subr.bf16.mxu0 0
        %1252 = vmatpush1.bf16.msra.mxu0 0
        %1253 = vmatprep.subr.bf16.mxu0 0
        %1254 = vmatpush1.bf16.msra.mxu0 0
        %1255 = vmatprep.subr.bf16.mxu0 0
        %1256 = vmatpush1.bf16.msra.mxu0 0
        %1257 = vmatprep.subr.bf16.mxu0 0
        %1258 = vmatpush1.bf16.msra.mxu0 0
        %1259 = vmatprep.mubr.bf16.mxu0 0
        %1260 = vmatmul.mubr.bf16.gmra.mrb[0].mxu0 %v1225
        %v1261 = vpop.f32.mrb[0].mxu0
        %v1262 = vadd.f32 0.0, %v1261
        %v1263 = vpop.f32.mrb[0].mxu0
        %v1264 = vpop.f32.mrb[0].mxu0
        %v1265 = vadd.f32 0.0, %v1264
        %v1266 = vpop.f32.mrb[0].mxu0
        %1267 = vdwg.mxu0
        %1268 = vrot.lane.b32.xlu0 %v893, 80
        %v1269 = vpop.permute.xlu0 %1268
        %1270 = vrot.lane.b32.xlu0 %v893, 16
        %v1271 = vpop.permute.xlu0 %1270
        %v1273 = vsel %vm897, %v1269, 0
        %v1276 = vsel %vm897, %v1271, 0
        %1278 = vmatprep.subr.bf16.mxu0 0
        %1279 = vmatpush1.bf16.xpose.msra.mxu0 %v1276
        %1280 = vmatprep.subr.bf16.mxu0 0
        %1281 = vmatpush1.bf16.xpose.msra.mxu0 0
        %1282 = vmatprep.subr.bf16.mxu0 0
        %1283 = vmatpush1.bf16.xpose.msra.mxu0 0
        %1284 = vmatprep.subr.bf16.mxu0 0
        %1285 = vmatpush1.bf16.xpose.msra.mxu0 0
        %1286 = vmatprep.subr.bf16.mxu0 0
        %1287 = vmatpush1.bf16.xpose.msra.mxu0 0
        %1288 = vmatprep.subr.bf16.mxu0 0
        %1289 = vmatpush1.bf16.xpose.msra.mxu0 0
        %1290 = vmatprep.subr.bf16.mxu0 0
        %1291 = vmatpush1.bf16.xpose.msra.mxu0 0
        %1292 = vmatprep.subr.bf16.mxu0 0
        %1293 = vmatpush1.bf16.xpose.msra.mxu0 0
        %1294 = vmatprep.subr.bf16.mxu0 0
        %1295 = vmatpush1.bf16.xpose.msra.mxu0 0
        %1296 = vmatprep.subr.bf16.mxu0 0
        %1297 = vmatpush1.bf16.xpose.msra.mxu0 0
        %1298 = vmatprep.subr.bf16.mxu0 0
        %1299 = vmatpush1.bf16.xpose.msra.mxu0 0
        %1300 = vmatprep.subr.bf16.mxu0 0
        %1301 = vmatpush1.bf16.xpose.msra.mxu0 0
        %1302 = vmatprep.subr.bf16.mxu0 0
        %1303 = vmatpush1.bf16.xpose.msra.mxu0 0
        %1304 = vmatprep.subr.bf16.mxu0 0
        %1305 = vmatpush1.bf16.xpose.msra.mxu0 0
        %1306 = vmatprep.subr.bf16.mxu0 0
        %1307 = vmatpush1.bf16.xpose.msra.mxu0 0
        %1308 = vmatprep.subr.bf16.mxu0 0
        %1309 = vmatpush1.bf16.xpose.msra.mxu0 0
        %1310 = vmatprep.mubr.bf16.mxu0 0
        %1311 = vmatmul.mubr.bf16.gmra.mrb[0].mxu0 %v1273
        %v1312 = vpop.f32.mrb[0].mxu0
        %v1313 = vadd.f32 0.0, %v1312
        %v1314 = vpop.f32.mrb[0].mxu0
        %v1315 = vpop.f32.mrb[0].mxu0
        %v1316 = vadd.f32 0.0, %v1315
        %v1317 = vpop.f32.mrb[0].mxu0
        %1318 = vdwg.mxu0
        %v1319 = vmul.f32 %v1313, 0.25
        %v1320 = vmul.f32 %v1316, 0.25
        %v1321 = vadd.f32 %v1319, %v762
        %v1322 = vadd.f32 %v1320, %v763
        %v1323 = vsel %vm897, %v1321, -inf
        %1324 = vmax.xlane.f32.xlu0 %v1323
        %v1325 = vpop.xlane.xlu0 %1324
        %v1326 = vsel %vm897, %v1322, -inf
        %1327 = vmax.xlane.f32.xlu0 %v1326
        %v1328 = vpop.xlane.xlu0 %1327
        %v1329 = vsub.f32 %v1321, %v1325
        %v1330 = vsub.f32 %v1322, %v1328
        %v1331 = vmul.f32 %v1329, 1.442695
        %v1332 = vpow.pop %v1331
        %v1333 = vmul.f32 %v1330, 1.442695
        %v1334 = vpow.pop %v1333
        %v1335 = vsel %vm897, %v1332, 0.0
        %1336 = vadd.xlane.f32.xlu0 %v1335
        %v1337 = vpop.xlane.xlu0 %1336
        %v1338 = vsel %vm897, %v1334, 0.0
        %1339 = vadd.xlane.f32.xlu0 %v1338
        %v1340 = vpop.xlane.xlu0 %1339
        %v1341 = vrcp.pop %v1337
        %v1342 = vrcp.pop %v1340
        %v1343 = vmul.f32 %v1332, %v1341
        %v1344 = vmul.f32 %v1334, %v1342
        %v1345 = vpack.c.bf16 %v1344, %v1343
        %1346 = vrot.lane.b32.xlu0 %v972, 80
        %v1347 = vpop.permute.xlu0 %1346
        %v1350 = vsel %vm897, %v1345, 0
        %1352 = vmatprep.subr.bf16.mxu0 0
        %1353 = vmatpush1.bf16.msra.mxu0 %v1347
        %1354 = vmatprep.subr.bf16.mxu0 0
        %1355 = vmatpush1.bf16.msra.mxu0 0
        %1356 = vmatprep.subr.bf16.mxu0 0
        %1357 = vmatpush1.bf16.msra.mxu0 0
        %1358 = vmatprep.subr.bf16.mxu0 0
        %1359 = vmatpush1.bf16.msra.mxu0 0
        %1360 = vmatprep.subr.bf16.mxu0 0
        %1361 = vmatpush1.bf16.msra.mxu0 0
        %1362 = vmatprep.subr.bf16.mxu0 0
        %1363 = vmatpush1.bf16.msra.mxu0 0
        %1364 = vmatprep.subr.bf16.mxu0 0
        %1365 = vmatpush1.bf16.msra.mxu0 0
        %1366 = vmatprep.subr.bf16.mxu0 0
        %1367 = vmatpush1.bf16.msra.mxu0 0
        %1368 = vmatprep.subr.bf16.mxu0 0
        %1369 = vmatpush1.bf16.msra.mxu0 0
        %1370 = vmatprep.subr.bf16.mxu0 0
        %1371 = vmatpush1.bf16.msra.mxu0 0
        %1372 = vmatprep.subr.bf16.mxu0 0
        %1373 = vmatpush1.bf16.msra.mxu0 0
        %1374 = vmatprep.subr.bf16.mxu0 0
        %1375 = vmatpush1.bf16.msra.mxu0 0
        %1376 = vmatprep.subr.bf16.mxu0 0
        %1377 = vmatpush1.bf16.msra.mxu0 0
        %1378 = vmatprep.subr.bf16.mxu0 0
        %1379 = vmatpush1.bf16.msra.mxu0 0
        %1380 = vmatprep.subr.bf16.mxu0 0
        %1381 = vmatpush1.bf16.msra.mxu0 0
        %1382 = vmatprep.subr.bf16.mxu0 0
        %1383 = vmatpush1.bf16.msra.mxu0 0
        %1384 = vmatprep.mubr.bf16.mxu0 0
        %1385 = vmatmul.mubr.bf16.gmra.mrb[0].mxu0 %v1350
        %v1386 = vpop.f32.mrb[0].mxu0
        %v1387 = vadd.f32 0.0, %v1386
        %v1388 = vpop.f32.mrb[0].mxu0
        %v1389 = vpop.f32.mrb[0].mxu0
        %v1390 = vadd.f32 0.0, %v1389
        %v1391 = vpop.f32.mrb[0].mxu0
        %1392 = vdwg.mxu0
        %1395 = vrot.lane.b32.xlu0 %v1137, 16
        %v1396 = vpop.permute.xlu0 %1395
        %1397 = vrot.lane.b32.xlu0 %v1140, 16
        %v1398 = vpop.permute.xlu0 %1397
        %1403 = vrot.lane.b32.xlu0 %v1262, 32
        %v1404 = vpop.permute.xlu0 %1403
        %1405 = vrot.lane.b32.xlu0 %v1265, 32
        %v1406 = vpop.permute.xlu0 %1405
        %1411 = vrot.lane.b32.xlu0 %v1387, 48
        %v1412 = vpop.permute.xlu0 %1411
        %1413 = vrot.lane.b32.xlu0 %v1390, 48
        %v1414 = vpop.permute.xlu0 %1413
        %v1417 = vsel %vm897, %v1011, %v1396
        %v1418 = vsel %vm897, %v1014, %v1398
        %vm1419 = vcmask 261120
        %v1420 = vsel %vm1419, %v1417, %v1404
        %v1421 = vsel %vm1419, %v1418, %v1406
        %vm1422 = vcmask 392192
        %v1423 = vsel %vm1422, %v1420, %v1412
        %v1424 = vsel %vm1422, %v1421, %v1414
        %v1425 = vld [vmem:[%s579] sm:$0xff]
        %v1426 = vld [vmem:[%s579 + $0x8] sm:$0xff]
        %v1427 = vld [vmem:[%s579 + $0x10] sm:$0xff]
        %v1428 = vld [vmem:[%s579 + $0x18] sm:$0xff]
        %v1429 = vld [vmem:[%s579 + $0x20] sm:$0xff]
        %v1430 = vld [vmem:[%s579 + $0x28] sm:$0xff]
        %v1431 = vld [vmem:[%s579 + $0x30] sm:$0xff]
        %v1432 = vld [vmem:[%s579 + $0x38] sm:$0xff]
        %v1433 = vpack.c.bf16 %v1424, %v1423
        %v1434 = vpack.c.bf16 %v1426, %v1425
        %v1435 = vpack.c.bf16 %v1428, %v1427
        %v1436 = vpack.c.bf16 %v1430, %v1429
        %v1437 = vpack.c.bf16 %v1432, %v1431
        %v1439 = vsel %vm766, %v1433, 0
        %1441 = vmatprep.subr.bf16.mxu0 0
        %1442 = vmatpush1.bf16.msra.mxu0 %v1434
        %1443 = vmatprep.subr.bf16.mxu0 0
        %1444 = vmatpush1.bf16.msra.mxu0 %v1435
        %1445 = vmatprep.subr.bf16.mxu0 0
        %1446 = vmatpush1.bf16.msra.mxu0 %v1436
        %1447 = vmatprep.subr.bf16.mxu0 0
        %1448 = vmatpush1.bf16.msra.mxu0 %v1437
        %1449 = vmatprep.subr.bf16.mxu0 0
        %1450 = vmatpush1.bf16.msra.mxu0 0
        %1451 = vmatprep.subr.bf16.mxu0 0
        %1452 = vmatpush1.bf16.msra.mxu0 0
        %1453 = vmatprep.subr.bf16.mxu0 0
        %1454 = vmatpush1.bf16.msra.mxu0 0
        %1455 = vmatprep.subr.bf16.mxu0 0
        %1456 = vmatpush1.bf16.msra.mxu0 0
        %1457 = vmatprep.subr.bf16.mxu0 0
        %1458 = vmatpush1.bf16.msra.mxu0 0
        %1459 = vmatprep.subr.bf16.mxu0 0
        %1460 = vmatpush1.bf16.msra.mxu0 0
        %1461 = vmatprep.subr.bf16.mxu0 0
        %1462 = vmatpush1.bf16.msra.mxu0 0
        %1463 = vmatprep.subr.bf16.mxu0 0
        %1464 = vmatpush1.bf16.msra.mxu0 0
        %1465 = vmatprep.subr.bf16.mxu0 0
        %1466 = vmatpush1.bf16.msra.mxu0 0
        %1467 = vmatprep.subr.bf16.mxu0 0
        %1468 = vmatpush1.bf16.msra.mxu0 0
        %1469 = vmatprep.subr.bf16.mxu0 0
        %1470 = vmatpush1.bf16.msra.mxu0 0
        %1471 = vmatprep.subr.bf16.mxu0 0
        %1472 = vmatpush1.bf16.msra.mxu0 0
        %1473 = vmatprep.mubr.bf16.mxu0 0
        %1474 = vmatmul.mubr.bf16.gmra.mrb[0].mxu0 %v1439
        %v1475 = vpop.f32.mrb[0].mxu0
        %v1476 = vadd.f32 0.0, %v1475
        %v1477 = vpop.f32.mrb[0].mxu0
        %v1478 = vpop.f32.mrb[0].mxu0
        %v1479 = vadd.f32 0.0, %v1478
        %v1480 = vpop.f32.mrb[0].mxu0
        %1481 = vdwg.mxu0
        %v1482 = vadd.f32 %v760, %v1476
        %v1483 = vadd.f32 %v761, %v1479
        %v1484 = vld [vmem:[%s681] sm:$0x1]
        %v1486 = vlaneseq
        %v1487 = vshrl.u32 %v1486, 7
        %v1488 = vsub.s32 0, %v1487
        %v1489 = vrot.slane %v1484, %v1488
        %v1491 = vadd.f32 %v1482, %v1489
        %v1492 = vadd.f32 %v1483, %v1489
        %v1493 = vld [vmem:[%s684] sm:$0x1]
        %v1494 = vld [vmem:[%s687] sm:$0x1]
        %v1495 = vsel %vm766, %v1491, 0.0
        %1496 = vadd.xlane.f32.xlu0 %v1495
        %v1497 = vpop.xlane.xlu0 %1496
        %v1498 = vsel %vm766, %v1492, 0.0
        %1499 = vadd.xlane.f32.xlu0 %v1498
        %v1500 = vpop.xlane.xlu0 %1499
        %v1501 = vmul.f32 %v1497, %v773
        %v1502 = vmul.f32 %v1500, %v773
        %v1503 = vsub.f32 %v1491, %v1501
        %v1504 = vsub.f32 %v1492, %v1502
        %v1505 = vmul.f32 %v1503, %v1503
        %v1506 = vmul.f32 %v1504, %v1504
        %v1507 = vsel %vm766, %v1505, 0.0
        %1508 = vadd.xlane.f32.xlu0 %v1507
        %v1509 = vpop.xlane.xlu0 %1508
        %v1510 = vsel %vm766, %v1506, 0.0
        %1511 = vadd.xlane.f32.xlu0 %v1510
        %v1512 = vpop.xlane.xlu0 %1511
        %v1513 = vmul.f32 %v1509, %v773
        %v1514 = vmul.f32 %v1512, %v773
        %v1515 = vadd.f32 %v1513, 1e-05
        %v1516 = vadd.f32 %v1514, 1e-05
        %v1517 = vrsqrt.pop %v1515
        %v1518 = vrsqrt.pop %v1516
        %v1519 = vmul.f32 %v1503, %v1517
        %v1520 = vmul.f32 %v1504, %v1518
        %v1522 = vlaneseq
        %v1523 = vshrl.u32 %v1522, 7
        %v1524 = vsub.s32 0, %v1523
        %v1525 = vrot.slane %v1493, %v1524
        %v1527 = vmul.f32 %v1519, %v1525
        %v1528 = vmul.f32 %v1520, %v1525
        %v1530 = vlaneseq
        %v1531 = vshrl.u32 %v1530, 7
        %v1532 = vsub.s32 0, %v1531
        %v1533 = vrot.slane %v1494, %v1532
        %v1535 = vadd.f32 %v1527, %v1533
        %v1536 = vadd.f32 %v1528, %v1533
        %v1537 = vld [vmem:[%s692] sm:$0xff]
        %v1538 = vld [vmem:[%s692 + $0x8] sm:$0xff]
        %v1539 = vld [vmem:[%s692 + $0x10] sm:$0xff]
        %v1540 = vld [vmem:[%s692 + $0x18] sm:$0xff]
        %v1541 = vld [vmem:[%s692 + $0x20] sm:$0xff]
        %v1542 = vld [vmem:[%s692 + $0x28] sm:$0xff]
        %v1543 = vld [vmem:[%s692 + $0x30] sm:$0xff]
        %v1544 = vld [vmem:[%s692 + $0x38] sm:$0xff]
        %v1545 = vld [vmem:[%s692 + $0x40] sm:$0xff]
        %v1546 = vld [vmem:[%s692 + $0x48] sm:$0xff]
        %v1547 = vld [vmem:[%s692 + $0x50] sm:$0xff]
        %v1548 = vld [vmem:[%s692 + $0x58] sm:$0xff]
        %v1549 = vld [vmem:[%s692 + $0x60] sm:$0xff]
        %v1550 = vld [vmem:[%s692 + $0x68] sm:$0xff]
        %v1551 = vld [vmem:[%s692 + $0x70] sm:$0xff]
        %v1552 = vld [vmem:[%s692 + $0x78] sm:$0xff]
        %v1553 = vpack.c.bf16 %v1536, %v1535
        %v1554 = vpack.c.bf16 %v1539, %v1537
        %v1555 = vpack.c.bf16 %v1540, %v1538
        %v1556 = vpack.c.bf16 %v1543, %v1541
        %v1557 = vpack.c.bf16 %v1544, %v1542
        %v1558 = vpack.c.bf16 %v1547, %v1545
        %v1559 = vpack.c.bf16 %v1548, %v1546
        %v1560 = vpack.c.bf16 %v1551, %v1549
        %v1561 = vpack.c.bf16 %v1552, %v1550
        %v1562 = vld [vmem:[%s696] sm:$0x3]
        %v1564 = vlaneseq
        %v1565 = vshrl.u32 %v1564, 7
        %v1566 = vsub.s32 0, %v1565
        %v1567 = vrot.slane %v1562, %v1566
        %v1568 = vlaneseq
        %v1569 = vshrl.u32 %v1568, 7
        %v1570 = vsub.s32 1, %v1569
        %v1571 = vrot.slane %v1562, %v1570
        %v1575 = vsel %vm766, %v1553, 0
        %1577 = vmatprep.subr.bf16.mxu0 %v1555
        %1578 = vmatpush1.bf16.msra.mxu0 %v1554
        %1579 = vmatprep.subr.bf16.mxu0 %v1557
        %1580 = vmatpush1.bf16.msra.mxu0 %v1556
        %1581 = vmatprep.subr.bf16.mxu0 %v1559
        %1582 = vmatpush1.bf16.msra.mxu0 %v1558
        %1583 = vmatprep.subr.bf16.mxu0 %v1561
        %1584 = vmatpush1.bf16.msra.mxu0 %v1560
        %1585 = vmatprep.subr.bf16.mxu0 0
        %1586 = vmatpush1.bf16.msra.mxu0 0
        %1587 = vmatprep.subr.bf16.mxu0 0
        %1588 = vmatpush1.bf16.msra.mxu0 0
        %1589 = vmatprep.subr.bf16.mxu0 0
        %1590 = vmatpush1.bf16.msra.mxu0 0
        %1591 = vmatprep.subr.bf16.mxu0 0
        %1592 = vmatpush1.bf16.msra.mxu0 0
        %1593 = vmatprep.subr.bf16.mxu0 0
        %1594 = vmatpush1.bf16.msra.mxu0 0
        %1595 = vmatprep.subr.bf16.mxu0 0
        %1596 = vmatpush1.bf16.msra.mxu0 0
        %1597 = vmatprep.subr.bf16.mxu0 0
        %1598 = vmatpush1.bf16.msra.mxu0 0
        %1599 = vmatprep.subr.bf16.mxu0 0
        %1600 = vmatpush1.bf16.msra.mxu0 0
        %1601 = vmatprep.subr.bf16.mxu0 0
        %1602 = vmatpush1.bf16.msra.mxu0 0
        %1603 = vmatprep.subr.bf16.mxu0 0
        %1604 = vmatpush1.bf16.msra.mxu0 0
        %1605 = vmatprep.subr.bf16.mxu0 0
        %1606 = vmatpush1.bf16.msra.mxu0 0
        %1607 = vmatprep.subr.bf16.mxu0 0
        %1608 = vmatpush1.bf16.msra.mxu0 0
        %1609 = vmatprep.mubr.bf16.mxu0 0
        %1610 = vmatmul.mubr.bf16.gmra.mrb[0].mxu0 %v1575
        %v1611 = vpop.f32.mrb[0].mxu0
        %v1612 = vadd.f32 %v1567, %v1611
        %v1613 = vpop.f32.mrb[0].mxu0
        %v1614 = vadd.f32 %v1571, %v1613
        %v1615 = vpop.f32.mrb[0].mxu0
        %v1616 = vadd.f32 %v1567, %v1615
        %v1617 = vpop.f32.mrb[0].mxu0
        %v1618 = vadd.f32 %v1571, %v1617
        %1619 = vdwg.mxu0
        %v1620 = vmul.f32 %v1612, 1.702
        %v1621 = vmul.f32 %v1614, 1.702
        %v1622 = vmul.f32 %v1616, 1.702
        %v1623 = vmul.f32 %v1618, 1.702
        %v1624 = vxor.u32 %v1620, 2147483648
        %v1625 = vxor.u32 %v1621, 2147483648
        %v1626 = vxor.u32 %v1622, 2147483648
        %v1627 = vxor.u32 %v1623, 2147483648
        %v1628 = vmul.f32 %v1624, 1.442695
        %v1629 = vpow.pop %v1628
        %v1630 = vmul.f32 %v1625, 1.442695
        %v1631 = vpow.pop %v1630
        %v1632 = vmul.f32 %v1626, 1.442695
        %v1633 = vpow.pop %v1632
        %v1634 = vmul.f32 %v1627, 1.442695
        %v1635 = vpow.pop %v1634
        %v1636 = vadd.f32 %v1629, 1.0
        %v1637 = vadd.f32 %v1631, 1.0
        %v1638 = vadd.f32 %v1633, 1.0
        %v1639 = vadd.f32 %v1635, 1.0
        %v1640 = vrcp.pop %v1636
        %v1641 = vmul.f32 1.0, %v1640
        %v1642 = vrcp.pop %v1637
        %v1643 = vmul.f32 1.0, %v1642
        %v1644 = vrcp.pop %v1638
        %v1645 = vmul.f32 1.0, %v1644
        %v1646 = vrcp.pop %v1639
        %v1647 = vmul.f32 1.0, %v1646
        %v1648 = vmul.f32 %v1612, %v1641
        %v1649 = vmul.f32 %v1614, %v1643
        %v1650 = vmul.f32 %v1616, %v1645
        %v1651 = vmul.f32 %v1618, %v1647
        %v1652 = vld [vmem:[%s701] sm:$0xff]
        %v1653 = vld [vmem:[%s701 + $0x8] sm:$0xff]
        %v1654 = vld [vmem:[%s701 + $0x10] sm:$0xff]
        %v1655 = vld [vmem:[%s701 + $0x18] sm:$0xff]
        %v1656 = vld [vmem:[%s701 + $0x20] sm:$0xff]
        %v1657 = vld [vmem:[%s701 + $0x28] sm:$0xff]
        %v1658 = vld [vmem:[%s701 + $0x30] sm:$0xff]
        %v1659 = vld [vmem:[%s701 + $0x38] sm:$0xff]
        %v1660 = vld [vmem:[%s701 + $0x40] sm:$0xff]
        %v1661 = vld [vmem:[%s701 + $0x48] sm:$0xff]
        %v1662 = vld [vmem:[%s701 + $0x50] sm:$0xff]
        %v1663 = vld [vmem:[%s701 + $0x58] sm:$0xff]
        %v1664 = vld [vmem:[%s701 + $0x60] sm:$0xff]
        %v1665 = vld [vmem:[%s701 + $0x68] sm:$0xff]
        %v1666 = vld [vmem:[%s701 + $0x70] sm:$0xff]
        %v1667 = vld [vmem:[%s701 + $0x78] sm:$0xff]
        %v1668 = vld [vmem:[%s701 + $0x80] sm:$0xff]
        %v1669 = vld [vmem:[%s701 + $0x88] sm:$0xff]
        %v1670 = vld [vmem:[%s701 + $0x90] sm:$0xff]
        %v1671 = vld [vmem:[%s701 + $0x98] sm:$0xff]
        %v1672 = vld [vmem:[%s701 + $0xa0] sm:$0xff]
        %v1673 = vld [vmem:[%s701 + $0xa8] sm:$0xff]
        %v1674 = vld [vmem:[%s701 + $0xb0] sm:$0xff]
        %v1675 = vld [vmem:[%s701 + $0xb8] sm:$0xff]
        %v1676 = vld [vmem:[%s701 + $0xc0] sm:$0xff]
        %v1677 = vld [vmem:[%s701 + $0xc8] sm:$0xff]
        %v1678 = vld [vmem:[%s701 + $0xd0] sm:$0xff]
        %v1679 = vld [vmem:[%s701 + $0xd8] sm:$0xff]
        %v1680 = vld [vmem:[%s701 + $0xe0] sm:$0xff]
        %v1681 = vld [vmem:[%s701 + $0xe8] sm:$0xff]
        %v1682 = vld [vmem:[%s701 + $0xf0] sm:$0xff]
        %v1683 = vld [vmem:[%s701 + $0xf8] sm:$0xff]
        %v1684 = vpack.c.bf16 %v1650, %v1648
        %v1685 = vpack.c.bf16 %v1651, %v1649
        %v1686 = vpack.c.bf16 %v1653, %v1652
        %v1687 = vpack.c.bf16 %v1655, %v1654
        %v1688 = vpack.c.bf16 %v1657, %v1656
        %v1689 = vpack.c.bf16 %v1659, %v1658
        %v1690 = vpack.c.bf16 %v1661, %v1660
        %v1691 = vpack.c.bf16 %v1663, %v1662
        %v1692 = vpack.c.bf16 %v1665, %v1664
        %v1693 = vpack.c.bf16 %v1667, %v1666
        %v1694 = vpack.c.bf16 %v1669, %v1668
        %v1695 = vpack.c.bf16 %v1671, %v1670
        %v1696 = vpack.c.bf16 %v1673, %v1672
        %v1697 = vpack.c.bf16 %v1675, %v1674
        %v1698 = vpack.c.bf16 %v1677, %v1676
        %v1699 = vpack.c.bf16 %v1679, %v1678
        %v1700 = vpack.c.bf16 %v1681, %v1680
        %v1701 = vpack.c.bf16 %v1683, %v1682
        %1702 = vmatprep.subr.bf16.mxu0 0
        %1703 = vmatpush1.bf16.msra.mxu0 %v1686
        %1704 = vmatprep.subr.bf16.mxu0 0
        %1705 = vmatpush1.bf16.msra.mxu0 %v1687
        %1706 = vmatprep.subr.bf16.mxu0 0
        %1707 = vmatpush1.bf16.msra.mxu0 %v1688
        %1708 = vmatprep.subr.bf16.mxu0 0
        %1709 = vmatpush1.bf16.msra.mxu0 %v1689
        %1710 = vmatprep.subr.bf16.mxu0 0
        %1711 = vmatpush1.bf16.msra.mxu0 %v1690
        %1712 = vmatprep.subr.bf16.mxu0 0
        %1713 = vmatpush1.bf16.msra.mxu0 %v1691
        %1714 = vmatprep.subr.bf16.mxu0 0
        %1715 = vmatpush1.bf16.msra.mxu0 %v1692
        %1716 = vmatprep.subr.bf16.mxu0 0
        %1717 = vmatpush1.bf16.msra.mxu0 %v1693
        %1718 = vmatprep.subr.bf16.mxu0 0
        %1719 = vmatpush1.bf16.msra.mxu0 %v1694
        %1720 = vmatprep.subr.bf16.mxu0 0
        %1721 = vmatpush1.bf16.msra.mxu0 %v1695
        %1722 = vmatprep.subr.bf16.mxu0 0
        %1723 = vmatpush1.bf16.msra.mxu0 %v1696
        %1724 = vmatprep.subr.bf16.mxu0 0
        %1725 = vmatpush1.bf16.msra.mxu0 %v1697
        %1726 = vmatprep.subr.bf16.mxu0 0
        %1727 = vmatpush1.bf16.msra.mxu0 %v1698
        %1728 = vmatprep.subr.bf16.mxu0 0
        %1729 = vmatpush1.bf16.msra.mxu0 %v1699
        %1730 = vmatprep.subr.bf16.mxu0 0
        %1731 = vmatpush1.bf16.msra.mxu0 %v1700
        %1732 = vmatprep.subr.bf16.mxu0 0
        %1733 = vmatpush1.bf16.msra.mxu0 %v1701
        %1734 = vmatprep.mubr.bf16.mxu0 %v1685
        %1735 = vmatmul.mubr.bf16.gmra.mrb[0].mxu0 %v1684
        %v1736 = vpop.f32.mrb[0].mxu0
        %v1737 = vadd.f32 0.0, %v1736
        %v1738 = vpop.f32.mrb[0].mxu0
        %v1739 = vpop.f32.mrb[0].mxu0
        %v1740 = vadd.f32 0.0, %v1739
        %v1741 = vpop.f32.mrb[0].mxu0
        %1742 = vdwg.mxu0
        %v1743 = vadd.f32 %v1491, %v1737
        %v1744 = vadd.f32 %v1492, %v1740
        %v1745 = vld [vmem:[%s704] sm:$0x1]
        %v1747 = vlaneseq
        %v1748 = vshrl.u32 %v1747, 7
        %v1749 = vsub.s32 0, %v1748
        %v1750 = vrot.slane %v1745, %v1749
        %v1752 = vadd.f32 %v1743, %v1750
        %v1753 = vadd.f32 %v1744, %v1750
        %1754 = vst.msk [vmem:[#allocation2] sm:$0xff] %vm766, %v1752
        %1755 = vst.msk [vmem:[#allocation2 + $0x8] sm:$0xff] %vm766, %v1753
        %p1756 = scmp.eq.s32.totalorder %s30, 1
        // Predicated region
        $region93: #{_lambda_.6} parent=83 // pred_check
          %p1757 = pneg %p1756
        $region94: #{_lambda_.6} parent=83 // pred_check_branch
          %1759 = sbr.rel (%p1757) target = $region96
        $region95: #{_lambda_.6} parent=83 // pred_region
          %1760 = vst.msk [vmem:[%s16] sm:$0xff] %vm766, %v1752
          %1761 = vst.msk [vmem:[%s16 + $0x8] sm:$0xff] %vm766, %v1753
        $region96: #{_lambda_.6} parent=83 // pred_fallthru
          _
        // Predicated region
        $region97: #{_lambda_.6} parent=83 // pred_check
          %p1762 = pneg %p439
        $region98: #{_lambda_.6} parent=83 // pred_check_branch
          %1764 = sbr.rel (%p1762) target = $region100
        $region99: #{_lambda_.6} parent=83 // pred_region
          _
        $region100: #{_lambda_.6} parent=83 // pred_fallthru
          _
        // Predicated region
        $region101: #{_lambda_.6} parent=83 // pred_check
          %p1765 = pneg %p439
        $region102: #{_lambda_.6} parent=83 // pred_check_branch
          %1767 = sbr.rel (%p1765) target = $region104
        $region103: #{_lambda_.6} parent=83 // pred_region
          _
        $region104: #{_lambda_.6} parent=83 // pred_fallthru
          _
      $region84: #{_lambda_.6} parent=5 // pred_fallthru
        _
      %p1768 = scmp.le.s32.totalorder 2, %s25
      // Predicated region
      $region105: #{_lambda_.6} parent=5 // pred_check
        %p1769 = pneg %p1768
      $region106: #{_lambda_.6} parent=5 // pred_check_branch
        %1771 = sbr.rel (%p1769) target = $region108
      $region107: #{_lambda_.6} parent=5 // pred_region
        %s1772 = ssub.s32 %s25, 2
      $region108: #{_lambda_.6} parent=5 // pred_fallthru
        _
    $region6: #{_lambda_.6} parent=1 // loop_footer
      %s29 = sadd.s32 1, %s25
    $region7: #{_lambda_.6} parent=1 // loop_footer_branch
      %24 = sbr.rel target = $region3
    $region8: #{_lambda_.6} parent=1 // loop_exit
      _
    %1773 = vsyncpa [#allocation4], 1
    %s1774 = scalar_lea.sflag [#allocation4], 1
    %1775 = vsyncpa %s1774, 1

// kernel: _lambda_.7
$region0: #{_lambda_.7}
  #allocation0 [shape = 'u32[]', space=smem, size = 0x4, offset = 0x4, fixed_abs, tag = 'smem constant byte address 0x4 - core index']
  #allocation1 [shape = 'u32[144,128]{1,0:T(1,128)}', space=vmem, size = 0x12000, scoped, tag = 'internal scratch']
  #allocation2 [shape = 'f32[1,1]{1,0:T(1,128)S(1)}', space=vmem, size = 0x200, scoped, tag = 'scoped memory for _lambda_.7']
  %s0 = inlined_call_operand.vmem [shape: f32[2,64], index: 0, kind: input, shape index: {}]
  %s1 = inlined_call_operand.vmem [shape: f32[4,32], index: 1, kind: input, shape index: {}]
  %s2 = inlined_call_operand.vmem [shape: f32[1,64], index: 2, kind: input, shape index: {}]
  %s3 = inlined_call_operand.vmem [shape: f32[1,64], index: 3, kind: input, shape index: {}]
  %s4 = inlined_call_operand.vmem [shape: f32[1,32], index: 4, kind: input, shape index: {}]
  %s5 = inlined_call_operand.vmem [shape: f32[1,32], index: 5, kind: input, shape index: {}]
  %s6 = inlined_call_operand.vmem [shape: f32[64,32], index: 6, kind: input, shape index: {}]
  %s7 = inlined_call_operand.vmem [shape: f32[32,32], index: 7, kind: input, shape index: {}]
  %s8 = inlined_call_operand.<no memory space> [shape: f32[1,1], index: 8, kind: input, shape index: {}]
  %s9 = inlined_call_operand.hbm [shape: f32[2,32], index: 9, kind: output, shape index: {0}]
  %s10 = inlined_call_operand.hbm [shape: f32[4,32], index: 10, kind: output, shape index: {1}]
  %s11 = inlined_call_operand.hbm [shape: f32[2,4], index: 11, kind: output, shape index: {2}]
  %12 = xla_tuple %s9, %s10, %s11
  %s13 = sld [smem:[#allocation0]]
  $region62: #{_lambda_.7} parent=0
    _
  %s15 = ssub.s32 1, %s13
  %s16 = scalar_select 0, %s15, %s13
  %v17 = vstv %s8
  %18 = vst [vmem:[#allocation2] sm:$0x1] %v17
  $region1: #{_lambda_.7} parent=0
    #allocation3 [shape = 'u8[1024]{0}', space=vmem, size = 0x400, scoped, tag = 'output window, operand 0, single buffered']
    #allocation4 [shape = 's32[1]{0}', space=sflag, size = 0x4, scoped, tag = 'scoped memory for _lambda_.7']
    #allocation5 [shape = 'u8[2048]{0}', space=vmem, size = 0x800, scoped, tag = 'output window, operand 1, single buffered']
    #allocation6 [shape = 's32[1]{0}', space=sflag, size = 0x4, scoped, tag = 'scoped memory for _lambda_.7']
    #allocation7 [shape = 'u8[1024]{0}', space=vmem, size = 0x400, scoped, tag = 'output window, operand 2, single buffered']
    %19 = vsyncpa [#allocation4], 0
    %20 = vsyncpa [#allocation6], 0
    // Predicated region
    $region2: #{_lambda_.7} parent=1 // pred_check
      _
    $region3: #{_lambda_.7} parent=1 // pred_check_branch
      %22 = sbr.rel (0) target = $region5
    $region4: #{_lambda_.7} parent=1 // pred_region
      _
    $region5: #{_lambda_.7} parent=1 // pred_fallthru
      _
    // Predicated region
    $region6: #{_lambda_.7} parent=1 // pred_check
      _
    $region7: #{_lambda_.7} parent=1 // pred_check_branch
      %24 = sbr.rel (0) target = $region9
    $region8: #{_lambda_.7} parent=1 // pred_region
      _
    $region9: #{_lambda_.7} parent=1 // pred_fallthru
      _
    // Predicated region
    $region10: #{_lambda_.7} parent=1 // pred_check
      _
    $region11: #{_lambda_.7} parent=1 // pred_check_branch
      %26 = sbr.rel (0) target = $region13
    $region12: #{_lambda_.7} parent=1 // pred_region
      _
    $region13: #{_lambda_.7} parent=1 // pred_fallthru
      _
    // Predicated region
    $region14: #{_lambda_.7} parent=1 // pred_check
      _
    $region15: #{_lambda_.7} parent=1 // pred_check_branch
      %28 = sbr.rel (0) target = $region17
    $region16: #{_lambda_.7} parent=1 // pred_region
      _
    $region17: #{_lambda_.7} parent=1 // pred_fallthru
      _
    // Predicated region
    $region18: #{_lambda_.7} parent=1 // pred_check
      _
    $region19: #{_lambda_.7} parent=1 // pred_check_branch
      %30 = sbr.rel (0) target = $region21
    $region20: #{_lambda_.7} parent=1 // pred_region
      _
    $region21: #{_lambda_.7} parent=1 // pred_fallthru
      _
    // Predicated region
    $region22: #{_lambda_.7} parent=1 // pred_check
      _
    $region23: #{_lambda_.7} parent=1 // pred_check_branch
      %32 = sbr.rel (0) target = $region25
    $region24: #{_lambda_.7} parent=1 // pred_region
      _
    $region25: #{_lambda_.7} parent=1 // pred_fallthru
      _
    // Predicated region
    $region26: #{_lambda_.7} parent=1 // pred_check
      _
    $region27: #{_lambda_.7} parent=1 // pred_check_branch
      %34 = sbr.rel (0) target = $region29
    $region28: #{_lambda_.7} parent=1 // pred_region
      _
    $region29: #{_lambda_.7} parent=1 // pred_fallthru
      _
    // Predicated region
    $region30: #{_lambda_.7} parent=1 // pred_check
      _
    $region31: #{_lambda_.7} parent=1 // pred_check_branch
      %36 = sbr.rel (0) target = $region33
    $region32: #{_lambda_.7} parent=1 // pred_region
      _
    $region33: #{_lambda_.7} parent=1 // pred_fallthru
      _
    // Predicated region
    $region34: #{_lambda_.7} parent=1 // pred_check
      _
    $region35: #{_lambda_.7} parent=1 // pred_check_branch
      %38 = sbr.rel (0) target = $region37
    $region36: #{_lambda_.7} parent=1 // pred_region
      _
    $region37: #{_lambda_.7} parent=1 // pred_fallthru
      _
    %v40 = vld [vmem:[%s0] sm:$0x3]
    %v41 = vld [vmem:[%s2] sm:$0x1]
    %v42 = vld [vmem:[%s3] sm:$0x1]
    %vm43 = vcmask 517120
    %v44 = vsel %vm43, %v40, 0.0
    %45 = vadd.xlane.f32.xlu0 %v44
    %v46 = vpop.xlane.xlu0 %45
    %v47 = vrcp.pop 64.0
    %v48 = vmul.f32 %v46, %v47
    %v49 = vsub.f32 %v40, %v48
    %v50 = vmul.f32 %v49, %v49
    %v51 = vsel %vm43, %v50, 0.0
    %52 = vadd.xlane.f32.xlu0 %v51
    %v53 = vpop.xlane.xlu0 %52
    %v54 = vmul.f32 %v53, %v47
    %v55 = vadd.f32 %v54, 1e-05
    %v56 = vrsqrt.pop %v55
    %v57 = vmul.f32 %v49, %v56
    %v59 = vlaneseq
    %v60 = vshrl.u32 %v59, 7
    %v61 = vsub.s32 0, %v60
    %v62 = vrot.slane %v41, %v61
    %v64 = vmul.f32 %v57, %v62
    %v66 = vlaneseq
    %v67 = vshrl.u32 %v66, 7
    %v68 = vsub.s32 0, %v67
    %v69 = vrot.slane %v42, %v68
    %v71 = vadd.f32 %v64, %v69
    %v72 = vld [vmem:[%s6] sm:$0xff]
    %v73 = vld [vmem:[%s6 + $0x8] sm:$0xff]
    %v74 = vld [vmem:[%s6 + $0x10] sm:$0xff]
    %v75 = vld [vmem:[%s6 + $0x18] sm:$0xff]
    %v76 = vld [vmem:[%s6 + $0x20] sm:$0xff]
    %v77 = vld [vmem:[%s6 + $0x28] sm:$0xff]
    %v78 = vld [vmem:[%s6 + $0x30] sm:$0xff]
    %v79 = vld [vmem:[%s6 + $0x38] sm:$0xff]
    %v80 = vpack.c.bf16 %v71, %v71
    %v81 = vpack.c.bf16 %v73, %v72
    %v82 = vpack.c.bf16 %v75, %v74
    %v83 = vpack.c.bf16 %v77, %v76
    %v84 = vpack.c.bf16 %v79, %v78
    %vm85 = vcmask 523264
    %v87 = vsel %vm85, %v80, 0
    %89 = vmatprep.subr.bf16.mxu0 0
    %90 = vmatpush1.bf16.msra.mxu0 %v81
    %91 = vmatprep.subr.bf16.mxu0 0
    %92 = vmatpush1.bf16.msra.mxu0 %v82
    %93 = vmatprep.subr.bf16.mxu0 0
    %94 = vmatpush1.bf16.msra.mxu0 %v83
    %95 = vmatprep.subr.bf16.mxu0 0
    %96 = vmatpush1.bf16.msra.mxu0 %v84
    %97 = vmatprep.subr.bf16.mxu0 0
    %98 = vmatpush1.bf16.msra.mxu0 0
    %99 = vmatprep.subr.bf16.mxu0 0
    %100 = vmatpush1.bf16.msra.mxu0 0
    %101 = vmatprep.subr.bf16.mxu0 0
    %102 = vmatpush1.bf16.msra.mxu0 0
    %103 = vmatprep.subr.bf16.mxu0 0
    %104 = vmatpush1.bf16.msra.mxu0 0
    %105 = vmatprep.subr.bf16.mxu0 0
    %106 = vmatpush1.bf16.msra.mxu0 0
    %107 = vmatprep.subr.bf16.mxu0 0
    %108 = vmatpush1.bf16.msra.mxu0 0
    %109 = vmatprep.subr.bf16.mxu0 0
    %110 = vmatpush1.bf16.msra.mxu0 0
    %111 = vmatprep.subr.bf16.mxu0 0
    %112 = vmatpush1.bf16.msra.mxu0 0
    %113 = vmatprep.subr.bf16.mxu0 0
    %114 = vmatpush1.bf16.msra.mxu0 0
    %115 = vmatprep.subr.bf16.mxu0 0
    %116 = vmatpush1.bf16.msra.mxu0 0
    %117 = vmatprep.subr.bf16.mxu0 0
    %118 = vmatpush1.bf16.msra.mxu0 0
    %119 = vmatprep.subr.bf16.mxu0 0
    %120 = vmatpush1.bf16.msra.mxu0 0
    %121 = vmatprep.mubr.bf16.mxu0 0
    %122 = vmatmul.mubr.bf16.gmra.mrb[0].mxu0 %v87
    %v123 = vpop.f32.mrb[0].mxu0
    %v124 = vadd.f32 0.0, %v123
    %v125 = vpop.f32.mrb[0].mxu0
    %v126 = vpop.f32.mrb[0].mxu0
    %v127 = vpop.f32.mrb[0].mxu0
    %128 = vdwg.mxu0
    %v129 = vld [vmem:[%s1] sm:$0xf]
    %v130 = vld [vmem:[%s4] sm:$0x1]
    %v131 = vld [vmem:[%s5] sm:$0x1]
    %vm132 = vcmask 257024
    %v133 = vsel %vm132, %v129, 0.0
    %134 = vadd.xlane.f32.xlu0 %v133
    %v135 = vpop.xlane.xlu0 %134
    %v136 = vrcp.pop 32.0
    %v137 = vmul.f32 %v135, %v136
    %v138 = vsub.f32 %v129, %v137
    %v139 = vmul.f32 %v138, %v138
    %v140 = vsel %vm132, %v139, 0.0
    %141 = vadd.xlane.f32.xlu0 %v140
    %v142 = vpop.xlane.xlu0 %141
    %v143 = vmul.f32 %v142, %v136
    %v144 = vadd.f32 %v143, 1e-05
    %v145 = vrsqrt.pop %v144
    %v146 = vmul.f32 %v138, %v145
    %v148 = vlaneseq
    %v149 = vshrl.u32 %v148, 7
    %v150 = vsub.s32 0, %v149
    %v151 = vrot.slane %v130, %v150
    %v153 = vmul.f32 %v146, %v151
    %v155 = vlaneseq
    %v156 = vshrl.u32 %v155, 7
    %v157 = vsub.s32 0, %v156
    %v158 = vrot.slane %v131, %v157
    %v160 = vadd.f32 %v153, %v158
    %v161 = vld [vmem:[%s7] sm:$0xff]
    %v162 = vld [vmem:[%s7 + $0x8] sm:$0xff]
    %v163 = vld [vmem:[%s7 + $0x10] sm:$0xff]
    %v164 = vld [vmem:[%s7 + $0x18] sm:$0xff]
    %v165 = vpack.c.bf16 %v160, %v160
    %v166 = vpack.c.bf16 %v162, %v161
    %v167 = vpack.c.bf16 %v164, %v163
    %vm168 = vcmask 261120
    %v170 = vsel %vm168, %v165, 0
    %172 = vmatprep.subr.bf16.mxu0 0
    %173 = vmatpush1.bf16.msra.mxu0 %v166
    %174 = vmatprep.subr.bf16.mxu0 0
    %175 = vmatpush1.bf16.msra.mxu0 %v167
    %176 = vmatprep.subr.bf16.mxu0 0
    %177 = vmatpush1.bf16.msra.mxu0 0
    %178 = vmatprep.subr.bf16.mxu0 0
    %179 = vmatpush1.bf16.msra.mxu0 0
    %180 = vmatprep.subr.bf16.mxu0 0
    %181 = vmatpush1.bf16.msra.mxu0 0
    %182 = vmatprep.subr.bf16.mxu0 0
    %183 = vmatpush1.bf16.msra.mxu0 0
    %184 = vmatprep.subr.bf16.mxu0 0
    %185 = vmatpush1.bf16.msra.mxu0 0
    %186 = vmatprep.subr.bf16.mxu0 0
    %187 = vmatpush1.bf16.msra.mxu0 0
    %188 = vmatprep.subr.bf16.mxu0 0
    %189 = vmatpush1.bf16.msra.mxu0 0
    %190 = vmatprep.subr.bf16.mxu0 0
    %191 = vmatpush1.bf16.msra.mxu0 0
    %192 = vmatprep.subr.bf16.mxu0 0
    %193 = vmatpush1.bf16.msra.mxu0 0
    %194 = vmatprep.subr.bf16.mxu0 0
    %195 = vmatpush1.bf16.msra.mxu0 0
    %196 = vmatprep.subr.bf16.mxu0 0
    %197 = vmatpush1.bf16.msra.mxu0 0
    %198 = vmatprep.subr.bf16.mxu0 0
    %199 = vmatpush1.bf16.msra.mxu0 0
    %200 = vmatprep.subr.bf16.mxu0 0
    %201 = vmatpush1.bf16.msra.mxu0 0
    %202 = vmatprep.subr.bf16.mxu0 0
    %203 = vmatpush1.bf16.msra.mxu0 0
    %204 = vmatprep.mubr.bf16.mxu0 0
    %205 = vmatmul.mubr.bf16.gmra.mrb[0].mxu0 %v170
    %v206 = vpop.f32.mrb[0].mxu0
    %v207 = vadd.f32 0.0, %v206
    %v208 = vpop.f32.mrb[0].mxu0
    %v209 = vpop.f32.mrb[0].mxu0
    %v210 = vpop.f32.mrb[0].mxu0
    %211 = vdwg.mxu0
    %v212 = vmul.f32 %v124, %v124
    %vm213 = vcmask 254976
    %v214 = vsel %vm213, %v212, 0.0
    %215 = vadd.xlane.f32.xlu0 %v214
    %v216 = vpop.xlane.xlu0 %215
    %v217 = vrsqrt.pop %v216
    %v218 = vmul.f32 %v124, %v217
    %v219 = vmul.f32 %v207, %v207
    %v220 = vsel %vm132, %v219, 0.0
    %221 = vadd.xlane.f32.xlu0 %v220
    %v222 = vpop.xlane.xlu0 %221
    %v223 = vrsqrt.pop %v222
    %v224 = vmul.f32 %v207, %v223
    %v225 = vld [vmem:[#allocation2] sm:$0x1]
    %v226 = vmul.f32 %v225, 1.442695
    %v227 = vpow.pop %v226
    %v229 = vsel %vm168, %v218, 0
    %v232 = vsel %vm168, %v224, 0
    %234 = vmatprep.subr.mxu0 0.0
    %235 = vmatpush1.xpose.msra.mxu0 %v232
    %236 = vmatprep.subr.mxu0 0.0
    %237 = vmatpush1.xpose.msra.mxu0 0.0
    %238 = vmatprep.subr.mxu0 0.0
    %239 = vmatpush1.xpose.msra.mxu0 0.0
    %240 = vmatprep.subr.mxu0 0.0
    %241 = vmatpush1.xpose.msra.mxu0 0.0
    %242 = vmatprep.subr.mxu0 0.0
    %243 = vmatpush1.xpose.msra.mxu0 0.0
    %244 = vmatprep.subr.mxu0 0.0
    %245 = vmatpush1.xpose.msra.mxu0 0.0
    %246 = vmatprep.subr.mxu0 0.0
    %247 = vmatpush1.xpose.msra.mxu0 0.0
    %248 = vmatprep.subr.mxu0 0.0
    %249 = vmatpush1.xpose.msra.mxu0 0.0
    %250 = vmatprep.subr.mxu0 0.0
    %251 = vmatpush1.xpose.msra.mxu0 0.0
    %252 = vmatprep.subr.mxu0 0.0
    %253 = vmatpush1.xpose.msra.mxu0 0.0
    %254 = vmatprep.subr.mxu0 0.0
    %255 = vmatpush1.xpose.msra.mxu0 0.0
    %256 = vmatprep.subr.mxu0 0.0
    %257 = vmatpush1.xpose.msra.mxu0 0.0
    %258 = vmatprep.subr.mxu0 0.0
    %259 = vmatpush1.xpose.msra.mxu0 0.0
    %260 = vmatprep.subr.mxu0 0.0
    %261 = vmatpush1.xpose.msra.mxu0 0.0
    %262 = vmatprep.subr.mxu0 0.0
    %263 = vmatpush1.xpose.msra.mxu0 0.0
    %264 = vmatprep.subr.mxu0 0.0
    %265 = vmatpush1.xpose.msra.mxu0 0.0
    %266 = vmatprep.subr.mxu0 0.0
    %267 = vmatpush1.xpose.msra.mxu0 0.0
    %268 = vmatprep.subr.mxu0 0.0
    %269 = vmatpush1.xpose.msra.mxu0 0.0
    %270 = vmatprep.subr.mxu0 0.0
    %271 = vmatpush1.xpose.msra.mxu0 0.0
    %272 = vmatprep.subr.mxu0 0.0
    %273 = vmatpush1.xpose.msra.mxu0 0.0
    %274 = vmatprep.subr.mxu0 0.0
    %275 = vmatpush1.xpose.msra.mxu0 0.0
    %276 = vmatprep.subr.mxu0 0.0
    %277 = vmatpush1.xpose.msra.mxu0 0.0
    %278 = vmatprep.subr.mxu0 0.0
    %279 = vmatpush1.xpose.msra.mxu0 0.0
    %280 = vmatprep.subr.mxu0 0.0
    %281 = vmatpush1.xpose.msra.mxu0 0.0
    %282 = vmatprep.subr.mxu0 0.0
    %283 = vmatpush1.xpose.msra.mxu0 0.0
    %284 = vmatprep.subr.mxu0 0.0
    %285 = vmatpush1.xpose.msra.mxu0 0.0
    %286 = vmatprep.subr.mxu0 0.0
    %287 = vmatpush1.xpose.msra.mxu0 0.0
    %288 = vmatprep.subr.mxu0 0.0
    %289 = vmatpush1.xpose.msra.mxu0 0.0
    %290 = vmatprep.subr.mxu0 0.0
    %291 = vmatpush1.xpose.msra.mxu0 0.0
    %292 = vmatprep.subr.mxu0 0.0
    %293 = vmatpush1.xpose.msra.mxu0 0.0
    %294 = vmatprep.subr.mxu0 0.0
    %295 = vmatpush1.xpose.msra.mxu0 0.0
    %296 = vmatprep.subr.mxu0 0.0
    %297 = vmatpush1.xpose.msra.mxu0 0.0
    %298 = vmatprep.mubr.f32.mxu0 0.0
    %299 = vmatmul.mubr.f32.gmra.mrb[0].mxu0 %v229
    %v300 = vpop.f32.mrb[0].mxu0
    %v301 = vadd.f32 0.0, %v300
    %v302 = vpop.f32.mrb[0].mxu0
    %303 = vdwg.mxu0
    %v305 = vlaneseq
    %v306 = vshrl.u32 %v305, 7
    %v307 = vsub.s32 0, %v306
    %v308 = vrot.slane %v227, %v307
    %309 = vset.pattern.permute.xlu0 0
    %310 = vperm.xlu0 %309, %v308
    %v311 = vpop.permute.xlu0 %310
    %v313 = vmul.f32 %v311, %v301
    %vm314 = vcmask 25600
    %315 = vst.msk [vmem:[#allocation7] sm:$0x3] %vm314, %v313
    %316 = vst.msk [vmem:[#allocation3] sm:$0x3] %vm213, %v218
    %317 = vst.msk [vmem:[#allocation5] sm:$0xf] %vm132, %v224
    // Predicated region
    $region38: #{_lambda_.7} parent=1 // pred_check
      _
    $region39: #{_lambda_.7} parent=1 // pred_check_branch
      %319 = sbr.rel (0) target = $region41
    $region40: #{_lambda_.7} parent=1 // pred_region
      %s321 = ssub.s32 32, 32
      %322 = vsyncadd [#allocation4], %s321
      %s324 = sshll.u32 [#allocation3], 4
      %s325 = int_to_ptr.vmem [resolvable:$true] %s324
      %327 = dma.vmem_to_hbm [thread:$0]  %s325, 32, %s9, [#allocation4]
    $region41: #{_lambda_.7} parent=1 // pred_fallthru
      _
    // Predicated region
    $region42: #{_lambda_.7} parent=1 // pred_check
      _
    $region43: #{_lambda_.7} parent=1 // pred_check_branch
      %329 = sbr.rel (0) target = $region45
    $region44: #{_lambda_.7} parent=1 // pred_region
      %s331 = ssub.s32 64, 64
      %332 = vsyncadd [#allocation6], %s331
      %s334 = sshll.u32 [#allocation5], 4
      %s335 = int_to_ptr.vmem [resolvable:$true] %s334
      %337 = dma.vmem_to_hbm [thread:$0]  %s335, 64, %s10, [#allocation6]
    $region45: #{_lambda_.7} parent=1 // pred_fallthru
      _
    // Predicated region
    $region46: #{_lambda_.7} parent=1 // pred_check
      _
    $region47: #{_lambda_.7} parent=1 // pred_check_branch
      %339 = sbr.rel (0) target = $region49
    $region48: #{_lambda_.7} parent=1 // pred_region
      %s341 = ssub.s32 32, 32
      %342 = vsyncadd [#allocation6], %s341
      %s344 = sshll.u32 [#allocation7], 4
      %s345 = int_to_ptr.vmem [resolvable:$true] %s344
      %347 = dma.vmem_to_hbm [thread:$0]  %s345, 32, %s11, [#allocation6]
    $region49: #{_lambda_.7} parent=1 // pred_fallthru
      _
    // Predicated region
    $region50: #{_lambda_.7} parent=1 // pred_check
      _
    $region51: #{_lambda_.7} parent=1 // pred_check_branch
      %349 = sbr.rel (0) target = $region53
    $region52: #{_lambda_.7} parent=1 // pred_region
      %350 = dma.done [#allocation4], 32
    $region53: #{_lambda_.7} parent=1 // pred_fallthru
      _
    // Predicated region
    $region54: #{_lambda_.7} parent=1 // pred_check
      _
    $region55: #{_lambda_.7} parent=1 // pred_check_branch
      %352 = sbr.rel (0) target = $region57
    $region56: #{_lambda_.7} parent=1 // pred_region
      %353 = dma.done [#allocation6], 64
    $region57: #{_lambda_.7} parent=1 // pred_fallthru
      _
    // Predicated region
    $region58: #{_lambda_.7} parent=1 // pred_check
      _
    $region59: #{_lambda_.7} parent=1 // pred_check_branch
      %355 = sbr.rel (0) target = $region61
    $region60: #{_lambda_.7} parent=1 // pred_region
      %356 = dma.done [#allocation6], 32
    $region61: #{_lambda_.7} parent=1 // pred_fallthru
      _
    %357 = vsyncpa [#allocation4], 1
    %358 = vsyncpa [#allocation6], 1

// kernel: _lambda_.4
$region0: #{_lambda_.4}
  #allocation0 [shape = 'u32[]', space=smem, size = 0x4, offset = 0x4, fixed_abs, tag = 'smem constant byte address 0x4 - core index']
  #allocation1 [shape = 'u32[144,128]{1,0:T(1,128)}', space=vmem, size = 0x12000, scoped, tag = 'internal scratch']
  #allocation2 [shape = 'f32[32,32]{1,0:T(8,128)}', space=vmem, size = 0x4000, scoped, tag = 'scratch operand']
  %s0 = inlined_call_operand.vmem [shape: f32[32,32], index: 0, kind: input, shape index: {}]
  %s1 = inlined_call_operand.vmem [shape: f32[32,32], index: 1, kind: input, shape index: {}]
  %s2 = inlined_call_operand.vmem [shape: f32[1,32], index: 2, kind: input, shape index: {}]
  %s3 = inlined_call_operand.vmem [shape: f32[1,32], index: 3, kind: input, shape index: {}]
  %s4 = inlined_call_operand.vmem [shape: f32[2,1,32], index: 4, kind: input, shape index: {}, may-alias: {4,10}]
  %s5 = inlined_call_operand.vmem [shape: f32[2,1,32], index: 5, kind: input, shape index: {}, may-alias: {5,9,11,15}]
  %s6 = inlined_call_operand.vmem [shape: f32[2,32,96], index: 6, kind: input, shape index: {}]
  %s7 = inlined_call_operand.vmem [shape: f32[2,1,96], index: 7, kind: input, shape index: {}]
  %s8 = inlined_call_operand.vmem [shape: f32[2,32,32], index: 8, kind: input, shape index: {}]
  %s9 = inlined_call_operand.vmem [shape: f32[2,1,32], index: 9, kind: input, shape index: {}, may-alias: {5,9,11,15}]
  %s10 = inlined_call_operand.vmem [shape: f32[2,1,32], index: 10, kind: input, shape index: {}, may-alias: {4,10}]
  %s11 = inlined_call_operand.vmem [shape: f32[2,1,32], index: 11, kind: input, shape index: {}, may-alias: {5,9,11,15}]
  %s12 = inlined_call_operand.vmem [shape: f32[2,32,128], index: 12, kind: input, shape index: {}]
  %s13 = inlined_call_operand.vmem [shape: f32[2,1,128], index: 13, kind: input, shape index: {}]
  %s14 = inlined_call_operand.vmem [shape: f32[2,128,32], index: 14, kind: input, shape index: {}]
  %s15 = inlined_call_operand.vmem [shape: f32[2,1,32], index: 15, kind: input, shape index: {}, may-alias: {5,9,11,15}]
  %s16 = inlined_call_operand.vmem [shape: f32[32,32], index: 16, kind: output, shape index: {}]
  %s17 = sld [smem:[#allocation0]]
  $region105: #{_lambda_.4} parent=0
    _
  %s19 = ssub.s32 1, %s17
  %s20 = scalar_select 0, %s19, %s17
  loop: start=0, step=1, limit=4
  $region2: #{_lambda_.4} parent=0 // loop_pre_header
    _
  $region3: #{_lambda_.4} parent=0 // loop_header
    %s22 = sphi 0, %s26
    %p23 = scmp.ge.s32.totalorder %s22, 4
    %s30 = sphi 0, %s30
    %s32 = sphi 0, %s30
    %s33 = sphi 0, %s32
    %s47 = sphi 0, %s33
    %s51 = sphi 0, %s51
    %s53 = sphi 0, %s51
    %s54 = sphi 0, %s53
    %s68 = sphi 0, %s54
    %s72 = sphi 0, %s72
    %s74 = sphi 0, %s72
    %s75 = sphi 0, %s74
    %s89 = sphi 0, %s75
    %s93 = sphi 0, %s93
    %s95 = sphi 0, %s93
    %s96 = sphi 0, %s95
    %s110 = sphi 0, %s96
    %s116 = sphi 0, %s118
    %s119 = sphi 0, %s116
    %s120 = sphi 0, %s119
    %s136 = sphi 0, %s120
    %s142 = sphi 0, %s144
    %s145 = sphi 0, %s142
    %s146 = sphi 0, %s145
    %s162 = sphi 0, %s146
    %s168 = sphi 0, %s170
    %s171 = sphi 0, %s168
    %s172 = sphi 0, %s171
    %s188 = sphi 0, %s172
    %s194 = sphi 0, %s196
    %s197 = sphi 0, %s194
    %s198 = sphi 0, %s197
    %s214 = sphi 0, %s198
    %s220 = sphi 0, %s222
    %s223 = sphi 0, %s220
    %s224 = sphi 0, %s223
    %s240 = sphi 0, %s224
    %s246 = sphi 0, %s248
    %s249 = sphi 0, %s246
    %s250 = sphi 0, %s249
    %s266 = sphi 0, %s250
    %s272 = sphi 0, %s274
    %s275 = sphi 0, %s272
    %s276 = sphi 0, %s275
    %s292 = sphi 0, %s276
    %s298 = sphi 0, %s300
    %s301 = sphi 0, %s298
    %s302 = sphi 0, %s301
    %s318 = sphi 0, %s302
    %s324 = sphi 0, %s326
    %s327 = sphi 0, %s324
    %s328 = sphi 0, %s327
    %s344 = sphi 0, %s328
    %s350 = sphi 0, %s352
    %s353 = sphi 0, %s350
    %s354 = sphi 0, %s353
    %s370 = sphi 0, %s354
    %s376 = sphi 0, %s378
    %s379 = sphi 0, %s376
    %s380 = sphi 0, %s379
    %s396 = sphi 0, %s380
    %s402 = sphi 0, %s404
    %s405 = sphi 0, %s402
    %s406 = sphi 0, %s405
    %s422 = sphi 0, %s406
    %s426 = sphi 0, %s426
    %s428 = sphi 0, %s426
    %s429 = sphi 0, %s428
    %s443 = sphi 0, %s429
  $region4: #{_lambda_.4} parent=0 // loop_header_branch
    %25 = sbr.rel (%p23) target = $region8
  $region5: #{_lambda_.4} parent=0 // loop_body
    %s27 = ssub.s32 %s22, 1
    %s28 = ssub.s32 %s22, 2
    %s29 = sadd.s32 %s22, 1
    %s31 = sadd.s32 %s30, 1
    %p34 = scmp.eq.s32.totalorder %s22, 1
    %p35 = scmp.ne.s32.totalorder %s30, %s32
    %p36 = scmp.eq.s32.totalorder %s22, 0
    %p37 = por %p35, %p36
    %p38 = scmp.ne.s32.totalorder %s30, %s32
    %p39 = scmp.eq.s32.totalorder %s27, 1
    %p40 = por %p38, %p39
    %p41 = scmp.ne.s32.totalorder %s32, %s33
    %p42 = scmp.eq.s32.totalorder %s27, 0
    %p43 = por %p41, %p42
    %p44 = scmp.ne.s32.totalorder %s32, %s33
    %p45 = scmp.eq.s32.totalorder %s28, 1
    %p46 = por %p44, %p45
    %p48 = scmp.ne.s32.totalorder %s33, %s47
    %p49 = scmp.eq.s32.totalorder %s28, 0
    %p50 = por %p48, %p49
    %s52 = sadd.s32 %s51, 1
    %p55 = scmp.eq.s32.totalorder %s22, 1
    %p56 = scmp.ne.s32.totalorder %s51, %s53
    %p57 = scmp.eq.s32.totalorder %s22, 0
    %p58 = por %p56, %p57
    %p59 = scmp.ne.s32.totalorder %s51, %s53
    %p60 = scmp.eq.s32.totalorder %s27, 1
    %p61 = por %p59, %p60
    %p62 = scmp.ne.s32.totalorder %s53, %s54
    %p63 = scmp.eq.s32.totalorder %s27, 0
    %p64 = por %p62, %p63
    %p65 = scmp.ne.s32.totalorder %s53, %s54
    %p66 = scmp.eq.s32.totalorder %s28, 1
    %p67 = por %p65, %p66
    %p69 = scmp.ne.s32.totalorder %s54, %s68
    %p70 = scmp.eq.s32.totalorder %s28, 0
    %p71 = por %p69, %p70
    %s73 = sadd.s32 %s72, 1
    %p76 = scmp.eq.s32.totalorder %s22, 1
    %p77 = scmp.ne.s32.totalorder %s72, %s74
    %p78 = scmp.eq.s32.totalorder %s22, 0
    %p79 = por %p77, %p78
    %p80 = scmp.ne.s32.totalorder %s72, %s74
    %p81 = scmp.eq.s32.totalorder %s27, 1
    %p82 = por %p80, %p81
    %p83 = scmp.ne.s32.totalorder %s74, %s75
    %p84 = scmp.eq.s32.totalorder %s27, 0
    %p85 = por %p83, %p84
    %p86 = scmp.ne.s32.totalorder %s74, %s75
    %p87 = scmp.eq.s32.totalorder %s28, 1
    %p88 = por %p86, %p87
    %p90 = scmp.ne.s32.totalorder %s75, %s89
    %p91 = scmp.eq.s32.totalorder %s28, 0
    %p92 = por %p90, %p91
    %s94 = sadd.s32 %s93, 1
    %p97 = scmp.eq.s32.totalorder %s22, 1
    %p98 = scmp.ne.s32.totalorder %s93, %s95
    %p99 = scmp.eq.s32.totalorder %s22, 0
    %p100 = por %p98, %p99
    %p101 = scmp.ne.s32.totalorder %s93, %s95
    %p102 = scmp.eq.s32.totalorder %s27, 1
    %p103 = por %p101, %p102
    %p104 = scmp.ne.s32.totalorder %s95, %s96
    %p105 = scmp.eq.s32.totalorder %s27, 0
    %p106 = por %p104, %p105
    %p107 = scmp.ne.s32.totalorder %s95, %s96
    %p108 = scmp.eq.s32.totalorder %s28, 1
    %p109 = por %p107, %p108
    %p111 = scmp.ne.s32.totalorder %s96, %s110
    %p112 = scmp.eq.s32.totalorder %s28, 0
    %p113 = por %p111, %p112
    %s114 = ssub.s32 %s22, %s29
    %p115 = scmp.eq.s32.totalorder %s114, 0
    %s117 = sadd.s32 %s116, 1
    %s118 = scalar_select %p115, %s116, %s117
    %p121 = pneg %p115
    %p122 = scmp.eq.s32.totalorder %s22, 1
    %p123 = por %p121, %p122
    %p124 = scmp.ne.s32.totalorder %s116, %s119
    %p125 = scmp.eq.s32.totalorder %s22, 0
    %p126 = por %p124, %p125
    %p127 = scmp.ne.s32.totalorder %s116, %s119
    %p128 = scmp.eq.s32.totalorder %s27, 1
    %p129 = por %p127, %p128
    %p130 = scmp.ne.s32.totalorder %s119, %s120
    %p131 = scmp.eq.s32.totalorder %s27, 0
    %p132 = por %p130, %p131
    %p133 = scmp.ne.s32.totalorder %s119, %s120
    %p134 = scmp.eq.s32.totalorder %s28, 1
    %p135 = por %p133, %p134
    %p137 = scmp.ne.s32.totalorder %s120, %s136
    %p138 = scmp.eq.s32.totalorder %s28, 0
    %p139 = por %p137, %p138
    %s140 = ssub.s32 %s22, %s29
    %p141 = scmp.eq.s32.totalorder %s140, 0
    %s143 = sadd.s32 %s142, 1
    %s144 = scalar_select %p141, %s142, %s143
    %p147 = pneg %p141
    %p148 = scmp.eq.s32.totalorder %s22, 1
    %p149 = por %p147, %p148
    %p150 = scmp.ne.s32.totalorder %s142, %s145
    %p151 = scmp.eq.s32.totalorder %s22, 0
    %p152 = por %p150, %p151
    %p153 = scmp.ne.s32.totalorder %s142, %s145
    %p154 = scmp.eq.s32.totalorder %s27, 1
    %p155 = por %p153, %p154
    %p156 = scmp.ne.s32.totalorder %s145, %s146
    %p157 = scmp.eq.s32.totalorder %s27, 0
    %p158 = por %p156, %p157
    %p159 = scmp.ne.s32.totalorder %s145, %s146
    %p160 = scmp.eq.s32.totalorder %s28, 1
    %p161 = por %p159, %p160
    %p163 = scmp.ne.s32.totalorder %s146, %s162
    %p164 = scmp.eq.s32.totalorder %s28, 0
    %p165 = por %p163, %p164
    %s166 = ssub.s32 %s22, %s29
    %p167 = scmp.eq.s32.totalorder %s166, 0
    %s169 = sadd.s32 %s168, 1
    %s170 = scalar_select %p167, %s168, %s169
    %p173 = pneg %p167
    %p174 = scmp.eq.s32.totalorder %s22, 1
    %p175 = por %p173, %p174
    %p176 = scmp.ne.s32.totalorder %s168, %s171
    %p177 = scmp.eq.s32.totalorder %s22, 0
    %p178 = por %p176, %p177
    %p179 = scmp.ne.s32.totalorder %s168, %s171
    %p180 = scmp.eq.s32.totalorder %s27, 1
    %p181 = por %p179, %p180
    %p182 = scmp.ne.s32.totalorder %s171, %s172
    %p183 = scmp.eq.s32.totalorder %s27, 0
    %p184 = por %p182, %p183
    %p185 = scmp.ne.s32.totalorder %s171, %s172
    %p186 = scmp.eq.s32.totalorder %s28, 1
    %p187 = por %p185, %p186
    %p189 = scmp.ne.s32.totalorder %s172, %s188
    %p190 = scmp.eq.s32.totalorder %s28, 0
    %p191 = por %p189, %p190
    %s192 = ssub.s32 %s22, %s29
    %p193 = scmp.eq.s32.totalorder %s192, 0
    %s195 = sadd.s32 %s194, 1
    %s196 = scalar_select %p193, %s194, %s195
    %p199 = pneg %p193
    %p200 = scmp.eq.s32.totalorder %s22, 1
    %p201 = por %p199, %p200
    %p202 = scmp.ne.s32.totalorder %s194, %s197
    %p203 = scmp.eq.s32.totalorder %s22, 0
    %p204 = por %p202, %p203
    %p205 = scmp.ne.s32.totalorder %s194, %s197
    %p206 = scmp.eq.s32.totalorder %s27, 1
    %p207 = por %p205, %p206
    %p208 = scmp.ne.s32.totalorder %s197, %s198
    %p209 = scmp.eq.s32.totalorder %s27, 0
    %p210 = por %p208, %p209
    %p211 = scmp.ne.s32.totalorder %s197, %s198
    %p212 = scmp.eq.s32.totalorder %s28, 1
    %p213 = por %p211, %p212
    %p215 = scmp.ne.s32.totalorder %s198, %s214
    %p216 = scmp.eq.s32.totalorder %s28, 0
    %p217 = por %p215, %p216
    %s218 = ssub.s32 %s22, %s29
    %p219 = scmp.eq.s32.totalorder %s218, 0
    %s221 = sadd.s32 %s220, 1
    %s222 = scalar_select %p219, %s220, %s221
    %p225 = pneg %p219
    %p226 = scmp.eq.s32.totalorder %s22, 1
    %p227 = por %p225, %p226
    %p228 = scmp.ne.s32.totalorder %s220, %s223
    %p229 = scmp.eq.s32.totalorder %s22, 0
    %p230 = por %p228, %p229
    %p231 = scmp.ne.s32.totalorder %s220, %s223
    %p232 = scmp.eq.s32.totalorder %s27, 1
    %p233 = por %p231, %p232
    %p234 = scmp.ne.s32.totalorder %s223, %s224
    %p235 = scmp.eq.s32.totalorder %s27, 0
    %p236 = por %p234, %p235
    %p237 = scmp.ne.s32.totalorder %s223, %s224
    %p238 = scmp.eq.s32.totalorder %s28, 1
    %p239 = por %p237, %p238
    %p241 = scmp.ne.s32.totalorder %s224, %s240
    %p242 = scmp.eq.s32.totalorder %s28, 0
    %p243 = por %p241, %p242
    %s244 = ssub.s32 %s22, %s29
    %p245 = scmp.eq.s32.totalorder %s244, 0
    %s247 = sadd.s32 %s246, 1
    %s248 = scalar_select %p245, %s246, %s247
    %p251 = pneg %p245
    %p252 = scmp.eq.s32.totalorder %s22, 1
    %p253 = por %p251, %p252
    %p254 = scmp.ne.s32.totalorder %s246, %s249
    %p255 = scmp.eq.s32.totalorder %s22, 0
    %p256 = por %p254, %p255
    %p257 = scmp.ne.s32.totalorder %s246, %s249
    %p258 = scmp.eq.s32.totalorder %s27, 1
    %p259 = por %p257, %p258
    %p260 = scmp.ne.s32.totalorder %s249, %s250
    %p261 = scmp.eq.s32.totalorder %s27, 0
    %p262 = por %p260, %p261
    %p263 = scmp.ne.s32.totalorder %s249, %s250
    %p264 = scmp.eq.s32.totalorder %s28, 1
    %p265 = por %p263, %p264
    %p267 = scmp.ne.s32.totalorder %s250, %s266
    %p268 = scmp.eq.s32.totalorder %s28, 0
    %p269 = por %p267, %p268
    %s270 = ssub.s32 %s22, %s29
    %p271 = scmp.eq.s32.totalorder %s270, 0
    %s273 = sadd.s32 %s272, 1
    %s274 = scalar_select %p271, %s272, %s273
    %p277 = pneg %p271
    %p278 = scmp.eq.s32.totalorder %s22, 1
    %p279 = por %p277, %p278
    %p280 = scmp.ne.s32.totalorder %s272, %s275
    %p281 = scmp.eq.s32.totalorder %s22, 0
    %p282 = por %p280, %p281
    %p283 = scmp.ne.s32.totalorder %s272, %s275
    %p284 = scmp.eq.s32.totalorder %s27, 1
    %p285 = por %p283, %p284
    %p286 = scmp.ne.s32.totalorder %s275, %s276
    %p287 = scmp.eq.s32.totalorder %s27, 0
    %p288 = por %p286, %p287
    %p289 = scmp.ne.s32.totalorder %s275, %s276
    %p290 = scmp.eq.s32.totalorder %s28, 1
    %p291 = por %p289, %p290
    %p293 = scmp.ne.s32.totalorder %s276, %s292
    %p294 = scmp.eq.s32.totalorder %s28, 0
    %p295 = por %p293, %p294
    %s296 = ssub.s32 %s22, %s29
    %p297 = scmp.eq.s32.totalorder %s296, 0
    %s299 = sadd.s32 %s298, 1
    %s300 = scalar_select %p297, %s298, %s299
    %p303 = pneg %p297
    %p304 = scmp.eq.s32.totalorder %s22, 1
    %p305 = por %p303, %p304
    %p306 = scmp.ne.s32.totalorder %s298, %s301
    %p307 = scmp.eq.s32.totalorder %s22, 0
    %p308 = por %p306, %p307
    %p309 = scmp.ne.s32.totalorder %s298, %s301
    %p310 = scmp.eq.s32.totalorder %s27, 1
    %p311 = por %p309, %p310
    %p312 = scmp.ne.s32.totalorder %s301, %s302
    %p313 = scmp.eq.s32.totalorder %s27, 0
    %p314 = por %p312, %p313
    %p315 = scmp.ne.s32.totalorder %s301, %s302
    %p316 = scmp.eq.s32.totalorder %s28, 1
    %p317 = por %p315, %p316
    %p319 = scmp.ne.s32.totalorder %s302, %s318
    %p320 = scmp.eq.s32.totalorder %s28, 0
    %p321 = por %p319, %p320
    %s322 = ssub.s32 %s22, %s29
    %p323 = scmp.eq.s32.totalorder %s322, 0
    %s325 = sadd.s32 %s324, 1
    %s326 = scalar_select %p323, %s324, %s325
    %p329 = pneg %p323
    %p330 = scmp.eq.s32.totalorder %s22, 1
    %p331 = por %p329, %p330
    %p332 = scmp.ne.s32.totalorder %s324, %s327
    %p333 = scmp.eq.s32.totalorder %s22, 0
    %p334 = por %p332, %p333
    %p335 = scmp.ne.s32.totalorder %s324, %s327
    %p336 = scmp.eq.s32.totalorder %s27, 1
    %p337 = por %p335, %p336
    %p338 = scmp.ne.s32.totalorder %s327, %s328
    %p339 = scmp.eq.s32.totalorder %s27, 0
    %p340 = por %p338, %p339
    %p341 = scmp.ne.s32.totalorder %s327, %s328
    %p342 = scmp.eq.s32.totalorder %s28, 1
    %p343 = por %p341, %p342
    %p345 = scmp.ne.s32.totalorder %s328, %s344
    %p346 = scmp.eq.s32.totalorder %s28, 0
    %p347 = por %p345, %p346
    %s348 = ssub.s32 %s22, %s29
    %p349 = scmp.eq.s32.totalorder %s348, 0
    %s351 = sadd.s32 %s350, 1
    %s352 = scalar_select %p349, %s350, %s351
    %p355 = pneg %p349
    %p356 = scmp.eq.s32.totalorder %s22, 1
    %p357 = por %p355, %p356
    %p358 = scmp.ne.s32.totalorder %s350, %s353
    %p359 = scmp.eq.s32.totalorder %s22, 0
    %p360 = por %p358, %p359
    %p361 = scmp.ne.s32.totalorder %s350, %s353
    %p362 = scmp.eq.s32.totalorder %s27, 1
    %p363 = por %p361, %p362
    %p364 = scmp.ne.s32.totalorder %s353, %s354
    %p365 = scmp.eq.s32.totalorder %s27, 0
    %p366 = por %p364, %p365
    %p367 = scmp.ne.s32.totalorder %s353, %s354
    %p368 = scmp.eq.s32.totalorder %s28, 1
    %p369 = por %p367, %p368
    %p371 = scmp.ne.s32.totalorder %s354, %s370
    %p372 = scmp.eq.s32.totalorder %s28, 0
    %p373 = por %p371, %p372
    %s374 = ssub.s32 %s22, %s29
    %p375 = scmp.eq.s32.totalorder %s374, 0
    %s377 = sadd.s32 %s376, 1
    %s378 = scalar_select %p375, %s376, %s377
    %p381 = pneg %p375
    %p382 = scmp.eq.s32.totalorder %s22, 1
    %p383 = por %p381, %p382
    %p384 = scmp.ne.s32.totalorder %s376, %s379
    %p385 = scmp.eq.s32.totalorder %s22, 0
    %p386 = por %p384, %p385
    %p387 = scmp.ne.s32.totalorder %s376, %s379
    %p388 = scmp.eq.s32.totalorder %s27, 1
    %p389 = por %p387, %p388
    %p390 = scmp.ne.s32.totalorder %s379, %s380
    %p391 = scmp.eq.s32.totalorder %s27, 0
    %p392 = por %p390, %p391
    %p393 = scmp.ne.s32.totalorder %s379, %s380
    %p394 = scmp.eq.s32.totalorder %s28, 1
    %p395 = por %p393, %p394
    %p397 = scmp.ne.s32.totalorder %s380, %s396
    %p398 = scmp.eq.s32.totalorder %s28, 0
    %p399 = por %p397, %p398
    %s400 = ssub.s32 %s22, %s29
    %p401 = scmp.eq.s32.totalorder %s400, 0
    %s403 = sadd.s32 %s402, 1
    %s404 = scalar_select %p401, %s402, %s403
    %p407 = pneg %p401
    %p408 = scmp.eq.s32.totalorder %s22, 1
    %p409 = por %p407, %p408
    %p410 = scmp.ne.s32.totalorder %s402, %s405
    %p411 = scmp.eq.s32.totalorder %s22, 0
    %p412 = por %p410, %p411
    %p413 = scmp.ne.s32.totalorder %s402, %s405
    %p414 = scmp.eq.s32.totalorder %s27, 1
    %p415 = por %p413, %p414
    %p416 = scmp.ne.s32.totalorder %s405, %s406
    %p417 = scmp.eq.s32.totalorder %s27, 0
    %p418 = por %p416, %p417
    %p419 = scmp.ne.s32.totalorder %s405, %s406
    %p420 = scmp.eq.s32.totalorder %s28, 1
    %p421 = por %p419, %p420
    %p423 = scmp.ne.s32.totalorder %s406, %s422
    %p424 = scmp.eq.s32.totalorder %s28, 0
    %p425 = por %p423, %p424
    %s427 = sadd.s32 %s426, 1
    %p430 = scmp.eq.s32.totalorder %s22, 1
    %p431 = scmp.ne.s32.totalorder %s426, %s428
    %p432 = scmp.eq.s32.totalorder %s22, 0
    %p433 = por %p431, %p432
    %p434 = scmp.ne.s32.totalorder %s426, %s428
    %p435 = scmp.eq.s32.totalorder %s27, 1
    %p436 = por %p434, %p435
    %p437 = scmp.ne.s32.totalorder %s428, %s429
    %p438 = scmp.eq.s32.totalorder %s27, 0
    %p439 = por %p437, %p438
    %p440 = scmp.ne.s32.totalorder %s428, %s429
    %p441 = scmp.eq.s32.totalorder %s28, 1
    %p442 = por %p440, %p441
    %p444 = scmp.ne.s32.totalorder %s429, %s443
    %p445 = scmp.eq.s32.totalorder %s28, 0
    %p446 = por %p444, %p445
    %p447 = scmp.le.s32.totalorder 1, %s22
    %p448 = scmp.lt.s32.totalorder %s22, 3
    %p449 = pnand %p447, %p448
    %p450 = pneg %p449
    // Predicated region
    $region9: #{_lambda_.4} parent=5 // pred_check
      _
    $region10: #{_lambda_.4} parent=5 // pred_check_branch
      %452 = sbr.rel (%p449) target = $region12
    $region11: #{_lambda_.4} parent=5 // pred_region
      %s453 = ssub.s32 %s22, 1
      // Predicated region
      $region13: #{_lambda_.4} parent=11 // pred_check
        %p454 = pneg %p43
      $region14: #{_lambda_.4} parent=11 // pred_check_branch
        %456 = sbr.rel (%p454) target = $region16
      $region15: #{_lambda_.4} parent=11 // pred_region
        _
      $region16: #{_lambda_.4} parent=11 // pred_fallthru
        _
      // Predicated region
      $region17: #{_lambda_.4} parent=11 // pred_check
        %p457 = pneg %p64
      $region18: #{_lambda_.4} parent=11 // pred_check_branch
        %459 = sbr.rel (%p457) target = $region20
      $region19: #{_lambda_.4} parent=11 // pred_region
        _
      $region20: #{_lambda_.4} parent=11 // pred_fallthru
        _
      // Predicated region
      $region21: #{_lambda_.4} parent=11 // pred_check
        %p460 = pneg %p85
      $region22: #{_lambda_.4} parent=11 // pred_check_branch
        %462 = sbr.rel (%p460) target = $region24
      $region23: #{_lambda_.4} parent=11 // pred_region
        _
      $region24: #{_lambda_.4} parent=11 // pred_fallthru
        _
      // Predicated region
      $region25: #{_lambda_.4} parent=11 // pred_check
        %p463 = pneg %p106
      $region26: #{_lambda_.4} parent=11 // pred_check_branch
        %465 = sbr.rel (%p463) target = $region28
      $region27: #{_lambda_.4} parent=11 // pred_region
        _
      $region28: #{_lambda_.4} parent=11 // pred_fallthru
        _
    $region12: #{_lambda_.4} parent=5 // pred_fallthru
      _
    %p466 = scmp.lt.s32.totalorder %s22, 2
    // Predicated region
    $region29: #{_lambda_.4} parent=5 // pred_check
      %p467 = pneg %p466
    $region30: #{_lambda_.4} parent=5 // pred_check_branch
      %469 = sbr.rel (%p467) target = $region32
    $region31: #{_lambda_.4} parent=5 // pred_region
      // Predicated region
      $region33: #{_lambda_.4} parent=31 // pred_check
        %p470 = pneg %p126
      $region34: #{_lambda_.4} parent=31 // pred_check_branch
        %472 = sbr.rel (%p470) target = $region36
      $region35: #{_lambda_.4} parent=31 // pred_region
        %p473 = scmp.lt.s32.totalorder %s22, 1
        %s474 = scalar_select %p473, %s22, 1
        %s475 = scalar_lea.vmem %s4, %s474
      $region36: #{_lambda_.4} parent=31 // pred_fallthru
        _
      // Predicated region
      $region37: #{_lambda_.4} parent=31 // pred_check
        %p476 = pneg %p152
      $region38: #{_lambda_.4} parent=31 // pred_check_branch
        %478 = sbr.rel (%p476) target = $region40
      $region39: #{_lambda_.4} parent=31 // pred_region
        %p479 = scmp.lt.s32.totalorder %s22, 1
        %s480 = scalar_select %p479, %s22, 1
        %s481 = scalar_lea.vmem %s5, %s480
      $region40: #{_lambda_.4} parent=31 // pred_fallthru
        _
      // Predicated region
      $region41: #{_lambda_.4} parent=31 // pred_check
        %p482 = pneg %p178
      $region42: #{_lambda_.4} parent=31 // pred_check_branch
        %484 = sbr.rel (%p482) target = $region44
      $region43: #{_lambda_.4} parent=31 // pred_region
        %p485 = scmp.lt.s32.totalorder %s22, 1
        %s486 = scalar_select %p485, %s22, 1
        %s487 = smul.addr %s486, 4
        %s488 = smul.addr %s487, 8
        %s489 = scalar_lea.vmem %s6, %s488
      $region44: #{_lambda_.4} parent=31 // pred_fallthru
        _
      // Predicated region
      $region45: #{_lambda_.4} parent=31 // pred_check
        %p490 = pneg %p204
      $region46: #{_lambda_.4} parent=31 // pred_check_branch
        %492 = sbr.rel (%p490) target = $region48
      $region47: #{_lambda_.4} parent=31 // pred_region
        %p493 = scmp.lt.s32.totalorder %s22, 1
        %s494 = scalar_select %p493, %s22, 1
        %s495 = scalar_lea.vmem %s7, %s494
      $region48: #{_lambda_.4} parent=31 // pred_fallthru
        _
      // Predicated region
      $region49: #{_lambda_.4} parent=31 // pred_check
        %p496 = pneg %p230
      $region50: #{_lambda_.4} parent=31 // pred_check_branch
        %498 = sbr.rel (%p496) target = $region52
      $region51: #{_lambda_.4} parent=31 // pred_region
        %p499 = scmp.lt.s32.totalorder %s22, 1
        %s500 = scalar_select %p499, %s22, 1
        %s501 = smul.addr %s500, 4
        %s502 = smul.addr %s501, 8
        %s503 = scalar_lea.vmem %s8, %s502
      $region52: #{_lambda_.4} parent=31 // pred_fallthru
        _
      // Predicated region
      $region53: #{_lambda_.4} parent=31 // pred_check
        %p504 = pneg %p256
      $region54: #{_lambda_.4} parent=31 // pred_check_branch
        %506 = sbr.rel (%p504) target = $region56
      $region55: #{_lambda_.4} parent=31 // pred_region
        %p507 = scmp.lt.s32.totalorder %s22, 1
        %s508 = scalar_select %p507, %s22, 1
        %s509 = scalar_lea.vmem %s9, %s508
      $region56: #{_lambda_.4} parent=31 // pred_fallthru
        _
      // Predicated region
      $region57: #{_lambda_.4} parent=31 // pred_check
        %p510 = pneg %p282
      $region58: #{_lambda_.4} parent=31 // pred_check_branch
        %512 = sbr.rel (%p510) target = $region60
      $region59: #{_lambda_.4} parent=31 // pred_region
        %p513 = scmp.lt.s32.totalorder %s22, 1
        %s514 = scalar_select %p513, %s22, 1
        %s515 = scalar_lea.vmem %s10, %s514
      $region60: #{_lambda_.4} parent=31 // pred_fallthru
        _
      // Predicated region
      $region61: #{_lambda_.4} parent=31 // pred_check
        %p516 = pneg %p308
      $region62: #{_lambda_.4} parent=31 // pred_check_branch
        %518 = sbr.rel (%p516) target = $region64
      $region63: #{_lambda_.4} parent=31 // pred_region
        %p519 = scmp.lt.s32.totalorder %s22, 1
        %s520 = scalar_select %p519, %s22, 1
        %s521 = scalar_lea.vmem %s11, %s520
      $region64: #{_lambda_.4} parent=31 // pred_fallthru
        _
      // Predicated region
      $region65: #{_lambda_.4} parent=31 // pred_check
        %p522 = pneg %p334
      $region66: #{_lambda_.4} parent=31 // pred_check_branch
        %524 = sbr.rel (%p522) target = $region68
      $region67: #{_lambda_.4} parent=31 // pred_region
        %p525 = scmp.lt.s32.totalorder %s22, 1
        %s526 = scalar_select %p525, %s22, 1
        %s527 = smul.addr %s526, 4
        %s528 = smul.addr %s527, 8
        %s529 = scalar_lea.vmem %s12, %s528
      $region68: #{_lambda_.4} parent=31 // pred_fallthru
        _
      // Predicated region
      $region69: #{_lambda_.4} parent=31 // pred_check
        %p530 = pneg %p360
      $region70: #{_lambda_.4} parent=31 // pred_check_branch
        %532 = sbr.rel (%p530) target = $region72
      $region71: #{_lambda_.4} parent=31 // pred_region
        %p533 = scmp.lt.s32.totalorder %s22, 1
        %s534 = scalar_select %p533, %s22, 1
        %s535 = scalar_lea.vmem %s13, %s534
      $region72: #{_lambda_.4} parent=31 // pred_fallthru
        _
      // Predicated region
      $region73: #{_lambda_.4} parent=31 // pred_check
        %p536 = pneg %p386
      $region74: #{_lambda_.4} parent=31 // pred_check_branch
        %538 = sbr.rel (%p536) target = $region76
      $region75: #{_lambda_.4} parent=31 // pred_region
        %p539 = scmp.lt.s32.totalorder %s22, 1
        %s540 = scalar_select %p539, %s22, 1
        %s541 = smul.addr %s540, 16
        %s542 = smul.addr %s541, 8
        %s543 = scalar_lea.vmem %s14, %s542
      $region76: #{_lambda_.4} parent=31 // pred_fallthru
        _
      // Predicated region
      $region77: #{_lambda_.4} parent=31 // pred_check
        %p544 = pneg %p412
      $region78: #{_lambda_.4} parent=31 // pred_check_branch
        %546 = sbr.rel (%p544) target = $region80
      $region79: #{_lambda_.4} parent=31 // pred_region
        %p547 = scmp.lt.s32.totalorder %s22, 1
        %s548 = scalar_select %p547, %s22, 1
        %s549 = scalar_lea.vmem %s15, %s548
      $region80: #{_lambda_.4} parent=31 // pred_fallthru
        _
    $region32: #{_lambda_.4} parent=5 // pred_fallthru
      _
    %p550 = scmp.le.s32.totalorder 1, %s22
    %p551 = scmp.lt.s32.totalorder %s22, 3
    %p552 = pnand %p550, %p551
    %p553 = pneg %p552
    // Predicated region
    $region81: #{_lambda_.4} parent=5 // pred_check
      _
    $region82: #{_lambda_.4} parent=5 // pred_check_branch
      %555 = sbr.rel (%p552) target = $region84
    $region83: #{_lambda_.4} parent=5 // pred_region
      %s556 = ssub.s32 %s22, 1
      %p557 = pneg %p43
      %p558 = pneg %p40
      %p559 = pneg %p64
      %p560 = pneg %p61
      %p561 = pneg %p85
      %p562 = pneg %p82
      %p563 = pneg %p106
      %p564 = pneg %p103
      %p565 = scmp.lt.s32.totalorder %s27, 1
      %s566 = scalar_select %p565, %s27, 1
      %s567 = scalar_lea.vmem %s4, %s566
      %p568 = pneg %p132
      %p569 = pneg %p129
      %p570 = scmp.lt.s32.totalorder %s27, 1
      %s571 = scalar_select %p570, %s27, 1
      %s572 = scalar_lea.vmem %s5, %s571
      %p573 = pneg %p158
      %p574 = pneg %p155
      %p575 = scmp.lt.s32.totalorder %s27, 1
      %s576 = scalar_select %p575, %s27, 1
      %s577 = smul.addr %s576, 4
      %s578 = smul.addr %s577, 8
      %s579 = scalar_lea.vmem %s6, %s578
      %p580 = pneg %p184
      %p581 = pneg %p181
      %p582 = scmp.lt.s32.totalorder %s27, 1
      %s583 = scalar_select %p582, %s27, 1
      %s584 = scalar_lea.vmem %s7, %s583
      %p585 = pneg %p210
      %p586 = pneg %p207
      %p587 = scmp.lt.s32.totalorder %s27, 1
      %s588 = scalar_select %p587, %s27, 1
      %s589 = smul.addr %s588, 4
      %s590 = smul.addr %s589, 8
      %s591 = scalar_lea.vmem %s8, %s590
      %p592 = pneg %p236
      %p593 = pneg %p233
      %p594 = scmp.lt.s32.totalorder %s27, 1
      %s595 = scalar_select %p594, %s27, 1
      %s596 = scalar_lea.vmem %s9, %s595
      %p597 = pneg %p262
      %p598 = pneg %p259
      %p599 = scmp.lt.s32.totalorder %s27, 1
      %s600 = scalar_select %p599, %s27, 1
      %s601 = scalar_lea.vmem %s10, %s600
      %p602 = pneg %p288
      %p603 = pneg %p285
      %p604 = scmp.lt.s32.totalorder %s27, 1
      %s605 = scalar_select %p604, %s27, 1
      %s606 = scalar_lea.vmem %s11, %s605
      %p607 = pneg %p314
      %p608 = pneg %p311
      %p609 = scmp.lt.s32.totalorder %s27, 1
      %s610 = scalar_select %p609, %s27, 1
      %s611 = smul.addr %s610, 4
      %s612 = smul.addr %s611, 8
      %s613 = scalar_lea.vmem %s12, %s612
      %p614 = pneg %p340
      %p615 = pneg %p337
      %p616 = scmp.lt.s32.totalorder %s27, 1
      %s617 = scalar_select %p616, %s27, 1
      %s618 = scalar_lea.vmem %s13, %s617
      %p619 = pneg %p366
      %p620 = pneg %p363
      %p621 = scmp.lt.s32.totalorder %s27, 1
      %s622 = scalar_select %p621, %s27, 1
      %s623 = smul.addr %s622, 16
      %s624 = smul.addr %s623, 8
      %s625 = scalar_lea.vmem %s14, %s624
      %p626 = pneg %p392
      %p627 = pneg %p389
      %p628 = scmp.lt.s32.totalorder %s27, 1
      %s629 = scalar_select %p628, %s27, 1
      %s630 = scalar_lea.vmem %s15, %s629
      %p631 = pneg %p418
      %p632 = pneg %p415
      %p633 = pneg %p439
      %p634 = pneg %p436
      %p635 = scmp.lt.s32.totalorder %s27, 1
      %s636 = scalar_select %p635, %s27, 1
      %s637 = scalar_lea.vmem %s4, %s636
      %p638 = scmp.lt.s32.totalorder %s27, 1
      %s639 = scalar_select %p638, %s27, 1
      %s640 = scalar_lea.vmem %s5, %s639
      %p641 = scmp.lt.s32.totalorder %s27, 1
      %s642 = scalar_select %p641, %s27, 1
      %s643 = smul.addr %s642, 4
      %s644 = smul.addr %s643, 8
      %s645 = scalar_lea.vmem %s6, %s644
      %p646 = scmp.lt.s32.totalorder %s27, 1
      %s647 = scalar_select %p646, %s27, 1
      %s648 = scalar_lea.vmem %s7, %s647
      %p649 = scmp.lt.s32.totalorder %s27, 1
      %s650 = scalar_select %p649, %s27, 1
      %s651 = smul.addr %s650, 4
      %s652 = smul.addr %s651, 8
      %s653 = scalar_lea.vmem %s8, %s652
      %p654 = scmp.lt.s32.totalorder %s27, 1
      %s655 = scalar_select %p654, %s27, 1
      %s656 = scalar_lea.vmem %s9, %s655
      %p657 = scmp.lt.s32.totalorder %s27, 1
      %s658 = scalar_select %p657, %s27, 1
      %s659 = scalar_lea.vmem %s10, %s658
      %p660 = scmp.lt.s32.totalorder %s27, 1
      %s661 = scalar_select %p660, %s27, 1
      %s662 = scalar_lea.vmem %s11, %s661
      %p663 = scmp.lt.s32.totalorder %s27, 1
      %s664 = scalar_select %p663, %s27, 1
      %s665 = smul.addr %s664, 4
      %s666 = smul.addr %s665, 8
      %s667 = scalar_lea.vmem %s12, %s666
      %p668 = scmp.lt.s32.totalorder %s27, 1
      %s669 = scalar_select %p668, %s27, 1
      %s670 = scalar_lea.vmem %s13, %s669
      %p671 = scmp.lt.s32.totalorder %s27, 1
      %s672 = scalar_select %p671, %s27, 1
      %s673 = smul.addr %s672, 16
      %s674 = smul.addr %s673, 8
      %s675 = scalar_lea.vmem %s14, %s674
      %p676 = scmp.lt.s32.totalorder %s27, 1
      %s677 = scalar_select %p676, %s27, 1
      %s678 = scalar_lea.vmem %s15, %s677
      %p680 = scmp.eq.s32.totalorder %s27, 0
      // Predicated region
      $region85: #{_lambda_.4} parent=83 // pred_check
        %p681 = pneg %p680
      $region86: #{_lambda_.4} parent=83 // pred_check_branch
        %683 = sbr.rel (%p681) target = $region88
      $region87: #{_lambda_.4} parent=83 // pred_region
        %v684 = vld [vmem:[%s0] sm:$0xff]
        %v685 = vld [vmem:[%s0 + $0x8] sm:$0xff]
        %v686 = vld [vmem:[%s0 + $0x10] sm:$0xff]
        %v687 = vld [vmem:[%s0 + $0x18] sm:$0xff]
        %vm688 = vcmask 261120
        %689 = vst.msk [vmem:[#allocation2] sm:$0xff] %vm688, %v684
        %690 = vst.msk [vmem:[#allocation2 + $0x8] sm:$0xff] %vm688, %v685
        %691 = vst.msk [vmem:[#allocation2 + $0x10] sm:$0xff] %vm688, %v686
        %692 = vst.msk [vmem:[#allocation2 + $0x18] sm:$0xff] %vm688, %v687
      $region88: #{_lambda_.4} parent=83 // pred_fallthru
        _
      %v693 = vld [vmem:[#allocation2] sm:$0xff]
      %v694 = vld [vmem:[#allocation2 + $0x8] sm:$0xff]
      %v695 = vld [vmem:[#allocation2 + $0x10] sm:$0xff]
      %v696 = vld [vmem:[#allocation2 + $0x18] sm:$0xff]
      %v697 = vld [vmem:[%s1] sm:$0xff]
      %v698 = vld [vmem:[%s1 + $0x8] sm:$0xff]
      %v699 = vld [vmem:[%s1 + $0x10] sm:$0xff]
      %v700 = vld [vmem:[%s1 + $0x18] sm:$0xff]
      %v701 = vld [vmem:[%s637] sm:$0x1]
      %v702 = vld [vmem:[%s640] sm:$0x1]
      %vm703 = vcmask 261120
      %v704 = vsel %vm703, %v693, 0.0
      %705 = vadd.xlane.f32.xlu0 %v704
      %v706 = vpop.xlane.xlu0 %705
      %v707 = vsel %vm703, %v694, 0.0
      %708 = vadd.xlane.f32.xlu0 %v707
      %v709 = vpop.xlane.xlu0 %708
      %v710 = vsel %vm703, %v695, 0.0
      %711 = vadd.xlane.f32.xlu0 %v710
      %v712 = vpop.xlane.xlu0 %711
      %v713 = vsel %vm703, %v696, 0.0
      %714 = vadd.xlane.f32.xlu0 %v713
      %v715 = vpop.xlane.xlu0 %714
      %v716 = vrcp.pop 32.0
      %v717 = vmul.f32 %v706, %v716
      %v718 = vmul.f32 %v709, %v716
      %v719 = vmul.f32 %v712, %v716
      %v720 = vmul.f32 %v715, %v716
      %v721 = vsub.f32 %v693, %v717
      %v722 = vsub.f32 %v694, %v718
      %v723 = vsub.f32 %v695, %v719
      %v724 = vsub.f32 %v696, %v720
      %v725 = vmul.f32 %v721, %v721
      %v726 = vmul.f32 %v722, %v722
      %v727 = vmul.f32 %v723, %v723
      %v728 = vmul.f32 %v724, %v724
      %v729 = vsel %vm703, %v725, 0.0
      %730 = vadd.xlane.f32.xlu0 %v729
      %v731 = vpop.xlane.xlu0 %730
      %v732 = vsel %vm703, %v726, 0.0
      %733 = vadd.xlane.f32.xlu0 %v732
      %v734 = vpop.xlane.xlu0 %733
      %v735 = vsel %vm703, %v727, 0.0
      %736 = vadd.xlane.f32.xlu0 %v735
      %v737 = vpop.xlane.xlu0 %736
      %v738 = vsel %vm703, %v728, 0.0
      %739 = vadd.xlane.f32.xlu0 %v738
      %v740 = vpop.xlane.xlu0 %739
      %v741 = vmul.f32 %v731, %v716
      %v742 = vmul.f32 %v734, %v716
      %v743 = vmul.f32 %v737, %v716
      %v744 = vmul.f32 %v740, %v716
      %v745 = vadd.f32 %v741, 1e-05
      %v746 = vadd.f32 %v742, 1e-05
      %v747 = vadd.f32 %v743, 1e-05
      %v748 = vadd.f32 %v744, 1e-05
      %v749 = vrsqrt.pop %v745
      %v750 = vrsqrt.pop %v746
      %v751 = vrsqrt.pop %v747
      %v752 = vrsqrt.pop %v748
      %v753 = vmul.f32 %v721, %v749
      %v754 = vmul.f32 %v722, %v750
      %v755 = vmul.f32 %v723, %v751
      %v756 = vmul.f32 %v724, %v752
      %v758 = vlaneseq
      %v759 = vshrl.u32 %v758, 7
      %v760 = vsub.s32 0, %v759
      %v761 = vrot.slane %v701, %v760
      %v763 = vmul.f32 %v753, %v761
      %v764 = vmul.f32 %v754, %v761
      %v765 = vmul.f32 %v755, %v761
      %v766 = vmul.f32 %v756, %v761
      %v768 = vlaneseq
      %v769 = vshrl.u32 %v768, 7
      %v770 = vsub.s32 0, %v769
      %v771 = vrot.slane %v702, %v770
      %v773 = vadd.f32 %v763, %v771
      %v774 = vadd.f32 %v764, %v771
      %v775 = vadd.f32 %v765, %v771
      %v776 = vadd.f32 %v766, %v771
      %v777 = vld [vmem:[%s645] sm:$0xff]
      %v778 = vld [vmem:[%s645 + $0x8] sm:$0xff]
      %v779 = vld [vmem:[%s645 + $0x10] sm:$0xff]
      %v780 = vld [vmem:[%s645 + $0x18] sm:$0xff]
      %v781 = vpack.c.bf16 %v774, %v773
      %v782 = vpack.c.bf16 %v776, %v775
      %v783 = vpack.c.bf16 %v778, %v777
      %v784 = vpack.c.bf16 %v780, %v779
      %v785 = vld [vmem:[%s648] sm:$0x1]
      %v787 = vlaneseq
      %v788 = vshrl.u32 %v787, 7
      %v789 = vsub.s32 0, %v788
      %v790 = vrot.slane %v785, %v789
      %v793 = vsel %vm703, %v781, 0
      %v796 = vsel %vm703, %v782, 0
      %798 = vmatprep.subr.bf16.mxu0 0
      %799 = vmatpush1.bf16.msra.mxu0 %v783
      %800 = vmatprep.subr.bf16.mxu0 0
      %801 = vmatpush1.bf16.msra.mxu0 %v784
      %802 = vmatprep.subr.bf16.mxu0 0
      %803 = vmatpush1.bf16.msra.mxu0 0
      %804 = vmatprep.subr.bf16.mxu0 0
      %805 = vmatpush1.bf16.msra.mxu0 0
      %806 = vmatprep.subr.bf16.mxu0 0
      %807 = vmatpush1.bf16.msra.mxu0 0
      %808 = vmatprep.subr.bf16.mxu0 0
      %809 = vmatpush1.bf16.msra.mxu0 0
      %810 = vmatprep.subr.bf16.mxu0 0
      %811 = vmatpush1.bf16.msra.mxu0 0
      %812 = vmatprep.subr.bf16.mxu0 0
      %813 = vmatpush1.bf16.msra.mxu0 0
      %814 = vmatprep.subr.bf16.mxu0 0
      %815 = vmatpush1.bf16.msra.mxu0 0
      %816 = vmatprep.subr.bf16.mxu0 0
      %817 = vmatpush1.bf16.msra.mxu0 0
      %818 = vmatprep.subr.bf16.mxu0 0
      %819 = vmatpush1.bf16.msra.mxu0 0
      %820 = vmatprep.subr.bf16.mxu0 0
      %821 = vmatpush1.bf16.msra.mxu0 0
      %822 = vmatprep.subr.bf16.mxu0 0
      %823 = vmatpush1.bf16.msra.mxu0 0
      %824 = vmatprep.subr.bf16.mxu0 0
      %825 = vmatpush1.bf16.msra.mxu0 0
      %826 = vmatprep.subr.bf16.mxu0 0
      %827 = vmatpush1.bf16.msra.mxu0 0
      %828 = vmatprep.subr.bf16.mxu0 0
      %829 = vmatpush1.bf16.msra.mxu0 0
      %830 = vmatprep.mubr.bf16.mxu0 0
      %831 = vmatmul.mubr.bf16.gmra.mrb[0].mxu0 %v793
      %v832 = vpop.f32.mrb[0].mxu0
      %v833 = vadd.f32 %v790, %v832
      %v834 = vpop.f32.mrb[0].mxu0
      %v835 = vpop.f32.mrb[0].mxu0
      %v836 = vadd.f32 %v790, %v835
      %v837 = vpop.f32.mrb[0].mxu0
      %838 = vmatprep.mubr.bf16.mxu0 0
      %839 = vmatmul.mubr.bf16.gmra.mrb[0].mxu0 %v796
      %v840 = vpop.f32.mrb[0].mxu0
      %v841 = vadd.f32 %v790, %v840
      %v842 = vpop.f32.mrb[0].mxu0
      %v843 = vpop.f32.mrb[0].mxu0
      %v844 = vadd.f32 %v790, %v843
      %v845 = vpop.f32.mrb[0].mxu0
      %846 = vdwg.mxu0
      %v847 = vpack.c.bf16 %v836, %v833
      %v848 = vpack.c.bf16 %v844, %v841
      %851 = vrot.lane.b32.xlu0 %v847, 96
      %v852 = vpop.permute.xlu0 %851
      %853 = vrot.lane.b32.xlu0 %v848, 96
      %v854 = vpop.permute.xlu0 %853
      %vm855 = vcmask 64512
      %v857 = vsel %vm855, %v847, 0
      %v860 = vsel %vm855, %v848, 0
      %v863 = vsel %vm855, %v852, 0
      %v866 = vsel %vm855, %v854, 0
      %868 = vmatprep.subr.bf16.mxu0 0
      %869 = vmatpush1.bf16.xpose.msra.mxu0 %v863
      %870 = vmatprep.subr.bf16.mxu0 0
      %871 = vmatpush1.bf16.xpose.msra.mxu0 %v866
      %872 = vmatprep.subr.bf16.mxu0 0
      %873 = vmatpush1.bf16.xpose.msra.mxu0 0
      %874 = vmatprep.subr.bf16.mxu0 0
      %875 = vmatpush1.bf16.xpose.msra.mxu0 0
      %876 = vmatprep.subr.bf16.mxu0 0
      %877 = vmatpush1.bf16.xpose.msra.mxu0 0
      %878 = vmatprep.subr.bf16.mxu0 0
      %879 = vmatpush1.bf16.xpose.msra.mxu0 0
      %880 = vmatprep.subr.bf16.mxu0 0
      %881 = vmatpush1.bf16.xpose.msra.mxu0 0
      %882 = vmatprep.subr.bf16.mxu0 0
      %883 = vmatpush1.bf16.xpose.msra.mxu0 0
      %884 = vmatprep.subr.bf16.mxu0 0
      %885 = vmatpush1.bf16.xpose.msra.mxu0 0
      %886 = vmatprep.subr.bf16.mxu0 0
      %887 = vmatpush1.bf16.xpose.msra.mxu0 0
      %888 = vmatprep.subr.bf16.mxu0 0
      %889 = vmatpush1.bf16.xpose.msra.mxu0 0
      %890 = vmatprep.subr.bf16.mxu0 0
      %891 = vmatpush1.bf16.xpose.msra.mxu0 0
      %892 = vmatprep.subr.bf16.mxu0 0
      %893 = vmatpush1.bf16.xpose.msra.mxu0 0
      %894 = vmatprep.subr.bf16.mxu0 0
      %895 = vmatpush1.bf16.xpose.msra.mxu0 0
      %896 = vmatprep.subr.bf16.mxu0 0
      %897 = vmatpush1.bf16.xpose.msra.mxu0 0
      %898 = vmatprep.subr.bf16.mxu0 0
      %899 = vmatpush1.bf16.xpose.msra.mxu0 0
      %900 = vmatprep.mubr.bf16.mxu0 0
      %901 = vmatmul.mubr.bf16.gmra.mrb[0].mxu0 %v857
      %v902 = vpop.f32.mrb[0].mxu0
      %v903 = vadd.f32 0.0, %v902
      %v904 = vpop.f32.mrb[0].mxu0
      %v905 = vpop.f32.mrb[0].mxu0
      %v906 = vadd.f32 0.0, %v905
      %v907 = vpop.f32.mrb[0].mxu0
      %908 = vmatprep.mubr.bf16.mxu0 0
      %909 = vmatmul.mubr.bf16.gmra.mrb[0].mxu0 %v860
      %v910 = vpop.f32.mrb[0].mxu0
      %v911 = vadd.f32 0.0, %v910
      %v912 = vpop.f32.mrb[0].mxu0
      %v913 = vpop.f32.mrb[0].mxu0
      %v914 = vadd.f32 0.0, %v913
      %v915 = vpop.f32.mrb[0].mxu0
      %916 = vdwg.mxu0
      %v917 = vmul.f32 %v903, 0.35355338
      %v918 = vmul.f32 %v906, 0.35355338
      %v919 = vmul.f32 %v911, 0.35355338
      %v920 = vmul.f32 %v914, 0.35355338
      %v921 = vadd.f32 %v917, %v697
      %v922 = vadd.f32 %v918, %v698
      %v923 = vadd.f32 %v919, %v699
      %v924 = vadd.f32 %v920, %v700
      %v925 = vsel %vm703, %v921, -inf
      %926 = vmax.xlane.f32.xlu0 %v925
      %v927 = vpop.xlane.xlu0 %926
      %v928 = vsel %vm703, %v922, -inf
      %929 = vmax.xlane.f32.xlu0 %v928
      %v930 = vpop.xlane.xlu0 %929
      %v931 = vsel %vm703, %v923, -inf
      %932 = vmax.xlane.f32.xlu0 %v931
      %v933 = vpop.xlane.xlu0 %932
      %v934 = vsel %vm703, %v924, -inf
      %935 = vmax.xlane.f32.xlu0 %v934
      %v936 = vpop.xlane.xlu0 %935
      %v937 = vsub.f32 %v921, %v927
      %v938 = vsub.f32 %v922, %v930
      %v939 = vsub.f32 %v923, %v933
      %v940 = vsub.f32 %v924, %v936
      %v941 = vmul.f32 %v937, 1.442695
      %v942 = vpow.pop %v941
      %v943 = vmul.f32 %v938, 1.442695
      %v944 = vpow.pop %v943
      %v945 = vmul.f32 %v939, 1.442695
      %v946 = vpow.pop %v945
      %v947 = vmul.f32 %v940, 1.442695
      %v948 = vpow.pop %v947
      %v949 = vsel %vm703, %v942, 0.0
      %950 = vadd.xlane.f32.xlu0 %v949
      %v951 = vpop.xlane.xlu0 %950
      %v952 = vsel %vm703, %v944, 0.0
      %953 = vadd.xlane.f32.xlu0 %v952
      %v954 = vpop.xlane.xlu0 %953
      %v955 = vsel %vm703, %v946, 0.0
      %956 = vadd.xlane.f32.xlu0 %v955
      %v957 = vpop.xlane.xlu0 %956
      %v958 = vsel %vm703, %v948, 0.0
      %959 = vadd.xlane.f32.xlu0 %v958
      %v960 = vpop.xlane.xlu0 %959
      %v961 = vrcp.pop %v951
      %v962 = vrcp.pop %v954
      %v963 = vrcp.pop %v957
      %v964 = vrcp.pop %v960
      %v965 = vmul.f32 %v942, %v961
      %v966 = vmul.f32 %v944, %v962
      %v967 = vmul.f32 %v946, %v963
      %v968 = vmul.f32 %v948, %v964
      %v969 = vpack.c.bf16 %v966, %v965
      %v970 = vpack.c.bf16 %v968, %v967
      %971 = vrot.lane.b32.xlu0 %v847, 64
      %v972 = vpop.permute.xlu0 %971
      %973 = vrot.lane.b32.xlu0 %v848, 64
      %v974 = vpop.permute.xlu0 %973
      %v978 = vsel %vm703, %v969, 0
      %v981 = vsel %vm703, %v970, 0
      %983 = vmatprep.subr.bf16.mxu0 0
      %984 = vmatpush1.bf16.msra.mxu0 %v972
      %985 = vmatprep.subr.bf16.mxu0 0
      %986 = vmatpush1.bf16.msra.mxu0 %v974
      %987 = vmatprep.subr.bf16.mxu0 0
      %988 = vmatpush1.bf16.msra.mxu0 0
      %989 = vmatprep.subr.bf16.mxu0 0
      %990 = vmatpush1.bf16.msra.mxu0 0
      %991 = vmatprep.subr.bf16.mxu0 0
      %992 = vmatpush1.bf16.msra.mxu0 0
      %993 = vmatprep.subr.bf16.mxu0 0
      %994 = vmatpush1.bf16.msra.mxu0 0
      %995 = vmatprep.subr.bf16.mxu0 0
      %996 = vmatpush1.bf16.msra.mxu0 0
      %997 = vmatprep.subr.bf16.mxu0 0
      %998 = vmatpush1.bf16.msra.mxu0 0
      %999 = vmatprep.subr.bf16.mxu0 0
      %1000 = vmatpush1.bf16.msra.mxu0 0
      %1001 = vmatprep.subr.bf16.mxu0 0
      %1002 = vmatpush1.bf16.msra.mxu0 0
      %1003 = vmatprep.subr.bf16.mxu0 0
      %1004 = vmatpush1.bf16.msra.mxu0 0
      %1005 = vmatprep.subr.bf16.mxu0 0
      %1006 = vmatpush1.bf16.msra.mxu0 0
      %1007 = vmatprep.subr.bf16.mxu0 0
      %1008 = vmatpush1.bf16.msra.mxu0 0
      %1009 = vmatprep.subr.bf16.mxu0 0
      %1010 = vmatpush1.bf16.msra.mxu0 0
      %1011 = vmatprep.subr.bf16.mxu0 0
      %1012 = vmatpush1.bf16.msra.mxu0 0
      %1013 = vmatprep.subr.bf16.mxu0 0
      %1014 = vmatpush1.bf16.msra.mxu0 0
      %1015 = vmatprep.mubr.bf16.mxu0 0
      %1016 = vmatmul.mubr.bf16.gmra.mrb[0].mxu0 %v978
      %v1017 = vpop.f32.mrb[0].mxu0
      %v1018 = vadd.f32 0.0, %v1017
      %v1019 = vpop.f32.mrb[0].mxu0
      %v1020 = vpop.f32.mrb[0].mxu0
      %v1021 = vadd.f32 0.0, %v1020
      %v1022 = vpop.f32.mrb[0].mxu0
      %1023 = vmatprep.mubr.bf16.mxu0 0
      %1024 = vmatmul.mubr.bf16.gmra.mrb[0].mxu0 %v981
      %v1025 = vpop.f32.mrb[0].mxu0
      %v1026 = vadd.f32 0.0, %v1025
      %v1027 = vpop.f32.mrb[0].mxu0
      %v1028 = vpop.f32.mrb[0].mxu0
      %v1029 = vadd.f32 0.0, %v1028
      %v1030 = vpop.f32.mrb[0].mxu0
      %1031 = vdwg.mxu0
      %1032 = vrot.lane.b32.xlu0 %v847, 120
      %v1033 = vpop.permute.xlu0 %1032
      %1034 = vrot.lane.b32.xlu0 %v848, 120
      %v1035 = vpop.permute.xlu0 %1034
      %1036 = vrot.lane.b32.xlu0 %v847, 88
      %v1037 = vpop.permute.xlu0 %1036
      %1038 = vrot.lane.b32.xlu0 %v848, 88
      %v1039 = vpop.permute.xlu0 %1038
      %v1041 = vsel %vm855, %v1033, 0
      %v1044 = vsel %vm855, %v1035, 0
      %v1047 = vsel %vm855, %v1037, 0
      %v1050 = vsel %vm855, %v1039, 0
      %1052 = vmatprep.subr.bf16.mxu0 0
      %1053 = vmatpush1.bf16.xpose.msra.mxu0 %v1047
      %1054 = vmatprep.subr.bf16.mxu0 0
      %1055 = vmatpush1.bf16.xpose.msra.mxu0 %v1050
      %1056 = vmatprep.subr.bf16.mxu0 0
      %1057 = vmatpush1.bf16.xpose.msra.mxu0 0
      %1058 = vmatprep.subr.bf16.mxu0 0
      %1059 = vmatpush1.bf16.xpose.msra.mxu0 0
      %1060 = vmatprep.subr.bf16.mxu0 0
      %1061 = vmatpush1.bf16.xpose.msra.mxu0 0
      %1062 = vmatprep.subr.bf16.mxu0 0
      %1063 = vmatpush1.bf16.xpose.msra.mxu0 0
      %1064 = vmatprep.subr.bf16.mxu0 0
      %1065 = vmatpush1.bf16.xpose.msra.mxu0 0
      %1066 = vmatprep.subr.bf16.mxu0 0
      %1067 = vmatpush1.bf16.xpose.msra.mxu0 0
      %1068 = vmatprep.subr.bf16.mxu0 0
      %1069 = vmatpush1.bf16.xpose.msra.mxu0 0
      %1070 = vmatprep.subr.bf16.mxu0 0
      %1071 = vmatpush1.bf16.xpose.msra.mxu0 0
      %1072 = vmatprep.subr.bf16.mxu0 0
      %1073 = vmatpush1.bf16.xpose.msra.mxu0 0
      %1074 = vmatprep.subr.bf16.mxu0 0
      %1075 = vmatpush1.bf16.xpose.msra.mxu0 0
      %1076 = vmatprep.subr.bf16.mxu0 0
      %1077 = vmatpush1.bf16.xpose.msra.mxu0 0
      %1078 = vmatprep.subr.bf16.mxu0 0
      %1079 = vmatpush1.bf16.xpose.msra.mxu0 0
      %1080 = vmatprep.subr.bf16.mxu0 0
      %1081 = vmatpush1.bf16.xpose.msra.mxu0 0
      %1082 = vmatprep.subr.bf16.mxu0 0
      %1083 = vmatpush1.bf16.xpose.msra.mxu0 0
      %1084 = vmatprep.mubr.bf16.mxu0 0
      %1085 = vmatmul.mubr.bf16.gmra.mrb[0].mxu0 %v1041
      %v1086 = vpop.f32.mrb[0].mxu0
      %v1087 = vadd.f32 0.0, %v1086
      %v1088 = vpop.f32.mrb[0].mxu0
      %v1089 = vpop.f32.mrb[0].mxu0
      %v1090 = vadd.f32 0.0, %v1089
      %v1091 = vpop.f32.mrb[0].mxu0
      %1092 = vmatprep.mubr.bf16.mxu0 0
      %1093 = vmatmul.mubr.bf16.gmra.mrb[0].mxu0 %v1044
      %v1094 = vpop.f32.mrb[0].mxu0
      %v1095 = vadd.f32 0.0, %v1094
      %v1096 = vpop.f32.mrb[0].mxu0
      %v1097 = vpop.f32.mrb[0].mxu0
      %v1098 = vadd.f32 0.0, %v1097
      %v1099 = vpop.f32.mrb[0].mxu0
      %1100 = vdwg.mxu0
      %v1101 = vmul.f32 %v1087, 0.35355338
      %v1102 = vmul.f32 %v1090, 0.35355338
      %v1103 = vmul.f32 %v1095, 0.35355338
      %v1104 = vmul.f32 %v1098, 0.35355338
      %v1105 = vadd.f32 %v1101, %v697
      %v1106 = vadd.f32 %v1102, %v698
      %v1107 = vadd.f32 %v1103, %v699
      %v1108 = vadd.f32 %v1104, %v700
      %v1109 = vsel %vm703, %v1105, -inf
      %1110 = vmax.xlane.f32.xlu0 %v1109
      %v1111 = vpop.xlane.xlu0 %1110
      %v1112 = vsel %vm703, %v1106, -inf
      %1113 = vmax.xlane.f32.xlu0 %v1112
      %v1114 = vpop.xlane.xlu0 %1113
      %v1115 = vsel %vm703, %v1107, -inf
      %1116 = vmax.xlane.f32.xlu0 %v1115
      %v1117 = vpop.xlane.xlu0 %1116
      %v1118 = vsel %vm703, %v1108, -inf
      %1119 = vmax.xlane.f32.xlu0 %v1118
      %v1120 = vpop.xlane.xlu0 %1119
      %v1121 = vsub.f32 %v1105, %v1111
      %v1122 = vsub.f32 %v1106, %v1114
      %v1123 = vsub.f32 %v1107, %v1117
      %v1124 = vsub.f32 %v1108, %v1120
      %v1125 = vmul.f32 %v1121, 1.442695
      %v1126 = vpow.pop %v1125
      %v1127 = vmul.f32 %v1122, 1.442695
      %v1128 = vpow.pop %v1127
      %v1129 = vmul.f32 %v1123, 1.442695
      %v1130 = vpow.pop %v1129
      %v1131 = vmul.f32 %v1124, 1.442695
      %v1132 = vpow.pop %v1131
      %v1133 = vsel %vm703, %v1126, 0.0
      %1134 = vadd.xlane.f32.xlu0 %v1133
      %v1135 = vpop.xlane.xlu0 %1134
      %v1136 = vsel %vm703, %v1128, 0.0
      %1137 = vadd.xlane.f32.xlu0 %v1136
      %v1138 = vpop.xlane.xlu0 %1137
      %v1139 = vsel %vm703, %v1130, 0.0
      %1140 = vadd.xlane.f32.xlu0 %v1139
      %v1141 = vpop.xlane.xlu0 %1140
      %v1142 = vsel %vm703, %v1132, 0.0
      %1143 = vadd.xlane.f32.xlu0 %v1142
      %v1144 = vpop.xlane.xlu0 %1143
      %v1145 = vrcp.pop %v1135
      %v1146 = vrcp.pop %v1138
      %v1147 = vrcp.pop %v1141
      %v1148 = vrcp.pop %v1144
      %v1149 = vmul.f32 %v1126, %v1145
      %v1150 = vmul.f32 %v1128, %v1146
      %v1151 = vmul.f32 %v1130, %v1147
      %v1152 = vmul.f32 %v1132, %v1148
      %v1153 = vpack.c.bf16 %v1150, %v1149
      %v1154 = vpack.c.bf16 %v1152, %v1151
      %1155 = vrot.lane.b32.xlu0 %v847, 56
      %v1156 = vpop.permute.xlu0 %1155
      %1157 = vrot.lane.b32.xlu0 %v848, 56
      %v1158 = vpop.permute.xlu0 %1157
      %v1162 = vsel %vm703, %v1153, 0
      %v1165 = vsel %vm703, %v1154, 0
      %1167 = vmatprep.subr.bf16.mxu0 0
      %1168 = vmatpush1.bf16.msra.mxu0 %v1156
      %1169 = vmatprep.subr.bf16.mxu0 0
      %1170 = vmatpush1.bf16.msra.mxu0 %v1158
      %1171 = vmatprep.subr.bf16.mxu0 0
      %1172 = vmatpush1.bf16.msra.mxu0 0
      %1173 = vmatprep.subr.bf16.mxu0 0
      %1174 = vmatpush1.bf16.msra.mxu0 0
      %1175 = vmatprep.subr.bf16.mxu0 0
      %1176 = vmatpush1.bf16.msra.mxu0 0
      %1177 = vmatprep.subr.bf16.mxu0 0
      %1178 = vmatpush1.bf16.msra.mxu0 0
      %1179 = vmatprep.subr.bf16.mxu0 0
      %1180 = vmatpush1.bf16.msra.mxu0 0
      %1181 = vmatprep.subr.bf16.mxu0 0
      %1182 = vmatpush1.bf16.msra.mxu0 0
      %1183 = vmatprep.subr.bf16.mxu0 0
      %1184 = vmatpush1.bf16.msra.mxu0 0
      %1185 = vmatprep.subr.bf16.mxu0 0
      %1186 = vmatpush1.bf16.msra.mxu0 0
      %1187 = vmatprep.subr.bf16.mxu0 0
      %1188 = vmatpush1.bf16.msra.mxu0 0
      %1189 = vmatprep.subr.bf16.mxu0 0
      %1190 = vmatpush1.bf16.msra.mxu0 0
      %1191 = vmatprep.subr.bf16.mxu0 0
      %1192 = vmatpush1.bf16.msra.mxu0 0
      %1193 = vmatprep.subr.bf16.mxu0 0
      %1194 = vmatpush1.bf16.msra.mxu0 0
      %1195 = vmatprep.subr.bf16.mxu0 0
      %1196 = vmatpush1.bf16.msra.mxu0 0
      %1197 = vmatprep.subr.bf16.mxu0 0
      %1198 = vmatpush1.bf16.msra.mxu0 0
      %1199 = vmatprep.mubr.bf16.mxu0 0
      %1200 = vmatmul.mubr.bf16.gmra.mrb[0].mxu0 %v1162
      %v1201 = vpop.f32.mrb[0].mxu0
      %v1202 = vadd.f32 0.0, %v1201
      %v1203 = vpop.f32.mrb[0].mxu0
      %v1204 = vpop.f32.mrb[0].mxu0
      %v1205 = vadd.f32 0.0, %v1204
      %v1206 = vpop.f32.mrb[0].mxu0
      %1207 = vmatprep.mubr.bf16.mxu0 0
      %1208 = vmatmul.mubr.bf16.gmra.mrb[0].mxu0 %v1165
      %v1209 = vpop.f32.mrb[0].mxu0
      %v1210 = vadd.f32 0.0, %v1209
      %v1211 = vpop.f32.mrb[0].mxu0
      %v1212 = vpop.f32.mrb[0].mxu0
      %v1213 = vadd.f32 0.0, %v1212
      %v1214 = vpop.f32.mrb[0].mxu0
      %1215 = vdwg.mxu0
      %1216 = vrot.lane.b32.xlu0 %v847, 112
      %v1217 = vpop.permute.xlu0 %1216
      %1218 = vrot.lane.b32.xlu0 %v848, 112
      %v1219 = vpop.permute.xlu0 %1218
      %1220 = vrot.lane.b32.xlu0 %v847, 80
      %v1221 = vpop.permute.xlu0 %1220
      %1222 = vrot.lane.b32.xlu0 %v848, 80
      %v1223 = vpop.permute.xlu0 %1222
      %v1225 = vsel %vm855, %v1217, 0
      %v1228 = vsel %vm855, %v1219, 0
      %v1231 = vsel %vm855, %v1221, 0
      %v1234 = vsel %vm855, %v1223, 0
      %1236 = vmatprep.subr.bf16.mxu0 0
      %1237 = vmatpush1.bf16.xpose.msra.mxu0 %v1231
      %1238 = vmatprep.subr.bf16.mxu0 0
      %1239 = vmatpush1.bf16.xpose.msra.mxu0 %v1234
      %1240 = vmatprep.subr.bf16.mxu0 0
      %1241 = vmatpush1.bf16.xpose.msra.mxu0 0
      %1242 = vmatprep.subr.bf16.mxu0 0
      %1243 = vmatpush1.bf16.xpose.msra.mxu0 0
      %1244 = vmatprep.subr.bf16.mxu0 0
      %1245 = vmatpush1.bf16.xpose.msra.mxu0 0
      %1246 = vmatprep.subr.bf16.mxu0 0
      %1247 = vmatpush1.bf16.xpose.msra.mxu0 0
      %1248 = vmatprep.subr.bf16.mxu0 0
      %1249 = vmatpush1.bf16.xpose.msra.mxu0 0
      %1250 = vmatprep.subr.bf16.mxu0 0
      %1251 = vmatpush1.bf16.xpose.msra.mxu0 0
      %1252 = vmatprep.subr.bf16.mxu0 0
      %1253 = vmatpush1.bf16.xpose.msra.mxu0 0
      %1254 = vmatprep.subr.bf16.mxu0 0
      %1255 = vmatpush1.bf16.xpose.msra.mxu0 0
      %1256 = vmatprep.subr.bf16.mxu0 0
      %1257 = vmatpush1.bf16.xpose.msra.mxu0 0
      %1258 = vmatprep.subr.bf16.mxu0 0
      %1259 = vmatpush1.bf16.xpose.msra.mxu0 0
      %1260 = vmatprep.subr.bf16.mxu0 0
      %1261 = vmatpush1.bf16.xpose.msra.mxu0 0
      %1262 = vmatprep.subr.bf16.mxu0 0
      %1263 = vmatpush1.bf16.xpose.msra.mxu0 0
      %1264 = vmatprep.subr.bf16.mxu0 0
      %1265 = vmatpush1.bf16.xpose.msra.mxu0 0
      %1266 = vmatprep.subr.bf16.mxu0 0
      %1267 = vmatpush1.bf16.xpose.msra.mxu0 0
      %1268 = vmatprep.mubr.bf16.mxu0 0
      %1269 = vmatmul.mubr.bf16.gmra.mrb[0].mxu0 %v1225
      %v1270 = vpop.f32.mrb[0].mxu0
      %v1271 = vadd.f32 0.0, %v1270
      %v1272 = vpop.f32.mrb[0].mxu0
      %v1273 = vpop.f32.mrb[0].mxu0
      %v1274 = vadd.f32 0.0, %v1273
      %v1275 = vpop.f32.mrb[0].mxu0
      %1276 = vmatprep.mubr.bf16.mxu0 0
      %1277 = vmatmul.mubr.bf16.gmra.mrb[0].mxu0 %v1228
      %v1278 = vpop.f32.mrb[0].mxu0
      %v1279 = vadd.f32 0.0, %v1278
      %v1280 = vpop.f32.mrb[0].mxu0
      %v1281 = vpop.f32.mrb[0].mxu0
      %v1282 = vadd.f32 0.0, %v1281
      %v1283 = vpop.f32.mrb[0].mxu0
      %1284 = vdwg.mxu0
      %v1285 = vmul.f32 %v1271, 0.35355338
      %v1286 = vmul.f32 %v1274, 0.35355338
      %v1287 = vmul.f32 %v1279, 0.35355338
      %v1288 = vmul.f32 %v1282, 0.35355338
      %v1289 = vadd.f32 %v1285, %v697
      %v1290 = vadd.f32 %v1286, %v698
      %v1291 = vadd.f32 %v1287, %v699
      %v1292 = vadd.f32 %v1288, %v700
      %v1293 = vsel %vm703, %v1289, -inf
      %1294 = vmax.xlane.f32.xlu0 %v1293
      %v1295 = vpop.xlane.xlu0 %1294
      %v1296 = vsel %vm703, %v1290, -inf
      %1297 = vmax.xlane.f32.xlu0 %v1296
      %v1298 = vpop.xlane.xlu0 %1297
      %v1299 = vsel %vm703, %v1291, -inf
      %1300 = vmax.xlane.f32.xlu0 %v1299
      %v1301 = vpop.xlane.xlu0 %1300
      %v1302 = vsel %vm703, %v1292, -inf
      %1303 = vmax.xlane.f32.xlu0 %v1302
      %v1304 = vpop.xlane.xlu0 %1303
      %v1305 = vsub.f32 %v1289, %v1295
      %v1306 = vsub.f32 %v1290, %v1298
      %v1307 = vsub.f32 %v1291, %v1301
      %v1308 = vsub.f32 %v1292, %v1304
      %v1309 = vmul.f32 %v1305, 1.442695
      %v1310 = vpow.pop %v1309
      %v1311 = vmul.f32 %v1306, 1.442695
      %v1312 = vpow.pop %v1311
      %v1313 = vmul.f32 %v1307, 1.442695
      %v1314 = vpow.pop %v1313
      %v1315 = vmul.f32 %v1308, 1.442695
      %v1316 = vpow.pop %v1315
      %v1317 = vsel %vm703, %v1310, 0.0
      %1318 = vadd.xlane.f32.xlu0 %v1317
      %v1319 = vpop.xlane.xlu0 %1318
      %v1320 = vsel %vm703, %v1312, 0.0
      %1321 = vadd.xlane.f32.xlu0 %v1320
      %v1322 = vpop.xlane.xlu0 %1321
      %v1323 = vsel %vm703, %v1314, 0.0
      %1324 = vadd.xlane.f32.xlu0 %v1323
      %v1325 = vpop.xlane.xlu0 %1324
      %v1326 = vsel %vm703, %v1316, 0.0
      %1327 = vadd.xlane.f32.xlu0 %v1326
      %v1328 = vpop.xlane.xlu0 %1327
      %v1329 = vrcp.pop %v1319
      %v1330 = vrcp.pop %v1322
      %v1331 = vrcp.pop %v1325
      %v1332 = vrcp.pop %v1328
      %v1333 = vmul.f32 %v1310, %v1329
      %v1334 = vmul.f32 %v1312, %v1330
      %v1335 = vmul.f32 %v1314, %v1331
      %v1336 = vmul.f32 %v1316, %v1332
      %v1337 = vpack.c.bf16 %v1334, %v1333
      %v1338 = vpack.c.bf16 %v1336, %v1335
      %1339 = vrot.lane.b32.xlu0 %v847, 48
      %v1340 = vpop.permute.xlu0 %1339
      %1341 = vrot.lane.b32.xlu0 %v848, 48
      %v1342 = vpop.permute.xlu0 %1341
      %v1346 = vsel %vm703, %v1337, 0
      %v1349 = vsel %vm703, %v1338, 0
      %1351 = vmatprep.subr.bf16.mxu0 0
      %1352 = vmatpush1.bf16.msra.mxu0 %v1340
      %1353 = vmatprep.subr.bf16.mxu0 0
      %1354 = vmatpush1.bf16.msra.mxu0 %v1342
      %1355 = vmatprep.subr.bf16.mxu0 0
      %1356 = vmatpush1.bf16.msra.mxu0 0
      %1357 = vmatprep.subr.bf16.mxu0 0
      %1358 = vmatpush1.bf16.msra.mxu0 0
      %1359 = vmatprep.subr.bf16.mxu0 0
      %1360 = vmatpush1.bf16.msra.mxu0 0
      %1361 = vmatprep.subr.bf16.mxu0 0
      %1362 = vmatpush1.bf16.msra.mxu0 0
      %1363 = vmatprep.subr.bf16.mxu0 0
      %1364 = vmatpush1.bf16.msra.mxu0 0
      %1365 = vmatprep.subr.bf16.mxu0 0
      %1366 = vmatpush1.bf16.msra.mxu0 0
      %1367 = vmatprep.subr.bf16.mxu0 0
      %1368 = vmatpush1.bf16.msra.mxu0 0
      %1369 = vmatprep.subr.bf16.mxu0 0
      %1370 = vmatpush1.bf16.msra.mxu0 0
      %1371 = vmatprep.subr.bf16.mxu0 0
      %1372 = vmatpush1.bf16.msra.mxu0 0
      %1373 = vmatprep.subr.bf16.mxu0 0
      %1374 = vmatpush1.bf16.msra.mxu0 0
      %1375 = vmatprep.subr.bf16.mxu0 0
      %1376 = vmatpush1.bf16.msra.mxu0 0
      %1377 = vmatprep.subr.bf16.mxu0 0
      %1378 = vmatpush1.bf16.msra.mxu0 0
      %1379 = vmatprep.subr.bf16.mxu0 0
      %1380 = vmatpush1.bf16.msra.mxu0 0
      %1381 = vmatprep.subr.bf16.mxu0 0
      %1382 = vmatpush1.bf16.msra.mxu0 0
      %1383 = vmatprep.mubr.bf16.mxu0 0
      %1384 = vmatmul.mubr.bf16.gmra.mrb[0].mxu0 %v1346
      %v1385 = vpop.f32.mrb[0].mxu0
      %v1386 = vadd.f32 0.0, %v1385
      %v1387 = vpop.f32.mrb[0].mxu0
      %v1388 = vpop.f32.mrb[0].mxu0
      %v1389 = vadd.f32 0.0, %v1388
      %v1390 = vpop.f32.mrb[0].mxu0
      %1391 = vmatprep.mubr.bf16.mxu0 0
      %1392 = vmatmul.mubr.bf16.gmra.mrb[0].mxu0 %v1349
      %v1393 = vpop.f32.mrb[0].mxu0
      %v1394 = vadd.f32 0.0, %v1393
      %v1395 = vpop.f32.mrb[0].mxu0
      %v1396 = vpop.f32.mrb[0].mxu0
      %v1397 = vadd.f32 0.0, %v1396
      %v1398 = vpop.f32.mrb[0].mxu0
      %1399 = vdwg.mxu0
      %1400 = vrot.lane.b32.xlu0 %v847, 104
      %v1401 = vpop.permute.xlu0 %1400
      %1402 = vrot.lane.b32.xlu0 %v848, 104
      %v1403 = vpop.permute.xlu0 %1402
      %1404 = vrot.lane.b32.xlu0 %v847, 72
      %v1405 = vpop.permute.xlu0 %1404
      %1406 = vrot.lane.b32.xlu0 %v848, 72
      %v1407 = vpop.permute.xlu0 %1406
      %v1409 = vsel %vm855, %v1401, 0
      %v1412 = vsel %vm855, %v1403, 0
      %v1415 = vsel %vm855, %v1405, 0
      %v1418 = vsel %vm855, %v1407, 0
      %1420 = vmatprep.subr.bf16.mxu0 0
      %1421 = vmatpush1.bf16.xpose.msra.mxu0 %v1415
      %1422 = vmatprep.subr.bf16.mxu0 0
      %1423 = vmatpush1.bf16.xpose.msra.mxu0 %v1418
      %1424 = vmatprep.subr.bf16.mxu0 0
      %1425 = vmatpush1.bf16.xpose.msra.mxu0 0
      %1426 = vmatprep.subr.bf16.mxu0 0
      %1427 = vmatpush1.bf16.xpose.msra.mxu0 0
      %1428 = vmatprep.subr.bf16.mxu0 0
      %1429 = vmatpush1.bf16.xpose.msra.mxu0 0
      %1430 = vmatprep.subr.bf16.mxu0 0
      %1431 = vmatpush1.bf16.xpose.msra.mxu0 0
      %1432 = vmatprep.subr.bf16.mxu0 0
      %1433 = vmatpush1.bf16.xpose.msra.mxu0 0
      %1434 = vmatprep.subr.bf16.mxu0 0
      %1435 = vmatpush1.bf16.xpose.msra.mxu0 0
      %1436 = vmatprep.subr.bf16.mxu0 0
      %1437 = vmatpush1.bf16.xpose.msra.mxu0 0
      %1438 = vmatprep.subr.bf16.mxu0 0
      %1439 = vmatpush1.bf16.xpose.msra.mxu0 0
      %1440 = vmatprep.subr.bf16.mxu0 0
      %1441 = vmatpush1.bf16.xpose.msra.mxu0 0
      %1442 = vmatprep.subr.bf16.mxu0 0
      %1443 = vmatpush1.bf16.xpose.msra.mxu0 0
      %1444 = vmatprep.subr.bf16.mxu0 0
      %1445 = vmatpush1.bf16.xpose.msra.mxu0 0
      %1446 = vmatprep.subr.bf16.mxu0 0
      %1447 = vmatpush1.bf16.xpose.msra.mxu0 0
      %1448 = vmatprep.subr.bf16.mxu0 0
      %1449 = vmatpush1.bf16.xpose.msra.mxu0 0
      %1450 = vmatprep.subr.bf16.mxu0 0
      %1451 = vmatpush1.bf16.xpose.msra.mxu0 0
      %1452 = vmatprep.mubr.bf16.mxu0 0
      %1453 = vmatmul.mubr.bf16.gmra.mrb[0].mxu0 %v1409
      %v1454 = vpop.f32.mrb[0].mxu0
      %v1455 = vadd.f32 0.0, %v1454
      %v1456 = vpop.f32.mrb[0].mxu0
      %v1457 = vpop.f32.mrb[0].mxu0
      %v1458 = vadd.f32 0.0, %v1457
      %v1459 = vpop.f32.mrb[0].mxu0
      %1460 = vmatprep.mubr.bf16.mxu0 0
      %1461 = vmatmul.mubr.bf16.gmra.mrb[0].mxu0 %v1412
      %v1462 = vpop.f32.mrb[0].mxu0
      %v1463 = vadd.f32 0.0, %v1462
      %v1464 = vpop.f32.mrb[0].mxu0
      %v1465 = vpop.f32.mrb[0].mxu0
      %v1466 = vadd.f32 0.0, %v1465
      %v1467 = vpop.f32.mrb[0].mxu0
      %1468 = vdwg.mxu0
      %v1469 = vmul.f32 %v1455, 0.35355338
      %v1470 = vmul.f32 %v1458, 0.35355338
      %v1471 = vmul.f32 %v1463, 0.35355338
      %v1472 = vmul.f32 %v1466, 0.35355338
      %v1473 = vadd.f32 %v1469, %v697
      %v1474 = vadd.f32 %v1470, %v698
      %v1475 = vadd.f32 %v1471, %v699
      %v1476 = vadd.f32 %v1472, %v700
      %v1477 = vsel %vm703, %v1473, -inf
      %1478 = vmax.xlane.f32.xlu0 %v1477
      %v1479 = vpop.xlane.xlu0 %1478
      %v1480 = vsel %vm703, %v1474, -inf
      %1481 = vmax.xlane.f32.xlu0 %v1480
      %v1482 = vpop.xlane.xlu0 %1481
      %v1483 = vsel %vm703, %v1475, -inf
      %1484 = vmax.xlane.f32.xlu0 %v1483
      %v1485 = vpop.xlane.xlu0 %1484
      %v1486 = vsel %vm703, %v1476, -inf
      %1487 = vmax.xlane.f32.xlu0 %v1486
      %v1488 = vpop.xlane.xlu0 %1487
      %v1489 = vsub.f32 %v1473, %v1479
      %v1490 = vsub.f32 %v1474, %v1482
      %v1491 = vsub.f32 %v1475, %v1485
      %v1492 = vsub.f32 %v1476, %v1488
      %v1493 = vmul.f32 %v1489, 1.442695
      %v1494 = vpow.pop %v1493
      %v1495 = vmul.f32 %v1490, 1.442695
      %v1496 = vpow.pop %v1495
      %v1497 = vmul.f32 %v1491, 1.442695
      %v1498 = vpow.pop %v1497
      %v1499 = vmul.f32 %v1492, 1.442695
      %v1500 = vpow.pop %v1499
      %v1501 = vsel %vm703, %v1494, 0.0
      %1502 = vadd.xlane.f32.xlu0 %v1501
      %v1503 = vpop.xlane.xlu0 %1502
      %v1504 = vsel %vm703, %v1496, 0.0
      %1505 = vadd.xlane.f32.xlu0 %v1504
      %v1506 = vpop.xlane.xlu0 %1505
      %v1507 = vsel %vm703, %v1498, 0.0
      %1508 = vadd.xlane.f32.xlu0 %v1507
      %v1509 = vpop.xlane.xlu0 %1508
      %v1510 = vsel %vm703, %v1500, 0.0
      %1511 = vadd.xlane.f32.xlu0 %v1510
      %v1512 = vpop.xlane.xlu0 %1511
      %v1513 = vrcp.pop %v1503
      %v1514 = vrcp.pop %v1506
      %v1515 = vrcp.pop %v1509
      %v1516 = vrcp.pop %v1512
      %v1517 = vmul.f32 %v1494, %v1513
      %v1518 = vmul.f32 %v1496, %v1514
      %v1519 = vmul.f32 %v1498, %v1515
      %v1520 = vmul.f32 %v1500, %v1516
      %v1521 = vpack.c.bf16 %v1518, %v1517
      %v1522 = vpack.c.bf16 %v1520, %v1519
      %1523 = vrot.lane.b32.xlu0 %v847, 40
      %v1524 = vpop.permute.xlu0 %1523
      %1525 = vrot.lane.b32.xlu0 %v848, 40
      %v1526 = vpop.permute.xlu0 %1525
      %v1530 = vsel %vm703, %v1521, 0
      %v1533 = vsel %vm703, %v1522, 0
      %1535 = vmatprep.subr.bf16.mxu0 0
      %1536 = vmatpush1.bf16.msra.mxu0 %v1524
      %1537 = vmatprep.subr.bf16.mxu0 0
      %1538 = vmatpush1.bf16.msra.mxu0 %v1526
      %1539 = vmatprep.subr.bf16.mxu0 0
      %1540 = vmatpush1.bf16.msra.mxu0 0
      %1541 = vmatprep.subr.bf16.mxu0 0
      %1542 = vmatpush1.bf16.msra.mxu0 0
      %1543 = vmatprep.subr.bf16.mxu0 0
      %1544 = vmatpush1.bf16.msra.mxu0 0
      %1545 = vmatprep.subr.bf16.mxu0 0
      %1546 = vmatpush1.bf16.msra.mxu0 0
      %1547 = vmatprep.subr.bf16.mxu0 0
      %1548 = vmatpush1.bf16.msra.mxu0 0
      %1549 = vmatprep.subr.bf16.mxu0 0
      %1550 = vmatpush1.bf16.msra.mxu0 0
      %1551 = vmatprep.subr.bf16.mxu0 0
      %1552 = vmatpush1.bf16.msra.mxu0 0
      %1553 = vmatprep.subr.bf16.mxu0 0
      %1554 = vmatpush1.bf16.msra.mxu0 0
      %1555 = vmatprep.subr.bf16.mxu0 0
      %1556 = vmatpush1.bf16.msra.mxu0 0
      %1557 = vmatprep.subr.bf16.mxu0 0
      %1558 = vmatpush1.bf16.msra.mxu0 0
      %1559 = vmatprep.subr.bf16.mxu0 0
      %1560 = vmatpush1.bf16.msra.mxu0 0
      %1561 = vmatprep.subr.bf16.mxu0 0
      %1562 = vmatpush1.bf16.msra.mxu0 0
      %1563 = vmatprep.subr.bf16.mxu0 0
      %1564 = vmatpush1.bf16.msra.mxu0 0
      %1565 = vmatprep.subr.bf16.mxu0 0
      %1566 = vmatpush1.bf16.msra.mxu0 0
      %1567 = vmatprep.mubr.bf16.mxu0 0
      %1568 = vmatmul.mubr.bf16.gmra.mrb[0].mxu0 %v1530
      %v1569 = vpop.f32.mrb[0].mxu0
      %v1570 = vadd.f32 0.0, %v1569
      %v1571 = vpop.f32.mrb[0].mxu0
      %v1572 = vpop.f32.mrb[0].mxu0
      %v1573 = vadd.f32 0.0, %v1572
      %v1574 = vpop.f32.mrb[0].mxu0
      %1575 = vmatprep.mubr.bf16.mxu0 0
      %1576 = vmatmul.mubr.bf16.gmra.mrb[0].mxu0 %v1533
      %v1577 = vpop.f32.mrb[0].mxu0
      %v1578 = vadd.f32 0.0, %v1577
      %v1579 = vpop.f32.mrb[0].mxu0
      %v1580 = vpop.f32.mrb[0].mxu0
      %v1581 = vadd.f32 0.0, %v1580
      %v1582 = vpop.f32.mrb[0].mxu0
      %1583 = vdwg.mxu0
      %1588 = vrot.lane.b32.xlu0 %v1202, 8
      %v1589 = vpop.permute.xlu0 %1588
      %1590 = vrot.lane.b32.xlu0 %v1205, 8
      %v1591 = vpop.permute.xlu0 %1590
      %1592 = vrot.lane.b32.xlu0 %v1210, 8
      %v1593 = vpop.permute.xlu0 %1592
      %1594 = vrot.lane.b32.xlu0 %v1213, 8
      %v1595 = vpop.permute.xlu0 %1594
      %1604 = vrot.lane.b32.xlu0 %v1386, 16
      %v1605 = vpop.permute.xlu0 %1604
      %1606 = vrot.lane.b32.xlu0 %v1389, 16
      %v1607 = vpop.permute.xlu0 %1606
      %1608 = vrot.lane.b32.xlu0 %v1394, 16
      %v1609 = vpop.permute.xlu0 %1608
      %1610 = vrot.lane.b32.xlu0 %v1397, 16
      %v1611 = vpop.permute.xlu0 %1610
      %1620 = vrot.lane.b32.xlu0 %v1570, 24
      %v1621 = vpop.permute.xlu0 %1620
      %1622 = vrot.lane.b32.xlu0 %v1573, 24
      %v1623 = vpop.permute.xlu0 %1622
      %1624 = vrot.lane.b32.xlu0 %v1578, 24
      %v1625 = vpop.permute.xlu0 %1624
      %1626 = vrot.lane.b32.xlu0 %v1581, 24
      %v1627 = vpop.permute.xlu0 %1626
      %v1632 = vsel %vm855, %v1018, %v1589
      %v1633 = vsel %vm855, %v1021, %v1591
      %v1634 = vsel %vm855, %v1026, %v1593
      %v1635 = vsel %vm855, %v1029, %v1595
      %vm1636 = vcmask 130048
      %v1637 = vsel %vm1636, %v1632, %v1605
      %v1638 = vsel %vm1636, %v1633, %v1607
      %v1639 = vsel %vm1636, %v1634, %v1609
      %v1640 = vsel %vm1636, %v1635, %v1611
      %vm1641 = vcmask 195584
      %v1642 = vsel %vm1641, %v1637, %v1621
      %v1643 = vsel %vm1641, %v1638, %v1623
      %v1644 = vsel %vm1641, %v1639, %v1625
      %v1645 = vsel %vm1641, %v1640, %v1627
      %v1646 = vld [vmem:[%s653] sm:$0xff]
      %v1647 = vld [vmem:[%s653 + $0x8] sm:$0xff]
      %v1648 = vld [vmem:[%s653 + $0x10] sm:$0xff]
      %v1649 = vld [vmem:[%s653 + $0x18] sm:$0xff]
      %v1650 = vpack.c.bf16 %v1643, %v1642
      %v1651 = vpack.c.bf16 %v1645, %v1644
      %v1652 = vpack.c.bf16 %v1647, %v1646
      %v1653 = vpack.c.bf16 %v1649, %v1648
      %v1655 = vsel %vm703, %v1650, 0
      %v1658 = vsel %vm703, %v1651, 0
      %1660 = vmatprep.subr.bf16.mxu0 0
      %1661 = vmatpush1.bf16.msra.mxu0 %v1652
      %1662 = vmatprep.subr.bf16.mxu0 0
      %1663 = vmatpush1.bf16.msra.mxu0 %v1653
      %1664 = vmatprep.subr.bf16.mxu0 0
      %1665 = vmatpush1.bf16.msra.mxu0 0
      %1666 = vmatprep.subr.bf16.mxu0 0
      %1667 = vmatpush1.bf16.msra.mxu0 0
      %1668 = vmatprep.subr.bf16.mxu0 0
      %1669 = vmatpush1.bf16.msra.mxu0 0
      %1670 = vmatprep.subr.bf16.mxu0 0
      %1671 = vmatpush1.bf16.msra.mxu0 0
      %1672 = vmatprep.subr.bf16.mxu0 0
      %1673 = vmatpush1.bf16.msra.mxu0 0
      %1674 = vmatprep.subr.bf16.mxu0 0
      %1675 = vmatpush1.bf16.msra.mxu0 0
      %1676 = vmatprep.subr.bf16.mxu0 0
      %1677 = vmatpush1.bf16.msra.mxu0 0
      %1678 = vmatprep.subr.bf16.mxu0 0
      %1679 = vmatpush1.bf16.msra.mxu0 0
      %1680 = vmatprep.subr.bf16.mxu0 0
      %1681 = vmatpush1.bf16.msra.mxu0 0
      %1682 = vmatprep.subr.bf16.mxu0 0
      %1683 = vmatpush1.bf16.msra.mxu0 0
      %1684 = vmatprep.subr.bf16.mxu0 0
      %1685 = vmatpush1.bf16.msra.mxu0 0
      %1686 = vmatprep.subr.bf16.mxu0 0
      %1687 = vmatpush1.bf16.msra.mxu0 0
      %1688 = vmatprep.subr.bf16.mxu0 0
      %1689 = vmatpush1.bf16.msra.mxu0 0
      %1690 = vmatprep.subr.bf16.mxu0 0
      %1691 = vmatpush1.bf16.msra.mxu0 0
      %1692 = vmatprep.mubr.bf16.mxu0 0
      %1693 = vmatmul.mubr.bf16.gmra.mrb[0].mxu0 %v1655
      %v1694 = vpop.f32.mrb[0].mxu0
      %v1695 = vadd.f32 0.0, %v1694
      %v1696 = vpop.f32.mrb[0].mxu0
      %v1697 = vpop.f32.mrb[0].mxu0
      %v1698 = vadd.f32 0.0, %v1697
      %v1699 = vpop.f32.mrb[0].mxu0
      %1700 = vmatprep.mubr.bf16.mxu0 0
      %1701 = vmatmul.mubr.bf16.gmra.mrb[0].mxu0 %v1658
      %v1702 = vpop.f32.mrb[0].mxu0
      %v1703 = vadd.f32 0.0, %v1702
      %v1704 = vpop.f32.mrb[0].mxu0
      %v1705 = vpop.f32.mrb[0].mxu0
      %v1706 = vadd.f32 0.0, %v1705
      %v1707 = vpop.f32.mrb[0].mxu0
      %1708 = vdwg.mxu0
      %v1709 = vadd.f32 %v693, %v1695
      %v1710 = vadd.f32 %v694, %v1698
      %v1711 = vadd.f32 %v695, %v1703
      %v1712 = vadd.f32 %v696, %v1706
      %v1713 = vld [vmem:[%s656] sm:$0x1]
      %v1715 = vlaneseq
      %v1716 = vshrl.u32 %v1715, 7
      %v1717 = vsub.s32 0, %v1716
      %v1718 = vrot.slane %v1713, %v1717
      %v1720 = vadd.f32 %v1709, %v1718
      %v1721 = vadd.f32 %v1710, %v1718
      %v1722 = vadd.f32 %v1711, %v1718
      %v1723 = vadd.f32 %v1712, %v1718
      %v1724 = vld [vmem:[%s659] sm:$0x1]
      %v1725 = vld [vmem:[%s662] sm:$0x1]
      %v1726 = vsel %vm703, %v1720, 0.0
      %1727 = vadd.xlane.f32.xlu0 %v1726
      %v1728 = vpop.xlane.xlu0 %1727
      %v1729 = vsel %vm703, %v1721, 0.0
      %1730 = vadd.xlane.f32.xlu0 %v1729
      %v1731 = vpop.xlane.xlu0 %1730
      %v1732 = vsel %vm703, %v1722, 0.0
      %1733 = vadd.xlane.f32.xlu0 %v1732
      %v1734 = vpop.xlane.xlu0 %1733
      %v1735 = vsel %vm703, %v1723, 0.0
      %1736 = vadd.xlane.f32.xlu0 %v1735
      %v1737 = vpop.xlane.xlu0 %1736
      %v1738 = vmul.f32 %v1728, %v716
      %v1739 = vmul.f32 %v1731, %v716
      %v1740 = vmul.f32 %v1734, %v716
      %v1741 = vmul.f32 %v1737, %v716
      %v1742 = vsub.f32 %v1720, %v1738
      %v1743 = vsub.f32 %v1721, %v1739
      %v1744 = vsub.f32 %v1722, %v1740
      %v1745 = vsub.f32 %v1723, %v1741
      %v1746 = vmul.f32 %v1742, %v1742
      %v1747 = vmul.f32 %v1743, %v1743
      %v1748 = vmul.f32 %v1744, %v1744
      %v1749 = vmul.f32 %v1745, %v1745
      %v1750 = vsel %vm703, %v1746, 0.0
      %1751 = vadd.xlane.f32.xlu0 %v1750
      %v1752 = vpop.xlane.xlu0 %1751
      %v1753 = vsel %vm703, %v1747, 0.0
      %1754 = vadd.xlane.f32.xlu0 %v1753
      %v1755 = vpop.xlane.xlu0 %1754
      %v1756 = vsel %vm703, %v1748, 0.0
      %1757 = vadd.xlane.f32.xlu0 %v1756
      %v1758 = vpop.xlane.xlu0 %1757
      %v1759 = vsel %vm703, %v1749, 0.0
      %1760 = vadd.xlane.f32.xlu0 %v1759
      %v1761 = vpop.xlane.xlu0 %1760
      %v1762 = vmul.f32 %v1752, %v716
      %v1763 = vmul.f32 %v1755, %v716
      %v1764 = vmul.f32 %v1758, %v716
      %v1765 = vmul.f32 %v1761, %v716
      %v1766 = vadd.f32 %v1762, 1e-05
      %v1767 = vadd.f32 %v1763, 1e-05
      %v1768 = vadd.f32 %v1764, 1e-05
      %v1769 = vadd.f32 %v1765, 1e-05
      %v1770 = vrsqrt.pop %v1766
      %v1771 = vrsqrt.pop %v1767
      %v1772 = vrsqrt.pop %v1768
      %v1773 = vrsqrt.pop %v1769
      %v1774 = vmul.f32 %v1742, %v1770
      %v1775 = vmul.f32 %v1743, %v1771
      %v1776 = vmul.f32 %v1744, %v1772
      %v1777 = vmul.f32 %v1745, %v1773
      %v1779 = vlaneseq
      %v1780 = vshrl.u32 %v1779, 7
      %v1781 = vsub.s32 0, %v1780
      %v1782 = vrot.slane %v1724, %v1781
      %v1784 = vmul.f32 %v1774, %v1782
      %v1785 = vmul.f32 %v1775, %v1782
      %v1786 = vmul.f32 %v1776, %v1782
      %v1787 = vmul.f32 %v1777, %v1782
      %v1789 = vlaneseq
      %v1790 = vshrl.u32 %v1789, 7
      %v1791 = vsub.s32 0, %v1790
      %v1792 = vrot.slane %v1725, %v1791
      %v1794 = vadd.f32 %v1784, %v1792
      %v1795 = vadd.f32 %v1785, %v1792
      %v1796 = vadd.f32 %v1786, %v1792
      %v1797 = vadd.f32 %v1787, %v1792
      %v1798 = vld [vmem:[%s667] sm:$0xff]
      %v1799 = vld [vmem:[%s667 + $0x8] sm:$0xff]
      %v1800 = vld [vmem:[%s667 + $0x10] sm:$0xff]
      %v1801 = vld [vmem:[%s667 + $0x18] sm:$0xff]
      %v1802 = vpack.c.bf16 %v1795, %v1794
      %v1803 = vpack.c.bf16 %v1797, %v1796
      %v1804 = vpack.c.bf16 %v1799, %v1798
      %v1805 = vpack.c.bf16 %v1801, %v1800
      %v1806 = vld [vmem:[%s670] sm:$0x1]
      %v1808 = vlaneseq
      %v1809 = vshrl.u32 %v1808, 7
      %v1810 = vsub.s32 0, %v1809
      %v1811 = vrot.slane %v1806, %v1810
      %v1814 = vsel %vm703, %v1802, 0
      %v1817 = vsel %vm703, %v1803, 0
      %1819 = vmatprep.subr.bf16.mxu0 0
      %1820 = vmatpush1.bf16.msra.mxu0 %v1804
      %1821 = vmatprep.subr.bf16.mxu0 0
      %1822 = vmatpush1.bf16.msra.mxu0 %v1805
      %1823 = vmatprep.subr.bf16.mxu0 0
      %1824 = vmatpush1.bf16.msra.mxu0 0
      %1825 = vmatprep.subr.bf16.mxu0 0
      %1826 = vmatpush1.bf16.msra.mxu0 0
      %1827 = vmatprep.subr.bf16.mxu0 0
      %1828 = vmatpush1.bf16.msra.mxu0 0
      %1829 = vmatprep.subr.bf16.mxu0 0
      %1830 = vmatpush1.bf16.msra.mxu0 0
      %1831 = vmatprep.subr.bf16.mxu0 0
      %1832 = vmatpush1.bf16.msra.mxu0 0
      %1833 = vmatprep.subr.bf16.mxu0 0
      %1834 = vmatpush1.bf16.msra.mxu0 0
      %1835 = vmatprep.subr.bf16.mxu0 0
      %1836 = vmatpush1.bf16.msra.mxu0 0
      %1837 = vmatprep.subr.bf16.mxu0 0
      %1838 = vmatpush1.bf16.msra.mxu0 0
      %1839 = vmatprep.subr.bf16.mxu0 0
      %1840 = vmatpush1.bf16.msra.mxu0 0
      %1841 = vmatprep.subr.bf16.mxu0 0
      %1842 = vmatpush1.bf16.msra.mxu0 0
      %1843 = vmatprep.subr.bf16.mxu0 0
      %1844 = vmatpush1.bf16.msra.mxu0 0
      %1845 = vmatprep.subr.bf16.mxu0 0
      %1846 = vmatpush1.bf16.msra.mxu0 0
      %1847 = vmatprep.subr.bf16.mxu0 0
      %1848 = vmatpush1.bf16.msra.mxu0 0
      %1849 = vmatprep.subr.bf16.mxu0 0
      %1850 = vmatpush1.bf16.msra.mxu0 0
      %1851 = vmatprep.mubr.bf16.mxu0 0
      %1852 = vmatmul.mubr.bf16.gmra.mrb[0].mxu0 %v1814
      %v1853 = vpop.f32.mrb[0].mxu0
      %v1854 = vadd.f32 %v1811, %v1853
      %v1855 = vpop.f32.mrb[0].mxu0
      %v1856 = vpop.f32.mrb[0].mxu0
      %v1857 = vadd.f32 %v1811, %v1856
      %v1858 = vpop.f32.mrb[0].mxu0
      %1859 = vmatprep.mubr.bf16.mxu0 0
      %1860 = vmatmul.mubr.bf16.gmra.mrb[0].mxu0 %v1817
      %v1861 = vpop.f32.mrb[0].mxu0
      %v1862 = vadd.f32 %v1811, %v1861
      %v1863 = vpop.f32.mrb[0].mxu0
      %v1864 = vpop.f32.mrb[0].mxu0
      %v1865 = vadd.f32 %v1811, %v1864
      %v1866 = vpop.f32.mrb[0].mxu0
      %1867 = vdwg.mxu0
      %v1868 = vmul.f32 %v1854, 1.702
      %v1869 = vmul.f32 %v1857, 1.702
      %v1870 = vmul.f32 %v1862, 1.702
      %v1871 = vmul.f32 %v1865, 1.702
      %v1872 = vxor.u32 %v1868, 2147483648
      %v1873 = vxor.u32 %v1869, 2147483648
      %v1874 = vxor.u32 %v1870, 2147483648
      %v1875 = vxor.u32 %v1871, 2147483648
      %v1876 = vmul.f32 %v1872, 1.442695
      %v1877 = vpow.pop %v1876
      %v1878 = vmul.f32 %v1873, 1.442695
      %v1879 = vpow.pop %v1878
      %v1880 = vmul.f32 %v1874, 1.442695
      %v1881 = vpow.pop %v1880
      %v1882 = vmul.f32 %v1875, 1.442695
      %v1883 = vpow.pop %v1882
      %v1884 = vadd.f32 %v1877, 1.0
      %v1885 = vadd.f32 %v1879, 1.0
      %v1886 = vadd.f32 %v1881, 1.0
      %v1887 = vadd.f32 %v1883, 1.0
      %v1888 = vrcp.pop %v1884
      %v1889 = vmul.f32 1.0, %v1888
      %v1890 = vrcp.pop %v1885
      %v1891 = vmul.f32 1.0, %v1890
      %v1892 = vrcp.pop %v1886
      %v1893 = vmul.f32 1.0, %v1892
      %v1894 = vrcp.pop %v1887
      %v1895 = vmul.f32 1.0, %v1894
      %v1896 = vmul.f32 %v1854, %v1889
      %v1897 = vmul.f32 %v1857, %v1891
      %v1898 = vmul.f32 %v1862, %v1893
      %v1899 = vmul.f32 %v1865, %v1895
      %v1900 = vld [vmem:[%s675] sm:$0xff]
      %v1901 = vld [vmem:[%s675 + $0x8] sm:$0xff]
      %v1902 = vld [vmem:[%s675 + $0x10] sm:$0xff]
      %v1903 = vld [vmem:[%s675 + $0x18] sm:$0xff]
      %v1904 = vld [vmem:[%s675 + $0x20] sm:$0xff]
      %v1905 = vld [vmem:[%s675 + $0x28] sm:$0xff]
      %v1906 = vld [vmem:[%s675 + $0x30] sm:$0xff]
      %v1907 = vld [vmem:[%s675 + $0x38] sm:$0xff]
      %v1908 = vld [vmem:[%s675 + $0x40] sm:$0xff]
      %v1909 = vld [vmem:[%s675 + $0x48] sm:$0xff]
      %v1910 = vld [vmem:[%s675 + $0x50] sm:$0xff]
      %v1911 = vld [vmem:[%s675 + $0x58] sm:$0xff]
      %v1912 = vld [vmem:[%s675 + $0x60] sm:$0xff]
      %v1913 = vld [vmem:[%s675 + $0x68] sm:$0xff]
      %v1914 = vld [vmem:[%s675 + $0x70] sm:$0xff]
      %v1915 = vld [vmem:[%s675 + $0x78] sm:$0xff]
      %v1916 = vpack.c.bf16 %v1897, %v1896
      %v1917 = vpack.c.bf16 %v1899, %v1898
      %v1918 = vpack.c.bf16 %v1901, %v1900
      %v1919 = vpack.c.bf16 %v1903, %v1902
      %v1920 = vpack.c.bf16 %v1905, %v1904
      %v1921 = vpack.c.bf16 %v1907, %v1906
      %v1922 = vpack.c.bf16 %v1909, %v1908
      %v1923 = vpack.c.bf16 %v1911, %v1910
      %v1924 = vpack.c.bf16 %v1913, %v1912
      %v1925 = vpack.c.bf16 %v1915, %v1914
      %1926 = vmatprep.subr.bf16.mxu0 0
      %1927 = vmatpush1.bf16.msra.mxu0 %v1918
      %1928 = vmatprep.subr.bf16.mxu0 0
      %1929 = vmatpush1.bf16.msra.mxu0 %v1919
      %1930 = vmatprep.subr.bf16.mxu0 0
      %1931 = vmatpush1.bf16.msra.mxu0 %v1920
      %1932 = vmatprep.subr.bf16.mxu0 0
      %1933 = vmatpush1.bf16.msra.mxu0 %v1921
      %1934 = vmatprep.subr.bf16.mxu0 0
      %1935 = vmatpush1.bf16.msra.mxu0 %v1922
      %1936 = vmatprep.subr.bf16.mxu0 0
      %1937 = vmatpush1.bf16.msra.mxu0 %v1923
      %1938 = vmatprep.subr.bf16.mxu0 0
      %1939 = vmatpush1.bf16.msra.mxu0 %v1924
      %1940 = vmatprep.subr.bf16.mxu0 0
      %1941 = vmatpush1.bf16.msra.mxu0 %v1925
      %1942 = vmatprep.subr.bf16.mxu0 0
      %1943 = vmatpush1.bf16.msra.mxu0 0
      %1944 = vmatprep.subr.bf16.mxu0 0
      %1945 = vmatpush1.bf16.msra.mxu0 0
      %1946 = vmatprep.subr.bf16.mxu0 0
      %1947 = vmatpush1.bf16.msra.mxu0 0
      %1948 = vmatprep.subr.bf16.mxu0 0
      %1949 = vmatpush1.bf16.msra.mxu0 0
      %1950 = vmatprep.subr.bf16.mxu0 0
      %1951 = vmatpush1.bf16.msra.mxu0 0
      %1952 = vmatprep.subr.bf16.mxu0 0
      %1953 = vmatpush1.bf16.msra.mxu0 0
      %1954 = vmatprep.subr.bf16.mxu0 0
      %1955 = vmatpush1.bf16.msra.mxu0 0
      %1956 = vmatprep.subr.bf16.mxu0 0
      %1957 = vmatpush1.bf16.msra.mxu0 0
      %1958 = vmatprep.mubr.bf16.mxu0 0
      %1959 = vmatmul.mubr.bf16.gmra.mrb[0].mxu0 %v1916
      %v1960 = vpop.f32.mrb[0].mxu0
      %v1961 = vadd.f32 0.0, %v1960
      %v1962 = vpop.f32.mrb[0].mxu0
      %v1963 = vpop.f32.mrb[0].mxu0
      %v1964 = vadd.f32 0.0, %v1963
      %v1965 = vpop.f32.mrb[0].mxu0
      %1966 = vmatprep.mubr.bf16.mxu0 0
      %1967 = vmatmul.mubr.bf16.gmra.mrb[0].mxu0 %v1917
      %v1968 = vpop.f32.mrb[0].mxu0
      %v1969 = vadd.f32 0.0, %v1968
      %v1970 = vpop.f32.mrb[0].mxu0
      %v1971 = vpop.f32.mrb[0].mxu0
      %v1972 = vadd.f32 0.0, %v1971
      %v1973 = vpop.f32.mrb[0].mxu0
      %1974 = vdwg.mxu0
      %v1975 = vadd.f32 %v1720, %v1961
      %v1976 = vadd.f32 %v1721, %v1964
      %v1977 = vadd.f32 %v1722, %v1969
      %v1978 = vadd.f32 %v1723, %v1972
      %v1979 = vld [vmem:[%s678] sm:$0x1]
      %v1981 = vlaneseq
      %v1982 = vshrl.u32 %v1981, 7
      %v1983 = vsub.s32 0, %v1982
      %v1984 = vrot.slane %v1979, %v1983
      %v1986 = vadd.f32 %v1975, %v1984
      %v1987 = vadd.f32 %v1976, %v1984
      %v1988 = vadd.f32 %v1977, %v1984
      %v1989 = vadd.f32 %v1978, %v1984
      %1990 = vst.msk [vmem:[#allocation2] sm:$0xff] %vm703, %v1986
      %1991 = vst.msk [vmem:[#allocation2 + $0x8] sm:$0xff] %vm703, %v1987
      %1992 = vst.msk [vmem:[#allocation2 + $0x10] sm:$0xff] %vm703, %v1988
      %1993 = vst.msk [vmem:[#allocation2 + $0x18] sm:$0xff] %vm703, %v1989
      %p1994 = scmp.eq.s32.totalorder %s27, 1
      // Predicated region
      $region89: #{_lambda_.4} parent=83 // pred_check
        %p1995 = pneg %p1994
      $region90: #{_lambda_.4} parent=83 // pred_check_branch
        %1997 = sbr.rel (%p1995) target = $region92
      $region91: #{_lambda_.4} parent=83 // pred_region
        %1998 = vst.msk [vmem:[%s16] sm:$0xff] %vm703, %v1986
        %1999 = vst.msk [vmem:[%s16 + $0x8] sm:$0xff] %vm703, %v1987
        %2000 = vst.msk [vmem:[%s16 + $0x10] sm:$0xff] %vm703, %v1988
        %2001 = vst.msk [vmem:[%s16 + $0x18] sm:$0xff] %vm703, %v1989
      $region92: #{_lambda_.4} parent=83 // pred_fallthru
        _
      // Predicated region
      $region93: #{_lambda_.4} parent=83 // pred_check
        %p2002 = pneg %p436
      $region94: #{_lambda_.4} parent=83 // pred_check_branch
        %2004 = sbr.rel (%p2002) target = $region96
      $region95: #{_lambda_.4} parent=83 // pred_region
        _
      $region96: #{_lambda_.4} parent=83 // pred_fallthru
        _
      // Predicated region
      $region97: #{_lambda_.4} parent=83 // pred_check
        %p2005 = pneg %p436
      $region98: #{_lambda_.4} parent=83 // pred_check_branch
        %2007 = sbr.rel (%p2005) target = $region100
      $region99: #{_lambda_.4} parent=83 // pred_region
        _
      $region100: #{_lambda_.4} parent=83 // pred_fallthru
        _
    $region84: #{_lambda_.4} parent=5 // pred_fallthru
      _
    %p2008 = scmp.le.s32.totalorder 2, %s22
    // Predicated region
    $region101: #{_lambda_.4} parent=5 // pred_check
      %p2009 = pneg %p2008
    $region102: #{_lambda_.4} parent=5 // pred_check_branch
      %2011 = sbr.rel (%p2009) target = $region104
    $region103: #{_lambda_.4} parent=5 // pred_region
      %s2012 = ssub.s32 %s22, 2
    $region104: #{_lambda_.4} parent=5 // pred_fallthru
      _
  $region6: #{_lambda_.4} parent=0 // loop_footer
    %s26 = sadd.s32 1, %s22
  $region7: #{_lambda_.4} parent=0 // loop_footer_branch
    %21 = sbr.rel target = $region3
  $region8: #{_lambda_.4} parent=0 // loop_exit
    _

</llo_original>
